<compile_context>
chip_gen: v5e
topology: v5e:2x2
jax: 0.10.0
libtpu: 0.0.40
codegen_flags: <defaults>
</compile_context>

<pallas_src>
import math
import functools

import jax
import jax.numpy as jnp
from jax.experimental import pallas as pl
from jax.experimental.pallas import tpu as pltpu  # noqa: F401  (TPU backend)


# ----------------------------------------------------------------------------
# One fully fused kernel: encoder (bidirectional, num_layers) + decoder
# (num_layers, prediction_horizon steps) + fc head.  No grid; every loop is
# statically unrolled, all state stays in registers/VMEM.
# ----------------------------------------------------------------------------
def _fused_forward_kernel(*refs, num_layers, input_size, hidden_size,
                          seq_len, horizon):
    H = hidden_size
    D = input_size
    T = seq_len
    L = num_layers

    x_ref = refs[0]          # [T, B, D]   encoder input (time-major)
    din0_ref = refs[1]       # [B, D]      initial decoder input (= x[:, -1, :])
    feats_ref = refs[2]      # [Hzn, B, D] teacher-forcing targets (features)
    enc_refs = refs[3:3 + 3 * L]
    dec_refs = refs[3 + 3 * L:3 + 6 * L]
    fc1w_ref, fc1b_ref, fc2w_ref, fc2b_ref = refs[3 + 6 * L:3 + 6 * L + 4]
    out_ref = refs[-1]       # [B, Hzn]

    B = din0_ref.shape[0]

    def cell(gx, h, c, whh, b):
        """One LSTM cell step.  Gate columns pre-ordered (i, f, o, g)."""
        gates = gx + jnp.dot(h, whh, preferred_element_type=jnp.float32) + b
        sg = jax.nn.sigmoid(gates[:, :3 * H])       # one EUP launch: i, f, o
        i_g = sg[:, :H]
        f_g = sg[:, H:2 * H]
        o_g = sg[:, 2 * H:3 * H]
        g_g = jnp.tanh(gates[:, 3 * H:])            # one EUP launch: g
        c_new = f_g * c + i_g * g_g
        h_new = o_g * jnp.tanh(c_new)
        return h_new, c_new

    # ----------------------- Encoder (bidirectional) ------------------------
    seq_f = [x_ref[t] for t in range(T)]   # layer-0 input sequence [B, D]
    seq_b = None                           # for layer > 0: bwd half of concat
    h_enc, c_enc = [], []
    for l in range(L):
        wih2 = enc_refs[3 * l][...]        # [2, Din_l, 4H]
        whh2 = enc_refs[3 * l + 1][...]    # [2, H, 4H]
        b2 = enc_refs[3 * l + 2][...]      # [2, 1, 4H]
        wih_f, wih_b = wih2[0], wih2[1]
        whh_f, whh_b = whh2[0], whh2[1]
        b_f, b_b = b2[0], b2[1]

        zero = jnp.zeros((B, H), jnp.float32)
        hf, cf, hb, cb = zero, zero, zero, zero
        outs_f = [None] * T
        outs_b = [None] * T
        for t in range(T):
            # fwd consumes position t; bwd consumes position T-1-t (index math
            # instead of a reversed copy).
            if l == 0:
                gx_f = jnp.dot(seq_f[t], wih_f,
                               preferred_element_type=jnp.float32)
                gx_b = jnp.dot(seq_f[T - 1 - t], wih_b,
                               preferred_element_type=jnp.float32)
            else:
                # layer input is [out_f || out_b]; fold concat into split weights
                gx_f = (jnp.dot(seq_f[t], wih_f[:H],
                                preferred_element_type=jnp.float32)
                        + jnp.dot(seq_b[t], wih_f[H:],
                                  preferred_element_type=jnp.float32))
                gx_b = (jnp.dot(seq_f[T - 1 - t], wih_b[:H],
                                preferred_element_type=jnp.float32)
                        + jnp.dot(seq_b[T - 1 - t], wih_b[H:],
                                  preferred_element_type=jnp.float32))
            hf, cf = cell(gx_f, hf, cf, whh_f, b_f)
            hb, cb = cell(gx_b, hb, cb, whh_b, b_b)
            outs_f[t] = hf
            outs_b[T - 1 - t] = hb

        # PyTorch: h.view(L, 2, B, H).sum(dim=1) == fwd + bwd per layer
        h_enc.append(hf + hb)
        c_enc.append(cf + cb)
        seq_f, seq_b = outs_f, outs_b

    # ----------------------- Decoder + fc head ------------------------------
    fc1_wt = fc1w_ref[...]   # [H, F]
    fc1_b = fc1b_ref[...]    # [1, F]
    fc2_w = fc2w_ref[...]    # [1, F]
    fc2_b = fc2b_ref[...]    # [1, 1]
    dec_w = [(dec_refs[3 * l][...], dec_refs[3 * l + 1][...],
              dec_refs[3 * l + 2][...]) for l in range(L)]

    # Feedback mask hoisted out of the horizon loop (column 0 = predicted power)
    col0 = jax.lax.broadcasted_iota(jnp.int32, (B, D), 1) == 0

    x_dec = din0_ref[...]
    h_dec = list(h_enc)
    c_dec = list(c_enc)
    preds = []
    for s in range(horizon):
        x_l = x_dec
        for l in range(L):
            wih, whh, b = dec_w[l]
            gx = jnp.dot(x_l, wih, preferred_element_type=jnp.float32)
            h_dec[l], c_dec[l] = cell(gx, h_dec[l], c_dec[l], whh, b)
            x_l = h_dec[l]

        # fc1 -> ReLU -> fc2 head on the top-layer hidden state
        y = jnp.maximum(
            jnp.dot(x_l, fc1_wt, preferred_element_type=jnp.float32) + fc1_b,
            0.0)
        # fc2 (output width 1): VPU multiply + lane reduction
        pred = jnp.sum(y * fc2_w, axis=1, keepdims=True) + fc2_b   # [B, 1]
        preds.append(pred)

        if s + 1 < horizon:
            # next input = [predicted_power, other_features at step s]
            x_dec = jnp.where(col0, pred, feats_ref[s])

    # Single lane-dense store of the whole [B, horizon] result.
    out_ref[...] = jnp.concatenate(preds, axis=1).astype(out_ref.dtype)


# ----------------------------------------------------------------------------
# Model forward: a couple of trivial slices/transposes feeding ONE kernel.
# ----------------------------------------------------------------------------
@functools.partial(jax.jit, static_argnums=(2, 3))
def model_forward(prepared, combined_input, num_layers, prediction_horizon):
    x = combined_input[:, 0]          # [B, T, D]  encoder input
    targets = combined_input[:, 1]    # [B, T, D]  teacher-forcing targets
    B, T, D = x.shape
    H = prepared["dec_whh"][0].shape[0]

    x_tm = jnp.transpose(x, (1, 0, 2))                                  # [T, B, D]
    feats = jnp.transpose(targets[:, :prediction_horizon], (1, 0, 2))   # [Hzn, B, D]
    dec_in0 = x[:, -1, :]                                               # [B, D]

    args = [x_tm, dec_in0, feats]
    for l in range(num_layers):
        args += [prepared["enc_wih"][l], prepared["enc_whh"][l],
                 prepared["enc_b"][l]]
    for l in range(num_layers):
        args += [prepared["dec_wih"][l], prepared["dec_whh"][l],
                 prepared["dec_b"][l]]
    args += [prepared["fc1_wt"], prepared["fc1_b"],
             prepared["fc2_w"], prepared["fc2_b"]]

    kernel = functools.partial(
        _fused_forward_kernel,
        num_layers=num_layers, input_size=D, hidden_size=H,
        seq_len=T, horizon=prediction_horizon)

    return pl.pallas_call(
        kernel,
        out_shape=jax.ShapeDtypeStruct((B, prediction_horizon), jnp.float32),
    )(*args)


# ----------------------------------------------------------------------------
# Parameter init (PyTorch-style U(-1/sqrt(H), 1/sqrt(H))) + one-time prep:
# transpose, fuse biases, reorder gate columns (i,f,g,o) -> (i,f,o,g),
# stack per direction.
# ----------------------------------------------------------------------------
def _uniform(key, shape, k):
    return jax.random.uniform(key, shape, jnp.float32, minval=-k, maxval=k)


def init_params(key, input_size, hidden_size, num_layers, fcc_intermediate):
    H = hidden_size
    k = 1.0 / math.sqrt(H)
    raw = {"enc": [], "dec": []}

    # Encoder: bidirectional; layer l>0 input is 2H (fwd||bwd concat).
    for l in range(num_layers):
        in_l = input_size if l == 0 else 2 * H
        layer = {}
        for d in ("fwd", "bwd"):
            key, k0, k1, k2, k3 = jax.random.split(key, 5)
            layer[d] = (_uniform(k0, (4 * H, in_l), k),
                        _uniform(k1, (4 * H, H), k),
                        _uniform(k2, (4 * H,), k),
                        _uniform(k3, (4 * H,), k))
        raw["enc"].append(layer)

    # Decoder: unidirectional; layer 0 input = input_size, rest = H.
    for l in range(num_layers):
        in_l = input_size if l == 0 else H
        key, k0, k1, k2, k3 = jax.random.split(key, 5)
        raw["dec"].append((_uniform(k0, (4 * H, in_l), k),
                           _uniform(k1, (4 * H, H), k),
                           _uniform(k2, (4 * H,), k),
                           _uniform(k3, (4 * H,), k)))

    key, k0, k1, k2, k3 = jax.random.split(key, 5)
    raw["fc1_w"] = _uniform(k0, (fcc_intermediate, H), 1.0 / math.sqrt(H))
    raw["fc1_b"] = _uniform(k1, (fcc_intermediate,), 1.0 / math.sqrt(H))
    raw["fc2_w"] = _uniform(k2, (1, fcc_intermediate),
                            1.0 / math.sqrt(fcc_intermediate))
    raw["fc2_b"] = _uniform(k3, (1,), 1.0 / math.sqrt(fcc_intermediate))
    return raw


def _reorder_ifgo_to_ifog(w):
    """Reorder last-dim gate blocks from PyTorch (i, f, g, o) to (i, f, o, g)."""
    H = w.shape[-1] // 4
    return jnp.concatenate(
        [w[..., :2 * H], w[..., 3 * H:], w[..., 2 * H:3 * H]], axis=-1)


def prepare_params(raw, input_size, hidden_size, num_layers):
    H = hidden_size
    prep = {"enc_wih": [], "enc_whh": [], "enc_b": [],
            "dec_wih": [], "dec_whh": [], "dec_b": []}

    for l in range(num_layers):
        wih_l, whh_l, b_l = [], [], []
        for d in ("fwd", "bwd"):
            w_ih, w_hh, b_ih, b_hh = raw["enc"][l][d]
            wih_l.append(_reorder_ifgo_to_ifog(jnp.transpose(w_ih)))    # [Din, 4H]
            whh_l.append(_reorder_ifgo_to_ifog(jnp.transpose(w_hh)))    # [H, 4H]
            b_l.append(_reorder_ifgo_to_ifog((b_ih + b_hh)[None, :]))   # [1, 4H]
        prep["enc_wih"].append(jnp.stack(wih_l))   # [2, Din, 4H]
        prep["enc_whh"].append(jnp.stack(whh_l))   # [2, H, 4H]
        prep["enc_b"].append(jnp.stack(b_l))       # [2, 1, 4H]

    for l in range(num_layers):
        w_ih, w_hh, b_ih, b_hh = raw["dec"][l]
        prep["dec_wih"].append(_reorder_ifgo_to_ifog(jnp.transpose(w_ih)))
        prep["dec_whh"].append(_reorder_ifgo_to_ifog(jnp.transpose(w_hh)))
        prep["dec_b"].append(_reorder_ifgo_to_ifog((b_ih + b_hh)[None, :]))

    prep["fc1_wt"] = jnp.transpose(raw["fc1_w"])   # [H, F]
    prep["fc1_b"] = raw["fc1_b"][None, :]          # [1, F]
    prep["fc2_w"] = raw["fc2_w"]                   # [1, F]  (row; VPU dot in kernel)
    prep["fc2_b"] = raw["fc2_b"][None, :]          # [1, 1]
    return prep


if __name__ == "__main__":
    input_size = 8
    hidden_size = 16
    num_layers = 2
    fcc_intermediate = 32
    prediction_horizon = 4
    B, T = 2, 8

    raw = init_params(jax.random.PRNGKey(0),
                      input_size, hidden_size, num_layers, fcc_intermediate)
    prepared = prepare_params(raw, input_size, hidden_size, num_layers)

    # combined_input: [B, 2, T, input_size]  (channel 0 = x, channel 1 = targets)
    combined_input = jax.random.normal(
        jax.random.PRNGKey(0), (B, 2, T, input_size), jnp.float32)

    out = model_forward(prepared, combined_input, num_layers, prediction_horizon)
    out = jax.block_until_ready(out)
    assert out.shape == (B, prediction_horizon), out.shape
    assert bool(jnp.all(jnp.isfinite(out)))
    print("KERNEL_OK")
</pallas_src>

<mosaic_0001>
module attributes {stable_mosaic.version = 11 : i64} {
  func.func @_fused_forward_kernel(%arg0: memref<8x2x8xf32, #tpu.memory_space<vmem>>, %arg1: memref<2x8xf32, #tpu.memory_space<vmem>>, %arg2: memref<4x2x8xf32, #tpu.memory_space<vmem>>, %arg3: memref<2x8x64xf32, #tpu.memory_space<vmem>>, %arg4: memref<2x16x64xf32, #tpu.memory_space<vmem>>, %arg5: memref<2x1x64xf32, #tpu.memory_space<vmem>>, %arg6: memref<2x32x64xf32, #tpu.memory_space<vmem>>, %arg7: memref<2x16x64xf32, #tpu.memory_space<vmem>>, %arg8: memref<2x1x64xf32, #tpu.memory_space<vmem>>, %arg9: memref<8x64xf32, #tpu.memory_space<vmem>>, %arg10: memref<16x64xf32, #tpu.memory_space<vmem>>, %arg11: memref<1x64xf32, #tpu.memory_space<vmem>>, %arg12: memref<16x64xf32, #tpu.memory_space<vmem>>, %arg13: memref<16x64xf32, #tpu.memory_space<vmem>>, %arg14: memref<1x64xf32, #tpu.memory_space<vmem>>, %arg15: memref<16x32xf32, #tpu.memory_space<vmem>>, %arg16: memref<1x32xf32, #tpu.memory_space<vmem>>, %arg17: memref<1x32xf32, #tpu.memory_space<vmem>>, %arg18: memref<1x1xf32, #tpu.memory_space<vmem>>, %arg19: memref<2x4xf32, #tpu.memory_space<vmem>>) attributes {dimension_semantics = [], scalar_prefetch = 0 : i64, scratch_operands = 0 : i64, tpu.core_type = #tpu.core_type<tc>} {
    %c0 = arith.constant 0 : index
    %c0_0 = arith.constant 0 : index
    %c0_1 = arith.constant 0 : index
    %0 = vector.load %arg0[%c0, %c0_0, %c0_1] : memref<8x2x8xf32, #tpu.memory_space<vmem>>, vector<1x2x8xf32>
    %1 = vector.shape_cast %0 : vector<1x2x8xf32> to vector<2x8xf32>
    %c1 = arith.constant 1 : index
    %c0_2 = arith.constant 0 : index
    %c0_3 = arith.constant 0 : index
    %2 = vector.load %arg0[%c1, %c0_2, %c0_3] : memref<8x2x8xf32, #tpu.memory_space<vmem>>, vector<1x2x8xf32>
    %3 = vector.shape_cast %2 : vector<1x2x8xf32> to vector<2x8xf32>
    %c2 = arith.constant 2 : index
    %c0_4 = arith.constant 0 : index
    %c0_5 = arith.constant 0 : index
    %4 = vector.load %arg0[%c2, %c0_4, %c0_5] : memref<8x2x8xf32, #tpu.memory_space<vmem>>, vector<1x2x8xf32>
    %5 = vector.shape_cast %4 : vector<1x2x8xf32> to vector<2x8xf32>
    %c3 = arith.constant 3 : index
    %c0_6 = arith.constant 0 : index
    %c0_7 = arith.constant 0 : index
    %6 = vector.load %arg0[%c3, %c0_6, %c0_7] : memref<8x2x8xf32, #tpu.memory_space<vmem>>, vector<1x2x8xf32>
    %7 = vector.shape_cast %6 : vector<1x2x8xf32> to vector<2x8xf32>
    %c4 = arith.constant 4 : index
    %c0_8 = arith.constant 0 : index
    %c0_9 = arith.constant 0 : index
    %8 = vector.load %arg0[%c4, %c0_8, %c0_9] : memref<8x2x8xf32, #tpu.memory_space<vmem>>, vector<1x2x8xf32>
    %9 = vector.shape_cast %8 : vector<1x2x8xf32> to vector<2x8xf32>
    %c5 = arith.constant 5 : index
    %c0_10 = arith.constant 0 : index
    %c0_11 = arith.constant 0 : index
    %10 = vector.load %arg0[%c5, %c0_10, %c0_11] : memref<8x2x8xf32, #tpu.memory_space<vmem>>, vector<1x2x8xf32>
    %11 = vector.shape_cast %10 : vector<1x2x8xf32> to vector<2x8xf32>
    %c6 = arith.constant 6 : index
    %c0_12 = arith.constant 0 : index
    %c0_13 = arith.constant 0 : index
    %12 = vector.load %arg0[%c6, %c0_12, %c0_13] : memref<8x2x8xf32, #tpu.memory_space<vmem>>, vector<1x2x8xf32>
    %13 = vector.shape_cast %12 : vector<1x2x8xf32> to vector<2x8xf32>
    %c7 = arith.constant 7 : index
    %c0_14 = arith.constant 0 : index
    %c0_15 = arith.constant 0 : index
    %14 = vector.load %arg0[%c7, %c0_14, %c0_15] : memref<8x2x8xf32, #tpu.memory_space<vmem>>, vector<1x2x8xf32>
    %15 = vector.shape_cast %14 : vector<1x2x8xf32> to vector<2x8xf32>
    %c0_16 = arith.constant 0 : index
    %c0_17 = arith.constant 0 : index
    %c0_18 = arith.constant 0 : index
    %16 = vector.load %arg3[%c0_16, %c0_17, %c0_18] : memref<2x8x64xf32, #tpu.memory_space<vmem>>, vector<2x8x64xf32>
    %c0_19 = arith.constant 0 : index
    %c0_20 = arith.constant 0 : index
    %c0_21 = arith.constant 0 : index
    %17 = vector.load %arg4[%c0_19, %c0_20, %c0_21] : memref<2x16x64xf32, #tpu.memory_space<vmem>>, vector<2x16x64xf32>
    %c0_22 = arith.constant 0 : index
    %c0_23 = arith.constant 0 : index
    %c0_24 = arith.constant 0 : index
    %18 = vector.load %arg5[%c0_22, %c0_23, %c0_24] : memref<2x1x64xf32, #tpu.memory_space<vmem>>, vector<2x1x64xf32>
    %19 = vector.extract_strided_slice %16 {offsets = [0, 0, 0], sizes = [1, 8, 64], strides = [1, 1, 1]} : vector<2x8x64xf32> to vector<1x8x64xf32>
    %20 = vector.shape_cast %19 : vector<1x8x64xf32> to vector<8x64xf32>
    %21 = vector.extract_strided_slice %16 {offsets = [1, 0, 0], sizes = [1, 8, 64], strides = [1, 1, 1]} : vector<2x8x64xf32> to vector<1x8x64xf32>
    %22 = vector.shape_cast %21 : vector<1x8x64xf32> to vector<8x64xf32>
    %23 = vector.extract_strided_slice %17 {offsets = [0, 0, 0], sizes = [1, 16, 64], strides = [1, 1, 1]} : vector<2x16x64xf32> to vector<1x16x64xf32>
    %24 = vector.shape_cast %23 : vector<1x16x64xf32> to vector<16x64xf32>
    %25 = vector.extract_strided_slice %17 {offsets = [1, 0, 0], sizes = [1, 16, 64], strides = [1, 1, 1]} : vector<2x16x64xf32> to vector<1x16x64xf32>
    %26 = vector.shape_cast %25 : vector<1x16x64xf32> to vector<16x64xf32>
    %27 = vector.extract_strided_slice %18 {offsets = [0, 0, 0], sizes = [1, 1, 64], strides = [1, 1, 1]} : vector<2x1x64xf32> to vector<1x1x64xf32>
    %28 = vector.shape_cast %27 : vector<1x1x64xf32> to vector<1x64xf32>
    %29 = vector.extract_strided_slice %18 {offsets = [1, 0, 0], sizes = [1, 1, 64], strides = [1, 1, 1]} : vector<2x1x64xf32> to vector<1x1x64xf32>
    %30 = vector.shape_cast %29 : vector<1x1x64xf32> to vector<1x64xf32>
    %cst = arith.constant 0.000000e+00 : f32
    %31 = vector.broadcast %cst : f32 to vector<2x16xf32>
    %cst_25 = arith.constant dense<0.000000e+00> : vector<2x64xf32>
    %32 = tpu.matmul %1, %20, %cst_25 {dimension_numbers = #tpu.dot_dimension_numbers<[1], [0], [0], [1], [0, 0, 1, 1], [], []>} : vector<2x8xf32>, vector<8x64xf32>, vector<2x64xf32> -> vector<2x64xf32>
    %cst_26 = arith.constant dense<0.000000e+00> : vector<2x64xf32>
    %33 = tpu.matmul %15, %22, %cst_26 {dimension_numbers = #tpu.dot_dimension_numbers<[1], [0], [0], [1], [0, 0, 1, 1], [], []>} : vector<2x8xf32>, vector<8x64xf32>, vector<2x64xf32> -> vector<2x64xf32>
    %cst_27 = arith.constant dense<0.000000e+00> : vector<2x64xf32>
    %34 = tpu.matmul %31, %24, %cst_27 {dimension_numbers = #tpu.dot_dimension_numbers<[1], [0], [0], [1], [0, 0, 1, 1], [], []>} : vector<2x16xf32>, vector<16x64xf32>, vector<2x64xf32> -> vector<2x64xf32>
    %35 = arith.addf %32, %34 : vector<2x64xf32>
    %36 = vector.broadcast %28 : vector<1x64xf32> to vector<2x64xf32>
    %37 = arith.addf %35, %36 : vector<2x64xf32>
    %38 = vector.extract_strided_slice %37 {offsets = [0, 0], sizes = [2, 48], strides = [1, 1]} : vector<2x64xf32> to vector<2x48xf32>
    %39 = arith.negf %38 : vector<2x48xf32>
    %40 = math.exp %39 : vector<2x48xf32>
    %cst_28 = arith.constant 1.000000e+00 : f32
    %41 = vector.broadcast %cst_28 : f32 to vector<2x48xf32>
    %42 = arith.addf %41, %40 : vector<2x48xf32>
    %43 = arith.divf %41, %42 : vector<2x48xf32>
    %44 = vector.extract_strided_slice %43 {offsets = [0, 0], sizes = [2, 16], strides = [1, 1]} : vector<2x48xf32> to vector<2x16xf32>
    %45 = vector.extract_strided_slice %43 {offsets = [0, 16], sizes = [2, 16], strides = [1, 1]} : vector<2x48xf32> to vector<2x16xf32>
    %46 = vector.extract_strided_slice %43 {offsets = [0, 32], sizes = [2, 16], strides = [1, 1]} : vector<2x48xf32> to vector<2x16xf32>
    %47 = vector.extract_strided_slice %37 {offsets = [0, 48], sizes = [2, 16], strides = [1, 1]} : vector<2x64xf32> to vector<2x16xf32>
    %48 = math.tanh %47 : vector<2x16xf32>
    %49 = arith.mulf %45, %31 : vector<2x16xf32>
    %50 = arith.mulf %44, %48 : vector<2x16xf32>
    %51 = arith.addf %49, %50 : vector<2x16xf32>
    %52 = math.tanh %51 : vector<2x16xf32>
    %53 = arith.mulf %46, %52 : vector<2x16xf32>
    %cst_29 = arith.constant dense<0.000000e+00> : vector<2x64xf32>
    %54 = tpu.matmul %31, %26, %cst_29 {dimension_numbers = #tpu.dot_dimension_numbers<[1], [0], [0], [1], [0, 0, 1, 1], [], []>} : vector<2x16xf32>, vector<16x64xf32>, vector<2x64xf32> -> vector<2x64xf32>
    %55 = arith.addf %33, %54 : vector<2x64xf32>
    %56 = vector.broadcast %30 : vector<1x64xf32> to vector<2x64xf32>
    %57 = arith.addf %55, %56 : vector<2x64xf32>
    %58 = vector.extract_strided_slice %57 {offsets = [0, 0], sizes = [2, 48], strides = [1, 1]} : vector<2x64xf32> to vector<2x48xf32>
    %59 = arith.negf %58 : vector<2x48xf32>
    %60 = math.exp %59 : vector<2x48xf32>
    %cst_30 = arith.constant 1.000000e+00 : f32
    %61 = vector.broadcast %cst_30 : f32 to vector<2x48xf32>
    %62 = arith.addf %61, %60 : vector<2x48xf32>
    %63 = arith.divf %61, %62 : vector<2x48xf32>
    %64 = vector.extract_strided_slice %63 {offsets = [0, 0], sizes = [2, 16], strides = [1, 1]} : vector<2x48xf32> to vector<2x16xf32>
    %65 = vector.extract_strided_slice %63 {offsets = [0, 16], sizes = [2, 16], strides = [1, 1]} : vector<2x48xf32> to vector<2x16xf32>
    %66 = vector.extract_strided_slice %63 {offsets = [0, 32], sizes = [2, 16], strides = [1, 1]} : vector<2x48xf32> to vector<2x16xf32>
    %67 = vector.extract_strided_slice %57 {offsets = [0, 48], sizes = [2, 16], strides = [1, 1]} : vector<2x64xf32> to vector<2x16xf32>
    %68 = math.tanh %67 : vector<2x16xf32>
    %69 = arith.mulf %65, %31 : vector<2x16xf32>
    %70 = arith.mulf %64, %68 : vector<2x16xf32>
    %71 = arith.addf %69, %70 : vector<2x16xf32>
    %72 = math.tanh %71 : vector<2x16xf32>
    %73 = arith.mulf %66, %72 : vector<2x16xf32>
    %cst_31 = arith.constant dense<0.000000e+00> : vector<2x64xf32>
    %74 = tpu.matmul %3, %20, %cst_31 {dimension_numbers = #tpu.dot_dimension_numbers<[1], [0], [0], [1], [0, 0, 1, 1], [], []>} : vector<2x8xf32>, vector<8x64xf32>, vector<2x64xf32> -> vector<2x64xf32>
    %cst_32 = arith.constant dense<0.000000e+00> : vector<2x64xf32>
    %75 = tpu.matmul %13, %22, %cst_32 {dimension_numbers = #tpu.dot_dimension_numbers<[1], [0], [0], [1], [0, 0, 1, 1], [], []>} : vector<2x8xf32>, vector<8x64xf32>, vector<2x64xf32> -> vector<2x64xf32>
    %cst_33 = arith.constant dense<0.000000e+00> : vector<2x64xf32>
    %76 = tpu.matmul %53, %24, %cst_33 {dimension_numbers = #tpu.dot_dimension_numbers<[1], [0], [0], [1], [0, 0, 1, 1], [], []>} : vector<2x16xf32>, vector<16x64xf32>, vector<2x64xf32> -> vector<2x64xf32>
    %77 = arith.addf %74, %76 : vector<2x64xf32>
    %78 = vector.broadcast %28 : vector<1x64xf32> to vector<2x64xf32>
    %79 = arith.addf %77, %78 : vector<2x64xf32>
    %80 = vector.extract_strided_slice %79 {offsets = [0, 0], sizes = [2, 48], strides = [1, 1]} : vector<2x64xf32> to vector<2x48xf32>
    %81 = arith.negf %80 : vector<2x48xf32>
    %82 = math.exp %81 : vector<2x48xf32>
    %cst_34 = arith.constant 1.000000e+00 : f32
    %83 = vector.broadcast %cst_34 : f32 to vector<2x48xf32>
    %84 = arith.addf %83, %82 : vector<2x48xf32>
    %85 = arith.divf %83, %84 : vector<2x48xf32>
    %86 = vector.extract_strided_slice %85 {offsets = [0, 0], sizes = [2, 16], strides = [1, 1]} : vector<2x48xf32> to vector<2x16xf32>
    %87 = vector.extract_strided_slice %85 {offsets = [0, 16], sizes = [2, 16], strides = [1, 1]} : vector<2x48xf32> to vector<2x16xf32>
    %88 = vector.extract_strided_slice %85 {offsets = [0, 32], sizes = [2, 16], strides = [1, 1]} : vector<2x48xf32> to vector<2x16xf32>
    %89 = vector.extract_strided_slice %79 {offsets = [0, 48], sizes = [2, 16], strides = [1, 1]} : vector<2x64xf32> to vector<2x16xf32>
    %90 = math.tanh %89 : vector<2x16xf32>
    %91 = arith.mulf %87, %51 : vector<2x16xf32>
    %92 = arith.mulf %86, %90 : vector<2x16xf32>
    %93 = arith.addf %91, %92 : vector<2x16xf32>
    %94 = math.tanh %93 : vector<2x16xf32>
    %95 = arith.mulf %88, %94 : vector<2x16xf32>
    %cst_35 = arith.constant dense<0.000000e+00> : vector<2x64xf32>
    %96 = tpu.matmul %73, %26, %cst_35 {dimension_numbers = #tpu.dot_dimension_numbers<[1], [0], [0], [1], [0, 0, 1, 1], [], []>} : vector<2x16xf32>, vector<16x64xf32>, vector<2x64xf32> -> vector<2x64xf32>
    %97 = arith.addf %75, %96 : vector<2x64xf32>
    %98 = vector.broadcast %30 : vector<1x64xf32> to vector<2x64xf32>
    %99 = arith.addf %97, %98 : vector<2x64xf32>
    %100 = vector.extract_strided_slice %99 {offsets = [0, 0], sizes = [2, 48], strides = [1, 1]} : vector<2x64xf32> to vector<2x48xf32>
    %101 = arith.negf %100 : vector<2x48xf32>
    %102 = math.exp %101 : vector<2x48xf32>
    %cst_36 = arith.constant 1.000000e+00 : f32
    %103 = vector.broadcast %cst_36 : f32 to vector<2x48xf32>
    %104 = arith.addf %103, %102 : vector<2x48xf32>
    %105 = arith.divf %103, %104 : vector<2x48xf32>
    %106 = vector.extract_strided_slice %105 {offsets = [0, 0], sizes = [2, 16], strides = [1, 1]} : vector<2x48xf32> to vector<2x16xf32>
    %107 = vector.extract_strided_slice %105 {offsets = [0, 16], sizes = [2, 16], strides = [1, 1]} : vector<2x48xf32> to vector<2x16xf32>
    %108 = vector.extract_strided_slice %105 {offsets = [0, 32], sizes = [2, 16], strides = [1, 1]} : vector<2x48xf32> to vector<2x16xf32>
    %109 = vector.extract_strided_slice %99 {offsets = [0, 48], sizes = [2, 16], strides = [1, 1]} : vector<2x64xf32> to vector<2x16xf32>
    %110 = math.tanh %109 : vector<2x16xf32>
    %111 = arith.mulf %107, %71 : vector<2x16xf32>
    %112 = arith.mulf %106, %110 : vector<2x16xf32>
    %113 = arith.addf %111, %112 : vector<2x16xf32>
    %114 = math.tanh %113 : vector<2x16xf32>
    %115 = arith.mulf %108, %114 : vector<2x16xf32>
    %cst_37 = arith.constant dense<0.000000e+00> : vector<2x64xf32>
    %116 = tpu.matmul %5, %20, %cst_37 {dimension_numbers = #tpu.dot_dimension_numbers<[1], [0], [0], [1], [0, 0, 1, 1], [], []>} : vector<2x8xf32>, vector<8x64xf32>, vector<2x64xf32> -> vector<2x64xf32>
    %cst_38 = arith.constant dense<0.000000e+00> : vector<2x64xf32>
    %117 = tpu.matmul %11, %22, %cst_38 {dimension_numbers = #tpu.dot_dimension_numbers<[1], [0], [0], [1], [0, 0, 1, 1], [], []>} : vector<2x8xf32>, vector<8x64xf32>, vector<2x64xf32> -> vector<2x64xf32>
    %cst_39 = arith.constant dense<0.000000e+00> : vector<2x64xf32>
    %118 = tpu.matmul %95, %24, %cst_39 {dimension_numbers = #tpu.dot_dimension_numbers<[1], [0], [0], [1], [0, 0, 1, 1], [], []>} : vector<2x16xf32>, vector<16x64xf32>, vector<2x64xf32> -> vector<2x64xf32>
    %119 = arith.addf %116, %118 : vector<2x64xf32>
    %120 = vector.broadcast %28 : vector<1x64xf32> to vector<2x64xf32>
    %121 = arith.addf %119, %120 : vector<2x64xf32>
    %122 = vector.extract_strided_slice %121 {offsets = [0, 0], sizes = [2, 48], strides = [1, 1]} : vector<2x64xf32> to vector<2x48xf32>
    %123 = arith.negf %122 : vector<2x48xf32>
    %124 = math.exp %123 : vector<2x48xf32>
    %cst_40 = arith.constant 1.000000e+00 : f32
    %125 = vector.broadcast %cst_40 : f32 to vector<2x48xf32>
    %126 = arith.addf %125, %124 : vector<2x48xf32>
    %127 = arith.divf %125, %126 : vector<2x48xf32>
    %128 = vector.extract_strided_slice %127 {offsets = [0, 0], sizes = [2, 16], strides = [1, 1]} : vector<2x48xf32> to vector<2x16xf32>
    %129 = vector.extract_strided_slice %127 {offsets = [0, 16], sizes = [2, 16], strides = [1, 1]} : vector<2x48xf32> to vector<2x16xf32>
    %130 = vector.extract_strided_slice %127 {offsets = [0, 32], sizes = [2, 16], strides = [1, 1]} : vector<2x48xf32> to vector<2x16xf32>
    %131 = vector.extract_strided_slice %121 {offsets = [0, 48], sizes = [2, 16], strides = [1, 1]} : vector<2x64xf32> to vector<2x16xf32>
    %132 = math.tanh %131 : vector<2x16xf32>
    %133 = arith.mulf %129, %93 : vector<2x16xf32>
    %134 = arith.mulf %128, %132 : vector<2x16xf32>
    %135 = arith.addf %133, %134 : vector<2x16xf32>
    %136 = math.tanh %135 : vector<2x16xf32>
    %137 = arith.mulf %130, %136 : vector<2x16xf32>
    %cst_41 = arith.constant dense<0.000000e+00> : vector<2x64xf32>
    %138 = tpu.matmul %115, %26, %cst_41 {dimension_numbers = #tpu.dot_dimension_numbers<[1], [0], [0], [1], [0, 0, 1, 1], [], []>} : vector<2x16xf32>, vector<16x64xf32>, vector<2x64xf32> -> vector<2x64xf32>
    %139 = arith.addf %117, %138 : vector<2x64xf32>
    %140 = vector.broadcast %30 : vector<1x64xf32> to vector<2x64xf32>
    %141 = arith.addf %139, %140 : vector<2x64xf32>
    %142 = vector.extract_strided_slice %141 {offsets = [0, 0], sizes = [2, 48], strides = [1, 1]} : vector<2x64xf32> to vector<2x48xf32>
    %143 = arith.negf %142 : vector<2x48xf32>
    %144 = math.exp %143 : vector<2x48xf32>
    %cst_42 = arith.constant 1.000000e+00 : f32
    %145 = vector.broadcast %cst_42 : f32 to vector<2x48xf32>
    %146 = arith.addf %145, %144 : vector<2x48xf32>
    %147 = arith.divf %145, %146 : vector<2x48xf32>
    %148 = vector.extract_strided_slice %147 {offsets = [0, 0], sizes = [2, 16], strides = [1, 1]} : vector<2x48xf32> to vector<2x16xf32>
    %149 = vector.extract_strided_slice %147 {offsets = [0, 16], sizes = [2, 16], strides = [1, 1]} : vector<2x48xf32> to vector<2x16xf32>
    %150 = vector.extract_strided_slice %147 {offsets = [0, 32], sizes = [2, 16], strides = [1, 1]} : vector<2x48xf32> to vector<2x16xf32>
    %151 = vector.extract_strided_slice %141 {offsets = [0, 48], sizes = [2, 16], strides = [1, 1]} : vector<2x64xf32> to vector<2x16xf32>
    %152 = math.tanh %151 : vector<2x16xf32>
    %153 = arith.mulf %149, %113 : vector<2x16xf32>
    %154 = arith.mulf %148, %152 : vector<2x16xf32>
    %155 = arith.addf %153, %154 : vector<2x16xf32>
    %156 = math.tanh %155 : vector<2x16xf32>
    %157 = arith.mulf %150, %156 : vector<2x16xf32>
    %cst_43 = arith.constant dense<0.000000e+00> : vector<2x64xf32>
    %158 = tpu.matmul %7, %20, %cst_43 {dimension_numbers = #tpu.dot_dimension_numbers<[1], [0], [0], [1], [0, 0, 1, 1], [], []>} : vector<2x8xf32>, vector<8x64xf32>, vector<2x64xf32> -> vector<2x64xf32>
    %cst_44 = arith.constant dense<0.000000e+00> : vector<2x64xf32>
    %159 = tpu.matmul %9, %22, %cst_44 {dimension_numbers = #tpu.dot_dimension_numbers<[1], [0], [0], [1], [0, 0, 1, 1], [], []>} : vector<2x8xf32>, vector<8x64xf32>, vector<2x64xf32> -> vector<2x64xf32>
    %cst_45 = arith.constant dense<0.000000e+00> : vector<2x64xf32>
    %160 = tpu.matmul %137, %24, %cst_45 {dimension_numbers = #tpu.dot_dimension_numbers<[1], [0], [0], [1], [0, 0, 1, 1], [], []>} : vector<2x16xf32>, vector<16x64xf32>, vector<2x64xf32> -> vector<2x64xf32>
    %161 = arith.addf %158, %160 : vector<2x64xf32>
    %162 = vector.broadcast %28 : vector<1x64xf32> to vector<2x64xf32>
    %163 = arith.addf %161, %162 : vector<2x64xf32>
    %164 = vector.extract_strided_slice %163 {offsets = [0, 0], sizes = [2, 48], strides = [1, 1]} : vector<2x64xf32> to vector<2x48xf32>
    %165 = arith.negf %164 : vector<2x48xf32>
    %166 = math.exp %165 : vector<2x48xf32>
    %cst_46 = arith.constant 1.000000e+00 : f32
    %167 = vector.broadcast %cst_46 : f32 to vector<2x48xf32>
    %168 = arith.addf %167, %166 : vector<2x48xf32>
    %169 = arith.divf %167, %168 : vector<2x48xf32>
    %170 = vector.extract_strided_slice %169 {offsets = [0, 0], sizes = [2, 16], strides = [1, 1]} : vector<2x48xf32> to vector<2x16xf32>
    %171 = vector.extract_strided_slice %169 {offsets = [0, 16], sizes = [2, 16], strides = [1, 1]} : vector<2x48xf32> to vector<2x16xf32>
    %172 = vector.extract_strided_slice %169 {offsets = [0, 32], sizes = [2, 16], strides = [1, 1]} : vector<2x48xf32> to vector<2x16xf32>
    %173 = vector.extract_strided_slice %163 {offsets = [0, 48], sizes = [2, 16], strides = [1, 1]} : vector<2x64xf32> to vector<2x16xf32>
    %174 = math.tanh %173 : vector<2x16xf32>
    %175 = arith.mulf %171, %135 : vector<2x16xf32>
    %176 = arith.mulf %170, %174 : vector<2x16xf32>
    %177 = arith.addf %175, %176 : vector<2x16xf32>
    %178 = math.tanh %177 : vector<2x16xf32>
    %179 = arith.mulf %172, %178 : vector<2x16xf32>
    %cst_47 = arith.constant dense<0.000000e+00> : vector<2x64xf32>
    %180 = tpu.matmul %157, %26, %cst_47 {dimension_numbers = #tpu.dot_dimension_numbers<[1], [0], [0], [1], [0, 0, 1, 1], [], []>} : vector<2x16xf32>, vector<16x64xf32>, vector<2x64xf32> -> vector<2x64xf32>
    %181 = arith.addf %159, %180 : vector<2x64xf32>
    %182 = vector.broadcast %30 : vector<1x64xf32> to vector<2x64xf32>
    %183 = arith.addf %181, %182 : vector<2x64xf32>
    %184 = vector.extract_strided_slice %183 {offsets = [0, 0], sizes = [2, 48], strides = [1, 1]} : vector<2x64xf32> to vector<2x48xf32>
    %185 = arith.negf %184 : vector<2x48xf32>
    %186 = math.exp %185 : vector<2x48xf32>
    %cst_48 = arith.constant 1.000000e+00 : f32
    %187 = vector.broadcast %cst_48 : f32 to vector<2x48xf32>
    %188 = arith.addf %187, %186 : vector<2x48xf32>
    %189 = arith.divf %187, %188 : vector<2x48xf32>
    %190 = vector.extract_strided_slice %189 {offsets = [0, 0], sizes = [2, 16], strides = [1, 1]} : vector<2x48xf32> to vector<2x16xf32>
    %191 = vector.extract_strided_slice %189 {offsets = [0, 16], sizes = [2, 16], strides = [1, 1]} : vector<2x48xf32> to vector<2x16xf32>
    %192 = vector.extract_strided_slice %189 {offsets = [0, 32], sizes = [2, 16], strides = [1, 1]} : vector<2x48xf32> to vector<2x16xf32>
    %193 = vector.extract_strided_slice %183 {offsets = [0, 48], sizes = [2, 16], strides = [1, 1]} : vector<2x64xf32> to vector<2x16xf32>
    %194 = math.tanh %193 : vector<2x16xf32>
    %195 = arith.mulf %191, %155 : vector<2x16xf32>
    %196 = arith.mulf %190, %194 : vector<2x16xf32>
    %197 = arith.addf %195, %196 : vector<2x16xf32>
    %198 = math.tanh %197 : vector<2x16xf32>
    %199 = arith.mulf %192, %198 : vector<2x16xf32>
    %cst_49 = arith.constant dense<0.000000e+00> : vector<2x64xf32>
    %200 = tpu.matmul %9, %20, %cst_49 {dimension_numbers = #tpu.dot_dimension_numbers<[1], [0], [0], [1], [0, 0, 1, 1], [], []>} : vector<2x8xf32>, vector<8x64xf32>, vector<2x64xf32> -> vector<2x64xf32>
    %cst_50 = arith.constant dense<0.000000e+00> : vector<2x64xf32>
    %201 = tpu.matmul %7, %22, %cst_50 {dimension_numbers = #tpu.dot_dimension_numbers<[1], [0], [0], [1], [0, 0, 1, 1], [], []>} : vector<2x8xf32>, vector<8x64xf32>, vector<2x64xf32> -> vector<2x64xf32>
    %cst_51 = arith.constant dense<0.000000e+00> : vector<2x64xf32>
    %202 = tpu.matmul %179, %24, %cst_51 {dimension_numbers = #tpu.dot_dimension_numbers<[1], [0], [0], [1], [0, 0, 1, 1], [], []>} : vector<2x16xf32>, vector<16x64xf32>, vector<2x64xf32> -> vector<2x64xf32>
    %203 = arith.addf %200, %202 : vector<2x64xf32>
    %204 = vector.broadcast %28 : vector<1x64xf32> to vector<2x64xf32>
    %205 = arith.addf %203, %204 : vector<2x64xf32>
    %206 = vector.extract_strided_slice %205 {offsets = [0, 0], sizes = [2, 48], strides = [1, 1]} : vector<2x64xf32> to vector<2x48xf32>
    %207 = arith.negf %206 : vector<2x48xf32>
    %208 = math.exp %207 : vector<2x48xf32>
    %cst_52 = arith.constant 1.000000e+00 : f32
    %209 = vector.broadcast %cst_52 : f32 to vector<2x48xf32>
    %210 = arith.addf %209, %208 : vector<2x48xf32>
    %211 = arith.divf %209, %210 : vector<2x48xf32>
    %212 = vector.extract_strided_slice %211 {offsets = [0, 0], sizes = [2, 16], strides = [1, 1]} : vector<2x48xf32> to vector<2x16xf32>
    %213 = vector.extract_strided_slice %211 {offsets = [0, 16], sizes = [2, 16], strides = [1, 1]} : vector<2x48xf32> to vector<2x16xf32>
    %214 = vector.extract_strided_slice %211 {offsets = [0, 32], sizes = [2, 16], strides = [1, 1]} : vector<2x48xf32> to vector<2x16xf32>
    %215 = vector.extract_strided_slice %205 {offsets = [0, 48], sizes = [2, 16], strides = [1, 1]} : vector<2x64xf32> to vector<2x16xf32>
    %216 = math.tanh %215 : vector<2x16xf32>
    %217 = arith.mulf %213, %177 : vector<2x16xf32>
    %218 = arith.mulf %212, %216 : vector<2x16xf32>
    %219 = arith.addf %217, %218 : vector<2x16xf32>
    %220 = math.tanh %219 : vector<2x16xf32>
    %221 = arith.mulf %214, %220 : vector<2x16xf32>
    %cst_53 = arith.constant dense<0.000000e+00> : vector<2x64xf32>
    %222 = tpu.matmul %199, %26, %cst_53 {dimension_numbers = #tpu.dot_dimension_numbers<[1], [0], [0], [1], [0, 0, 1, 1], [], []>} : vector<2x16xf32>, vector<16x64xf32>, vector<2x64xf32> -> vector<2x64xf32>
    %223 = arith.addf %201, %222 : vector<2x64xf32>
    %224 = vector.broadcast %30 : vector<1x64xf32> to vector<2x64xf32>
    %225 = arith.addf %223, %224 : vector<2x64xf32>
    %226 = vector.extract_strided_slice %225 {offsets = [0, 0], sizes = [2, 48], strides = [1, 1]} : vector<2x64xf32> to vector<2x48xf32>
    %227 = arith.negf %226 : vector<2x48xf32>
    %228 = math.exp %227 : vector<2x48xf32>
    %cst_54 = arith.constant 1.000000e+00 : f32
    %229 = vector.broadcast %cst_54 : f32 to vector<2x48xf32>
    %230 = arith.addf %229, %228 : vector<2x48xf32>
    %231 = arith.divf %229, %230 : vector<2x48xf32>
    %232 = vector.extract_strided_slice %231 {offsets = [0, 0], sizes = [2, 16], strides = [1, 1]} : vector<2x48xf32> to vector<2x16xf32>
    %233 = vector.extract_strided_slice %231 {offsets = [0, 16], sizes = [2, 16], strides = [1, 1]} : vector<2x48xf32> to vector<2x16xf32>
    %234 = vector.extract_strided_slice %231 {offsets = [0, 32], sizes = [2, 16], strides = [1, 1]} : vector<2x48xf32> to vector<2x16xf32>
    %235 = vector.extract_strided_slice %225 {offsets = [0, 48], sizes = [2, 16], strides = [1, 1]} : vector<2x64xf32> to vector<2x16xf32>
    %236 = math.tanh %235 : vector<2x16xf32>
    %237 = arith.mulf %233, %197 : vector<2x16xf32>
    %238 = arith.mulf %232, %236 : vector<2x16xf32>
    %239 = arith.addf %237, %238 : vector<2x16xf32>
    %240 = math.tanh %239 : vector<2x16xf32>
    %241 = arith.mulf %234, %240 : vector<2x16xf32>
    %cst_55 = arith.constant dense<0.000000e+00> : vector<2x64xf32>
    %242 = tpu.matmul %11, %20, %cst_55 {dimension_numbers = #tpu.dot_dimension_numbers<[1], [0], [0], [1], [0, 0, 1, 1], [], []>} : vector<2x8xf32>, vector<8x64xf32>, vector<2x64xf32> -> vector<2x64xf32>
    %cst_56 = arith.constant dense<0.000000e+00> : vector<2x64xf32>
    %243 = tpu.matmul %5, %22, %cst_56 {dimension_numbers = #tpu.dot_dimension_numbers<[1], [0], [0], [1], [0, 0, 1, 1], [], []>} : vector<2x8xf32>, vector<8x64xf32>, vector<2x64xf32> -> vector<2x64xf32>
    %cst_57 = arith.constant dense<0.000000e+00> : vector<2x64xf32>
    %244 = tpu.matmul %221, %24, %cst_57 {dimension_numbers = #tpu.dot_dimension_numbers<[1], [0], [0], [1], [0, 0, 1, 1], [], []>} : vector<2x16xf32>, vector<16x64xf32>, vector<2x64xf32> -> vector<2x64xf32>
    %245 = arith.addf %242, %244 : vector<2x64xf32>
    %246 = vector.broadcast %28 : vector<1x64xf32> to vector<2x64xf32>
    %247 = arith.addf %245, %246 : vector<2x64xf32>
    %248 = vector.extract_strided_slice %247 {offsets = [0, 0], sizes = [2, 48], strides = [1, 1]} : vector<2x64xf32> to vector<2x48xf32>
    %249 = arith.negf %248 : vector<2x48xf32>
    %250 = math.exp %249 : vector<2x48xf32>
    %cst_58 = arith.constant 1.000000e+00 : f32
    %251 = vector.broadcast %cst_58 : f32 to vector<2x48xf32>
    %252 = arith.addf %251, %250 : vector<2x48xf32>
    %253 = arith.divf %251, %252 : vector<2x48xf32>
    %254 = vector.extract_strided_slice %253 {offsets = [0, 0], sizes = [2, 16], strides = [1, 1]} : vector<2x48xf32> to vector<2x16xf32>
    %255 = vector.extract_strided_slice %253 {offsets = [0, 16], sizes = [2, 16], strides = [1, 1]} : vector<2x48xf32> to vector<2x16xf32>
    %256 = vector.extract_strided_slice %253 {offsets = [0, 32], sizes = [2, 16], strides = [1, 1]} : vector<2x48xf32> to vector<2x16xf32>
    %257 = vector.extract_strided_slice %247 {offsets = [0, 48], sizes = [2, 16], strides = [1, 1]} : vector<2x64xf32> to vector<2x16xf32>
    %258 = math.tanh %257 : vector<2x16xf32>
    %259 = arith.mulf %255, %219 : vector<2x16xf32>
    %260 = arith.mulf %254, %258 : vector<2x16xf32>
    %261 = arith.addf %259, %260 : vector<2x16xf32>
    %262 = math.tanh %261 : vector<2x16xf32>
    %263 = arith.mulf %256, %262 : vector<2x16xf32>
    %cst_59 = arith.constant dense<0.000000e+00> : vector<2x64xf32>
    %264 = tpu.matmul %241, %26, %cst_59 {dimension_numbers = #tpu.dot_dimension_numbers<[1], [0], [0], [1], [0, 0, 1, 1], [], []>} : vector<2x16xf32>, vector<16x64xf32>, vector<2x64xf32> -> vector<2x64xf32>
    %265 = arith.addf %243, %264 : vector<2x64xf32>
    %266 = vector.broadcast %30 : vector<1x64xf32> to vector<2x64xf32>
    %267 = arith.addf %265, %266 : vector<2x64xf32>
    %268 = vector.extract_strided_slice %267 {offsets = [0, 0], sizes = [2, 48], strides = [1, 1]} : vector<2x64xf32> to vector<2x48xf32>
    %269 = arith.negf %268 : vector<2x48xf32>
    %270 = math.exp %269 : vector<2x48xf32>
    %cst_60 = arith.constant 1.000000e+00 : f32
    %271 = vector.broadcast %cst_60 : f32 to vector<2x48xf32>
    %272 = arith.addf %271, %270 : vector<2x48xf32>
    %273 = arith.divf %271, %272 : vector<2x48xf32>
    %274 = vector.extract_strided_slice %273 {offsets = [0, 0], sizes = [2, 16], strides = [1, 1]} : vector<2x48xf32> to vector<2x16xf32>
    %275 = vector.extract_strided_slice %273 {offsets = [0, 16], sizes = [2, 16], strides = [1, 1]} : vector<2x48xf32> to vector<2x16xf32>
    %276 = vector.extract_strided_slice %273 {offsets = [0, 32], sizes = [2, 16], strides = [1, 1]} : vector<2x48xf32> to vector<2x16xf32>
    %277 = vector.extract_strided_slice %267 {offsets = [0, 48], sizes = [2, 16], strides = [1, 1]} : vector<2x64xf32> to vector<2x16xf32>
    %278 = math.tanh %277 : vector<2x16xf32>
    %279 = arith.mulf %275, %239 : vector<2x16xf32>
    %280 = arith.mulf %274, %278 : vector<2x16xf32>
    %281 = arith.addf %279, %280 : vector<2x16xf32>
    %282 = math.tanh %281 : vector<2x16xf32>
    %283 = arith.mulf %276, %282 : vector<2x16xf32>
    %cst_61 = arith.constant dense<0.000000e+00> : vector<2x64xf32>
    %284 = tpu.matmul %13, %20, %cst_61 {dimension_numbers = #tpu.dot_dimension_numbers<[1], [0], [0], [1], [0, 0, 1, 1], [], []>} : vector<2x8xf32>, vector<8x64xf32>, vector<2x64xf32> -> vector<2x64xf32>
    %cst_62 = arith.constant dense<0.000000e+00> : vector<2x64xf32>
    %285 = tpu.matmul %3, %22, %cst_62 {dimension_numbers = #tpu.dot_dimension_numbers<[1], [0], [0], [1], [0, 0, 1, 1], [], []>} : vector<2x8xf32>, vector<8x64xf32>, vector<2x64xf32> -> vector<2x64xf32>
    %cst_63 = arith.constant dense<0.000000e+00> : vector<2x64xf32>
    %286 = tpu.matmul %263, %24, %cst_63 {dimension_numbers = #tpu.dot_dimension_numbers<[1], [0], [0], [1], [0, 0, 1, 1], [], []>} : vector<2x16xf32>, vector<16x64xf32>, vector<2x64xf32> -> vector<2x64xf32>
    %287 = arith.addf %284, %286 : vector<2x64xf32>
    %288 = vector.broadcast %28 : vector<1x64xf32> to vector<2x64xf32>
    %289 = arith.addf %287, %288 : vector<2x64xf32>
    %290 = vector.extract_strided_slice %289 {offsets = [0, 0], sizes = [2, 48], strides = [1, 1]} : vector<2x64xf32> to vector<2x48xf32>
    %291 = arith.negf %290 : vector<2x48xf32>
    %292 = math.exp %291 : vector<2x48xf32>
    %cst_64 = arith.constant 1.000000e+00 : f32
    %293 = vector.broadcast %cst_64 : f32 to vector<2x48xf32>
    %294 = arith.addf %293, %292 : vector<2x48xf32>
    %295 = arith.divf %293, %294 : vector<2x48xf32>
    %296 = vector.extract_strided_slice %295 {offsets = [0, 0], sizes = [2, 16], strides = [1, 1]} : vector<2x48xf32> to vector<2x16xf32>
    %297 = vector.extract_strided_slice %295 {offsets = [0, 16], sizes = [2, 16], strides = [1, 1]} : vector<2x48xf32> to vector<2x16xf32>
    %298 = vector.extract_strided_slice %295 {offsets = [0, 32], sizes = [2, 16], strides = [1, 1]} : vector<2x48xf32> to vector<2x16xf32>
    %299 = vector.extract_strided_slice %289 {offsets = [0, 48], sizes = [2, 16], strides = [1, 1]} : vector<2x64xf32> to vector<2x16xf32>
    %300 = math.tanh %299 : vector<2x16xf32>
    %301 = arith.mulf %297, %261 : vector<2x16xf32>
    %302 = arith.mulf %296, %300 : vector<2x16xf32>
    %303 = arith.addf %301, %302 : vector<2x16xf32>
    %304 = math.tanh %303 : vector<2x16xf32>
    %305 = arith.mulf %298, %304 : vector<2x16xf32>
    %cst_65 = arith.constant dense<0.000000e+00> : vector<2x64xf32>
    %306 = tpu.matmul %283, %26, %cst_65 {dimension_numbers = #tpu.dot_dimension_numbers<[1], [0], [0], [1], [0, 0, 1, 1], [], []>} : vector<2x16xf32>, vector<16x64xf32>, vector<2x64xf32> -> vector<2x64xf32>
    %307 = arith.addf %285, %306 : vector<2x64xf32>
    %308 = vector.broadcast %30 : vector<1x64xf32> to vector<2x64xf32>
    %309 = arith.addf %307, %308 : vector<2x64xf32>
    %310 = vector.extract_strided_slice %309 {offsets = [0, 0], sizes = [2, 48], strides = [1, 1]} : vector<2x64xf32> to vector<2x48xf32>
    %311 = arith.negf %310 : vector<2x48xf32>
    %312 = math.exp %311 : vector<2x48xf32>
    %cst_66 = arith.constant 1.000000e+00 : f32
    %313 = vector.broadcast %cst_66 : f32 to vector<2x48xf32>
    %314 = arith.addf %313, %312 : vector<2x48xf32>
    %315 = arith.divf %313, %314 : vector<2x48xf32>
    %316 = vector.extract_strided_slice %315 {offsets = [0, 0], sizes = [2, 16], strides = [1, 1]} : vector<2x48xf32> to vector<2x16xf32>
    %317 = vector.extract_strided_slice %315 {offsets = [0, 16], sizes = [2, 16], strides = [1, 1]} : vector<2x48xf32> to vector<2x16xf32>
    %318 = vector.extract_strided_slice %315 {offsets = [0, 32], sizes = [2, 16], strides = [1, 1]} : vector<2x48xf32> to vector<2x16xf32>
    %319 = vector.extract_strided_slice %309 {offsets = [0, 48], sizes = [2, 16], strides = [1, 1]} : vector<2x64xf32> to vector<2x16xf32>
    %320 = math.tanh %319 : vector<2x16xf32>
    %321 = arith.mulf %317, %281 : vector<2x16xf32>
    %322 = arith.mulf %316, %320 : vector<2x16xf32>
    %323 = arith.addf %321, %322 : vector<2x16xf32>
    %324 = math.tanh %323 : vector<2x16xf32>
    %325 = arith.mulf %318, %324 : vector<2x16xf32>
    %cst_67 = arith.constant dense<0.000000e+00> : vector<2x64xf32>
    %326 = tpu.matmul %15, %20, %cst_67 {dimension_numbers = #tpu.dot_dimension_numbers<[1], [0], [0], [1], [0, 0, 1, 1], [], []>} : vector<2x8xf32>, vector<8x64xf32>, vector<2x64xf32> -> vector<2x64xf32>
    %cst_68 = arith.constant dense<0.000000e+00> : vector<2x64xf32>
    %327 = tpu.matmul %1, %22, %cst_68 {dimension_numbers = #tpu.dot_dimension_numbers<[1], [0], [0], [1], [0, 0, 1, 1], [], []>} : vector<2x8xf32>, vector<8x64xf32>, vector<2x64xf32> -> vector<2x64xf32>
    %cst_69 = arith.constant dense<0.000000e+00> : vector<2x64xf32>
    %328 = tpu.matmul %305, %24, %cst_69 {dimension_numbers = #tpu.dot_dimension_numbers<[1], [0], [0], [1], [0, 0, 1, 1], [], []>} : vector<2x16xf32>, vector<16x64xf32>, vector<2x64xf32> -> vector<2x64xf32>
    %329 = arith.addf %326, %328 : vector<2x64xf32>
    %330 = vector.broadcast %28 : vector<1x64xf32> to vector<2x64xf32>
    %331 = arith.addf %329, %330 : vector<2x64xf32>
    %332 = vector.extract_strided_slice %331 {offsets = [0, 0], sizes = [2, 48], strides = [1, 1]} : vector<2x64xf32> to vector<2x48xf32>
    %333 = arith.negf %332 : vector<2x48xf32>
    %334 = math.exp %333 : vector<2x48xf32>
    %cst_70 = arith.constant 1.000000e+00 : f32
    %335 = vector.broadcast %cst_70 : f32 to vector<2x48xf32>
    %336 = arith.addf %335, %334 : vector<2x48xf32>
    %337 = arith.divf %335, %336 : vector<2x48xf32>
    %338 = vector.extract_strided_slice %337 {offsets = [0, 0], sizes = [2, 16], strides = [1, 1]} : vector<2x48xf32> to vector<2x16xf32>
    %339 = vector.extract_strided_slice %337 {offsets = [0, 16], sizes = [2, 16], strides = [1, 1]} : vector<2x48xf32> to vector<2x16xf32>
    %340 = vector.extract_strided_slice %337 {offsets = [0, 32], sizes = [2, 16], strides = [1, 1]} : vector<2x48xf32> to vector<2x16xf32>
    %341 = vector.extract_strided_slice %331 {offsets = [0, 48], sizes = [2, 16], strides = [1, 1]} : vector<2x64xf32> to vector<2x16xf32>
    %342 = math.tanh %341 : vector<2x16xf32>
    %343 = arith.mulf %339, %303 : vector<2x16xf32>
    %344 = arith.mulf %338, %342 : vector<2x16xf32>
    %345 = arith.addf %343, %344 : vector<2x16xf32>
    %346 = math.tanh %345 : vector<2x16xf32>
    %347 = arith.mulf %340, %346 : vector<2x16xf32>
    %cst_71 = arith.constant dense<0.000000e+00> : vector<2x64xf32>
    %348 = tpu.matmul %325, %26, %cst_71 {dimension_numbers = #tpu.dot_dimension_numbers<[1], [0], [0], [1], [0, 0, 1, 1], [], []>} : vector<2x16xf32>, vector<16x64xf32>, vector<2x64xf32> -> vector<2x64xf32>
    %349 = arith.addf %327, %348 : vector<2x64xf32>
    %350 = vector.broadcast %30 : vector<1x64xf32> to vector<2x64xf32>
    %351 = arith.addf %349, %350 : vector<2x64xf32>
    %352 = vector.extract_strided_slice %351 {offsets = [0, 0], sizes = [2, 48], strides = [1, 1]} : vector<2x64xf32> to vector<2x48xf32>
    %353 = arith.negf %352 : vector<2x48xf32>
    %354 = math.exp %353 : vector<2x48xf32>
    %cst_72 = arith.constant 1.000000e+00 : f32
    %355 = vector.broadcast %cst_72 : f32 to vector<2x48xf32>
    %356 = arith.addf %355, %354 : vector<2x48xf32>
    %357 = arith.divf %355, %356 : vector<2x48xf32>
    %358 = vector.extract_strided_slice %357 {offsets = [0, 0], sizes = [2, 16], strides = [1, 1]} : vector<2x48xf32> to vector<2x16xf32>
    %359 = vector.extract_strided_slice %357 {offsets = [0, 16], sizes = [2, 16], strides = [1, 1]} : vector<2x48xf32> to vector<2x16xf32>
    %360 = vector.extract_strided_slice %357 {offsets = [0, 32], sizes = [2, 16], strides = [1, 1]} : vector<2x48xf32> to vector<2x16xf32>
    %361 = vector.extract_strided_slice %351 {offsets = [0, 48], sizes = [2, 16], strides = [1, 1]} : vector<2x64xf32> to vector<2x16xf32>
    %362 = math.tanh %361 : vector<2x16xf32>
    %363 = arith.mulf %359, %323 : vector<2x16xf32>
    %364 = arith.mulf %358, %362 : vector<2x16xf32>
    %365 = arith.addf %363, %364 : vector<2x16xf32>
    %366 = math.tanh %365 : vector<2x16xf32>
    %367 = arith.mulf %360, %366 : vector<2x16xf32>
    %368 = arith.addf %347, %367 : vector<2x16xf32>
    %369 = arith.addf %345, %365 : vector<2x16xf32>
    %c0_73 = arith.constant 0 : index
    %c0_74 = arith.constant 0 : index
    %c0_75 = arith.constant 0 : index
    %370 = vector.load %arg6[%c0_73, %c0_74, %c0_75] : memref<2x32x64xf32, #tpu.memory_space<vmem>>, vector<2x32x64xf32>
    %c0_76 = arith.constant 0 : index
    %c0_77 = arith.constant 0 : index
    %c0_78 = arith.constant 0 : index
    %371 = vector.load %arg7[%c0_76, %c0_77, %c0_78] : memref<2x16x64xf32, #tpu.memory_space<vmem>>, vector<2x16x64xf32>
    %c0_79 = arith.constant 0 : index
    %c0_80 = arith.constant 0 : index
    %c0_81 = arith.constant 0 : index
    %372 = vector.load %arg8[%c0_79, %c0_80, %c0_81] : memref<2x1x64xf32, #tpu.memory_space<vmem>>, vector<2x1x64xf32>
    %373 = vector.extract_strided_slice %370 {offsets = [0, 0, 0], sizes = [1, 32, 64], strides = [1, 1, 1]} : vector<2x32x64xf32> to vector<1x32x64xf32>
    %374 = vector.shape_cast %373 : vector<1x32x64xf32> to vector<32x64xf32>
    %375 = vector.extract_strided_slice %370 {offsets = [1, 0, 0], sizes = [1, 32, 64], strides = [1, 1, 1]} : vector<2x32x64xf32> to vector<1x32x64xf32>
    %376 = vector.shape_cast %375 : vector<1x32x64xf32> to vector<32x64xf32>
    %377 = vector.extract_strided_slice %371 {offsets = [0, 0, 0], sizes = [1, 16, 64], strides = [1, 1, 1]} : vector<2x16x64xf32> to vector<1x16x64xf32>
    %378 = vector.shape_cast %377 : vector<1x16x64xf32> to vector<16x64xf32>
    %379 = vector.extract_strided_slice %371 {offsets = [1, 0, 0], sizes = [1, 16, 64], strides = [1, 1, 1]} : vector<2x16x64xf32> to vector<1x16x64xf32>
    %380 = vector.shape_cast %379 : vector<1x16x64xf32> to vector<16x64xf32>
    %381 = vector.extract_strided_slice %372 {offsets = [0, 0, 0], sizes = [1, 1, 64], strides = [1, 1, 1]} : vector<2x1x64xf32> to vector<1x1x64xf32>
    %382 = vector.shape_cast %381 : vector<1x1x64xf32> to vector<1x64xf32>
    %383 = vector.extract_strided_slice %372 {offsets = [1, 0, 0], sizes = [1, 1, 64], strides = [1, 1, 1]} : vector<2x1x64xf32> to vector<1x1x64xf32>
    %384 = vector.shape_cast %383 : vector<1x1x64xf32> to vector<1x64xf32>
    %cst_82 = arith.constant 0.000000e+00 : f32
    %385 = vector.broadcast %cst_82 : f32 to vector<2x16xf32>
    %386 = vector.extract_strided_slice %374 {offsets = [0, 0], sizes = [16, 64], strides = [1, 1]} : vector<32x64xf32> to vector<16x64xf32>
    %cst_83 = arith.constant dense<0.000000e+00> : vector<2x64xf32>
    %387 = tpu.matmul %53, %386, %cst_83 {dimension_numbers = #tpu.dot_dimension_numbers<[1], [0], [0], [1], [0, 0, 1, 1], [], []>} : vector<2x16xf32>, vector<16x64xf32>, vector<2x64xf32> -> vector<2x64xf32>
    %388 = vector.extract_strided_slice %374 {offsets = [16, 0], sizes = [16, 64], strides = [1, 1]} : vector<32x64xf32> to vector<16x64xf32>
    %cst_84 = arith.constant dense<0.000000e+00> : vector<2x64xf32>
    %389 = tpu.matmul %367, %388, %cst_84 {dimension_numbers = #tpu.dot_dimension_numbers<[1], [0], [0], [1], [0, 0, 1, 1], [], []>} : vector<2x16xf32>, vector<16x64xf32>, vector<2x64xf32> -> vector<2x64xf32>
    %390 = arith.addf %387, %389 : vector<2x64xf32>
    %391 = vector.extract_strided_slice %376 {offsets = [0, 0], sizes = [16, 64], strides = [1, 1]} : vector<32x64xf32> to vector<16x64xf32>
    %cst_85 = arith.constant dense<0.000000e+00> : vector<2x64xf32>
    %392 = tpu.matmul %347, %391, %cst_85 {dimension_numbers = #tpu.dot_dimension_numbers<[1], [0], [0], [1], [0, 0, 1, 1], [], []>} : vector<2x16xf32>, vector<16x64xf32>, vector<2x64xf32> -> vector<2x64xf32>
    %393 = vector.extract_strided_slice %376 {offsets = [16, 0], sizes = [16, 64], strides = [1, 1]} : vector<32x64xf32> to vector<16x64xf32>
    %cst_86 = arith.constant dense<0.000000e+00> : vector<2x64xf32>
    %394 = tpu.matmul %73, %393, %cst_86 {dimension_numbers = #tpu.dot_dimension_numbers<[1], [0], [0], [1], [0, 0, 1, 1], [], []>} : vector<2x16xf32>, vector<16x64xf32>, vector<2x64xf32> -> vector<2x64xf32>
    %395 = arith.addf %392, %394 : vector<2x64xf32>
    %cst_87 = arith.constant dense<0.000000e+00> : vector<2x64xf32>
    %396 = tpu.matmul %385, %378, %cst_87 {dimension_numbers = #tpu.dot_dimension_numbers<[1], [0], [0], [1], [0, 0, 1, 1], [], []>} : vector<2x16xf32>, vector<16x64xf32>, vector<2x64xf32> -> vector<2x64xf32>
    %397 = arith.addf %390, %396 : vector<2x64xf32>
    %398 = vector.broadcast %382 : vector<1x64xf32> to vector<2x64xf32>
    %399 = arith.addf %397, %398 : vector<2x64xf32>
    %400 = vector.extract_strided_slice %399 {offsets = [0, 0], sizes = [2, 48], strides = [1, 1]} : vector<2x64xf32> to vector<2x48xf32>
    %401 = arith.negf %400 : vector<2x48xf32>
    %402 = math.exp %401 : vector<2x48xf32>
    %cst_88 = arith.constant 1.000000e+00 : f32
    %403 = vector.broadcast %cst_88 : f32 to vector<2x48xf32>
    %404 = arith.addf %403, %402 : vector<2x48xf32>
    %405 = arith.divf %403, %404 : vector<2x48xf32>
    %406 = vector.extract_strided_slice %405 {offsets = [0, 0], sizes = [2, 16], strides = [1, 1]} : vector<2x48xf32> to vector<2x16xf32>
    %407 = vector.extract_strided_slice %405 {offsets = [0, 16], sizes = [2, 16], strides = [1, 1]} : vector<2x48xf32> to vector<2x16xf32>
    %408 = vector.extract_strided_slice %405 {offsets = [0, 32], sizes = [2, 16], strides = [1, 1]} : vector<2x48xf32> to vector<2x16xf32>
    %409 = vector.extract_strided_slice %399 {offsets = [0, 48], sizes = [2, 16], strides = [1, 1]} : vector<2x64xf32> to vector<2x16xf32>
    %410 = math.tanh %409 : vector<2x16xf32>
    %411 = arith.mulf %407, %385 : vector<2x16xf32>
    %412 = arith.mulf %406, %410 : vector<2x16xf32>
    %413 = arith.addf %411, %412 : vector<2x16xf32>
    %414 = math.tanh %413 : vector<2x16xf32>
    %415 = arith.mulf %408, %414 : vector<2x16xf32>
    %cst_89 = arith.constant dense<0.000000e+00> : vector<2x64xf32>
    %416 = tpu.matmul %385, %380, %cst_89 {dimension_numbers = #tpu.dot_dimension_numbers<[1], [0], [0], [1], [0, 0, 1, 1], [], []>} : vector<2x16xf32>, vector<16x64xf32>, vector<2x64xf32> -> vector<2x64xf32>
    %417 = arith.addf %395, %416 : vector<2x64xf32>
    %418 = vector.broadcast %384 : vector<1x64xf32> to vector<2x64xf32>
    %419 = arith.addf %417, %418 : vector<2x64xf32>
    %420 = vector.extract_strided_slice %419 {offsets = [0, 0], sizes = [2, 48], strides = [1, 1]} : vector<2x64xf32> to vector<2x48xf32>
    %421 = arith.negf %420 : vector<2x48xf32>
    %422 = math.exp %421 : vector<2x48xf32>
    %cst_90 = arith.constant 1.000000e+00 : f32
    %423 = vector.broadcast %cst_90 : f32 to vector<2x48xf32>
    %424 = arith.addf %423, %422 : vector<2x48xf32>
    %425 = arith.divf %423, %424 : vector<2x48xf32>
    %426 = vector.extract_strided_slice %425 {offsets = [0, 0], sizes = [2, 16], strides = [1, 1]} : vector<2x48xf32> to vector<2x16xf32>
    %427 = vector.extract_strided_slice %425 {offsets = [0, 16], sizes = [2, 16], strides = [1, 1]} : vector<2x48xf32> to vector<2x16xf32>
    %428 = vector.extract_strided_slice %425 {offsets = [0, 32], sizes = [2, 16], strides = [1, 1]} : vector<2x48xf32> to vector<2x16xf32>
    %429 = vector.extract_strided_slice %419 {offsets = [0, 48], sizes = [2, 16], strides = [1, 1]} : vector<2x64xf32> to vector<2x16xf32>
    %430 = math.tanh %429 : vector<2x16xf32>
    %431 = arith.mulf %427, %385 : vector<2x16xf32>
    %432 = arith.mulf %426, %430 : vector<2x16xf32>
    %433 = arith.addf %431, %432 : vector<2x16xf32>
    %434 = math.tanh %433 : vector<2x16xf32>
    %435 = arith.mulf %428, %434 : vector<2x16xf32>
    %436 = vector.extract_strided_slice %374 {offsets = [0, 0], sizes = [16, 64], strides = [1, 1]} : vector<32x64xf32> to vector<16x64xf32>
    %cst_91 = arith.constant dense<0.000000e+00> : vector<2x64xf32>
    %437 = tpu.matmul %95, %436, %cst_91 {dimension_numbers = #tpu.dot_dimension_numbers<[1], [0], [0], [1], [0, 0, 1, 1], [], []>} : vector<2x16xf32>, vector<16x64xf32>, vector<2x64xf32> -> vector<2x64xf32>
    %438 = vector.extract_strided_slice %374 {offsets = [16, 0], sizes = [16, 64], strides = [1, 1]} : vector<32x64xf32> to vector<16x64xf32>
    %cst_92 = arith.constant dense<0.000000e+00> : vector<2x64xf32>
    %439 = tpu.matmul %325, %438, %cst_92 {dimension_numbers = #tpu.dot_dimension_numbers<[1], [0], [0], [1], [0, 0, 1, 1], [], []>} : vector<2x16xf32>, vector<16x64xf32>, vector<2x64xf32> -> vector<2x64xf32>
    %440 = arith.addf %437, %439 : vector<2x64xf32>
    %441 = vector.extract_strided_slice %376 {offsets = [0, 0], sizes = [16, 64], strides = [1, 1]} : vector<32x64xf32> to vector<16x64xf32>
    %cst_93 = arith.constant dense<0.000000e+00> : vector<2x64xf32>
    %442 = tpu.matmul %305, %441, %cst_93 {dimension_numbers = #tpu.dot_dimension_numbers<[1], [0], [0], [1], [0, 0, 1, 1], [], []>} : vector<2x16xf32>, vector<16x64xf32>, vector<2x64xf32> -> vector<2x64xf32>
    %443 = vector.extract_strided_slice %376 {offsets = [16, 0], sizes = [16, 64], strides = [1, 1]} : vector<32x64xf32> to vector<16x64xf32>
    %cst_94 = arith.constant dense<0.000000e+00> : vector<2x64xf32>
    %444 = tpu.matmul %115, %443, %cst_94 {dimension_numbers = #tpu.dot_dimension_numbers<[1], [0], [0], [1], [0, 0, 1, 1], [], []>} : vector<2x16xf32>, vector<16x64xf32>, vector<2x64xf32> -> vector<2x64xf32>
    %445 = arith.addf %442, %444 : vector<2x64xf32>
    %cst_95 = arith.constant dense<0.000000e+00> : vector<2x64xf32>
    %446 = tpu.matmul %415, %378, %cst_95 {dimension_numbers = #tpu.dot_dimension_numbers<[1], [0], [0], [1], [0, 0, 1, 1], [], []>} : vector<2x16xf32>, vector<16x64xf32>, vector<2x64xf32> -> vector<2x64xf32>
    %447 = arith.addf %440, %446 : vector<2x64xf32>
    %448 = vector.broadcast %382 : vector<1x64xf32> to vector<2x64xf32>
    %449 = arith.addf %447, %448 : vector<2x64xf32>
    %450 = vector.extract_strided_slice %449 {offsets = [0, 0], sizes = [2, 48], strides = [1, 1]} : vector<2x64xf32> to vector<2x48xf32>
    %451 = arith.negf %450 : vector<2x48xf32>
    %452 = math.exp %451 : vector<2x48xf32>
    %cst_96 = arith.constant 1.000000e+00 : f32
    %453 = vector.broadcast %cst_96 : f32 to vector<2x48xf32>
    %454 = arith.addf %453, %452 : vector<2x48xf32>
    %455 = arith.divf %453, %454 : vector<2x48xf32>
    %456 = vector.extract_strided_slice %455 {offsets = [0, 0], sizes = [2, 16], strides = [1, 1]} : vector<2x48xf32> to vector<2x16xf32>
    %457 = vector.extract_strided_slice %455 {offsets = [0, 16], sizes = [2, 16], strides = [1, 1]} : vector<2x48xf32> to vector<2x16xf32>
    %458 = vector.extract_strided_slice %455 {offsets = [0, 32], sizes = [2, 16], strides = [1, 1]} : vector<2x48xf32> to vector<2x16xf32>
    %459 = vector.extract_strided_slice %449 {offsets = [0, 48], sizes = [2, 16], strides = [1, 1]} : vector<2x64xf32> to vector<2x16xf32>
    %460 = math.tanh %459 : vector<2x16xf32>
    %461 = arith.mulf %457, %413 : vector<2x16xf32>
    %462 = arith.mulf %456, %460 : vector<2x16xf32>
    %463 = arith.addf %461, %462 : vector<2x16xf32>
    %464 = math.tanh %463 : vector<2x16xf32>
    %465 = arith.mulf %458, %464 : vector<2x16xf32>
    %cst_97 = arith.constant dense<0.000000e+00> : vector<2x64xf32>
    %466 = tpu.matmul %435, %380, %cst_97 {dimension_numbers = #tpu.dot_dimension_numbers<[1], [0], [0], [1], [0, 0, 1, 1], [], []>} : vector<2x16xf32>, vector<16x64xf32>, vector<2x64xf32> -> vector<2x64xf32>
    %467 = arith.addf %445, %466 : vector<2x64xf32>
    %468 = vector.broadcast %384 : vector<1x64xf32> to vector<2x64xf32>
    %469 = arith.addf %467, %468 : vector<2x64xf32>
    %470 = vector.extract_strided_slice %469 {offsets = [0, 0], sizes = [2, 48], strides = [1, 1]} : vector<2x64xf32> to vector<2x48xf32>
    %471 = arith.negf %470 : vector<2x48xf32>
    %472 = math.exp %471 : vector<2x48xf32>
    %cst_98 = arith.constant 1.000000e+00 : f32
    %473 = vector.broadcast %cst_98 : f32 to vector<2x48xf32>
    %474 = arith.addf %473, %472 : vector<2x48xf32>
    %475 = arith.divf %473, %474 : vector<2x48xf32>
    %476 = vector.extract_strided_slice %475 {offsets = [0, 0], sizes = [2, 16], strides = [1, 1]} : vector<2x48xf32> to vector<2x16xf32>
    %477 = vector.extract_strided_slice %475 {offsets = [0, 16], sizes = [2, 16], strides = [1, 1]} : vector<2x48xf32> to vector<2x16xf32>
    %478 = vector.extract_strided_slice %475 {offsets = [0, 32], sizes = [2, 16], strides = [1, 1]} : vector<2x48xf32> to vector<2x16xf32>
    %479 = vector.extract_strided_slice %469 {offsets = [0, 48], sizes = [2, 16], strides = [1, 1]} : vector<2x64xf32> to vector<2x16xf32>
    %480 = math.tanh %479 : vector<2x16xf32>
    %481 = arith.mulf %477, %433 : vector<2x16xf32>
    %482 = arith.mulf %476, %480 : vector<2x16xf32>
    %483 = arith.addf %481, %482 : vector<2x16xf32>
    %484 = math.tanh %483 : vector<2x16xf32>
    %485 = arith.mulf %478, %484 : vector<2x16xf32>
    %486 = vector.extract_strided_slice %374 {offsets = [0, 0], sizes = [16, 64], strides = [1, 1]} : vector<32x64xf32> to vector<16x64xf32>
    %cst_99 = arith.constant dense<0.000000e+00> : vector<2x64xf32>
    %487 = tpu.matmul %137, %486, %cst_99 {dimension_numbers = #tpu.dot_dimension_numbers<[1], [0], [0], [1], [0, 0, 1, 1], [], []>} : vector<2x16xf32>, vector<16x64xf32>, vector<2x64xf32> -> vector<2x64xf32>
    %488 = vector.extract_strided_slice %374 {offsets = [16, 0], sizes = [16, 64], strides = [1, 1]} : vector<32x64xf32> to vector<16x64xf32>
    %cst_100 = arith.constant dense<0.000000e+00> : vector<2x64xf32>
    %489 = tpu.matmul %283, %488, %cst_100 {dimension_numbers = #tpu.dot_dimension_numbers<[1], [0], [0], [1], [0, 0, 1, 1], [], []>} : vector<2x16xf32>, vector<16x64xf32>, vector<2x64xf32> -> vector<2x64xf32>
    %490 = arith.addf %487, %489 : vector<2x64xf32>
    %491 = vector.extract_strided_slice %376 {offsets = [0, 0], sizes = [16, 64], strides = [1, 1]} : vector<32x64xf32> to vector<16x64xf32>
    %cst_101 = arith.constant dense<0.000000e+00> : vector<2x64xf32>
    %492 = tpu.matmul %263, %491, %cst_101 {dimension_numbers = #tpu.dot_dimension_numbers<[1], [0], [0], [1], [0, 0, 1, 1], [], []>} : vector<2x16xf32>, vector<16x64xf32>, vector<2x64xf32> -> vector<2x64xf32>
    %493 = vector.extract_strided_slice %376 {offsets = [16, 0], sizes = [16, 64], strides = [1, 1]} : vector<32x64xf32> to vector<16x64xf32>
    %cst_102 = arith.constant dense<0.000000e+00> : vector<2x64xf32>
    %494 = tpu.matmul %157, %493, %cst_102 {dimension_numbers = #tpu.dot_dimension_numbers<[1], [0], [0], [1], [0, 0, 1, 1], [], []>} : vector<2x16xf32>, vector<16x64xf32>, vector<2x64xf32> -> vector<2x64xf32>
    %495 = arith.addf %492, %494 : vector<2x64xf32>
    %cst_103 = arith.constant dense<0.000000e+00> : vector<2x64xf32>
    %496 = tpu.matmul %465, %378, %cst_103 {dimension_numbers = #tpu.dot_dimension_numbers<[1], [0], [0], [1], [0, 0, 1, 1], [], []>} : vector<2x16xf32>, vector<16x64xf32>, vector<2x64xf32> -> vector<2x64xf32>
    %497 = arith.addf %490, %496 : vector<2x64xf32>
    %498 = vector.broadcast %382 : vector<1x64xf32> to vector<2x64xf32>
    %499 = arith.addf %497, %498 : vector<2x64xf32>
    %500 = vector.extract_strided_slice %499 {offsets = [0, 0], sizes = [2, 48], strides = [1, 1]} : vector<2x64xf32> to vector<2x48xf32>
    %501 = arith.negf %500 : vector<2x48xf32>
    %502 = math.exp %501 : vector<2x48xf32>
    %cst_104 = arith.constant 1.000000e+00 : f32
    %503 = vector.broadcast %cst_104 : f32 to vector<2x48xf32>
    %504 = arith.addf %503, %502 : vector<2x48xf32>
    %505 = arith.divf %503, %504 : vector<2x48xf32>
    %506 = vector.extract_strided_slice %505 {offsets = [0, 0], sizes = [2, 16], strides = [1, 1]} : vector<2x48xf32> to vector<2x16xf32>
    %507 = vector.extract_strided_slice %505 {offsets = [0, 16], sizes = [2, 16], strides = [1, 1]} : vector<2x48xf32> to vector<2x16xf32>
    %508 = vector.extract_strided_slice %505 {offsets = [0, 32], sizes = [2, 16], strides = [1, 1]} : vector<2x48xf32> to vector<2x16xf32>
    %509 = vector.extract_strided_slice %499 {offsets = [0, 48], sizes = [2, 16], strides = [1, 1]} : vector<2x64xf32> to vector<2x16xf32>
    %510 = math.tanh %509 : vector<2x16xf32>
    %511 = arith.mulf %507, %463 : vector<2x16xf32>
    %512 = arith.mulf %506, %510 : vector<2x16xf32>
    %513 = arith.addf %511, %512 : vector<2x16xf32>
    %514 = math.tanh %513 : vector<2x16xf32>
    %515 = arith.mulf %508, %514 : vector<2x16xf32>
    %cst_105 = arith.constant dense<0.000000e+00> : vector<2x64xf32>
    %516 = tpu.matmul %485, %380, %cst_105 {dimension_numbers = #tpu.dot_dimension_numbers<[1], [0], [0], [1], [0, 0, 1, 1], [], []>} : vector<2x16xf32>, vector<16x64xf32>, vector<2x64xf32> -> vector<2x64xf32>
    %517 = arith.addf %495, %516 : vector<2x64xf32>
    %518 = vector.broadcast %384 : vector<1x64xf32> to vector<2x64xf32>
    %519 = arith.addf %517, %518 : vector<2x64xf32>
    %520 = vector.extract_strided_slice %519 {offsets = [0, 0], sizes = [2, 48], strides = [1, 1]} : vector<2x64xf32> to vector<2x48xf32>
    %521 = arith.negf %520 : vector<2x48xf32>
    %522 = math.exp %521 : vector<2x48xf32>
    %cst_106 = arith.constant 1.000000e+00 : f32
    %523 = vector.broadcast %cst_106 : f32 to vector<2x48xf32>
    %524 = arith.addf %523, %522 : vector<2x48xf32>
    %525 = arith.divf %523, %524 : vector<2x48xf32>
    %526 = vector.extract_strided_slice %525 {offsets = [0, 0], sizes = [2, 16], strides = [1, 1]} : vector<2x48xf32> to vector<2x16xf32>
    %527 = vector.extract_strided_slice %525 {offsets = [0, 16], sizes = [2, 16], strides = [1, 1]} : vector<2x48xf32> to vector<2x16xf32>
    %528 = vector.extract_strided_slice %525 {offsets = [0, 32], sizes = [2, 16], strides = [1, 1]} : vector<2x48xf32> to vector<2x16xf32>
    %529 = vector.extract_strided_slice %519 {offsets = [0, 48], sizes = [2, 16], strides = [1, 1]} : vector<2x64xf32> to vector<2x16xf32>
    %530 = math.tanh %529 : vector<2x16xf32>
    %531 = arith.mulf %527, %483 : vector<2x16xf32>
    %532 = arith.mulf %526, %530 : vector<2x16xf32>
    %533 = arith.addf %531, %532 : vector<2x16xf32>
    %534 = math.tanh %533 : vector<2x16xf32>
    %535 = arith.mulf %528, %534 : vector<2x16xf32>
    %536 = vector.extract_strided_slice %374 {offsets = [0, 0], sizes = [16, 64], strides = [1, 1]} : vector<32x64xf32> to vector<16x64xf32>
    %cst_107 = arith.constant dense<0.000000e+00> : vector<2x64xf32>
    %537 = tpu.matmul %179, %536, %cst_107 {dimension_numbers = #tpu.dot_dimension_numbers<[1], [0], [0], [1], [0, 0, 1, 1], [], []>} : vector<2x16xf32>, vector<16x64xf32>, vector<2x64xf32> -> vector<2x64xf32>
    %538 = vector.extract_strided_slice %374 {offsets = [16, 0], sizes = [16, 64], strides = [1, 1]} : vector<32x64xf32> to vector<16x64xf32>
    %cst_108 = arith.constant dense<0.000000e+00> : vector<2x64xf32>
    %539 = tpu.matmul %241, %538, %cst_108 {dimension_numbers = #tpu.dot_dimension_numbers<[1], [0], [0], [1], [0, 0, 1, 1], [], []>} : vector<2x16xf32>, vector<16x64xf32>, vector<2x64xf32> -> vector<2x64xf32>
    %540 = arith.addf %537, %539 : vector<2x64xf32>
    %541 = vector.extract_strided_slice %376 {offsets = [0, 0], sizes = [16, 64], strides = [1, 1]} : vector<32x64xf32> to vector<16x64xf32>
    %cst_109 = arith.constant dense<0.000000e+00> : vector<2x64xf32>
    %542 = tpu.matmul %221, %541, %cst_109 {dimension_numbers = #tpu.dot_dimension_numbers<[1], [0], [0], [1], [0, 0, 1, 1], [], []>} : vector<2x16xf32>, vector<16x64xf32>, vector<2x64xf32> -> vector<2x64xf32>
    %543 = vector.extract_strided_slice %376 {offsets = [16, 0], sizes = [16, 64], strides = [1, 1]} : vector<32x64xf32> to vector<16x64xf32>
    %cst_110 = arith.constant dense<0.000000e+00> : vector<2x64xf32>
    %544 = tpu.matmul %199, %543, %cst_110 {dimension_numbers = #tpu.dot_dimension_numbers<[1], [0], [0], [1], [0, 0, 1, 1], [], []>} : vector<2x16xf32>, vector<16x64xf32>, vector<2x64xf32> -> vector<2x64xf32>
    %545 = arith.addf %542, %544 : vector<2x64xf32>
    %cst_111 = arith.constant dense<0.000000e+00> : vector<2x64xf32>
    %546 = tpu.matmul %515, %378, %cst_111 {dimension_numbers = #tpu.dot_dimension_numbers<[1], [0], [0], [1], [0, 0, 1, 1], [], []>} : vector<2x16xf32>, vector<16x64xf32>, vector<2x64xf32> -> vector<2x64xf32>
    %547 = arith.addf %540, %546 : vector<2x64xf32>
    %548 = vector.broadcast %382 : vector<1x64xf32> to vector<2x64xf32>
    %549 = arith.addf %547, %548 : vector<2x64xf32>
    %550 = vector.extract_strided_slice %549 {offsets = [0, 0], sizes = [2, 48], strides = [1, 1]} : vector<2x64xf32> to vector<2x48xf32>
    %551 = arith.negf %550 : vector<2x48xf32>
    %552 = math.exp %551 : vector<2x48xf32>
    %cst_112 = arith.constant 1.000000e+00 : f32
    %553 = vector.broadcast %cst_112 : f32 to vector<2x48xf32>
    %554 = arith.addf %553, %552 : vector<2x48xf32>
    %555 = arith.divf %553, %554 : vector<2x48xf32>
    %556 = vector.extract_strided_slice %555 {offsets = [0, 0], sizes = [2, 16], strides = [1, 1]} : vector<2x48xf32> to vector<2x16xf32>
    %557 = vector.extract_strided_slice %555 {offsets = [0, 16], sizes = [2, 16], strides = [1, 1]} : vector<2x48xf32> to vector<2x16xf32>
    %558 = vector.extract_strided_slice %555 {offsets = [0, 32], sizes = [2, 16], strides = [1, 1]} : vector<2x48xf32> to vector<2x16xf32>
    %559 = vector.extract_strided_slice %549 {offsets = [0, 48], sizes = [2, 16], strides = [1, 1]} : vector<2x64xf32> to vector<2x16xf32>
    %560 = math.tanh %559 : vector<2x16xf32>
    %561 = arith.mulf %557, %513 : vector<2x16xf32>
    %562 = arith.mulf %556, %560 : vector<2x16xf32>
    %563 = arith.addf %561, %562 : vector<2x16xf32>
    %564 = math.tanh %563 : vector<2x16xf32>
    %565 = arith.mulf %558, %564 : vector<2x16xf32>
    %cst_113 = arith.constant dense<0.000000e+00> : vector<2x64xf32>
    %566 = tpu.matmul %535, %380, %cst_113 {dimension_numbers = #tpu.dot_dimension_numbers<[1], [0], [0], [1], [0, 0, 1, 1], [], []>} : vector<2x16xf32>, vector<16x64xf32>, vector<2x64xf32> -> vector<2x64xf32>
    %567 = arith.addf %545, %566 : vector<2x64xf32>
    %568 = vector.broadcast %384 : vector<1x64xf32> to vector<2x64xf32>
    %569 = arith.addf %567, %568 : vector<2x64xf32>
    %570 = vector.extract_strided_slice %569 {offsets = [0, 0], sizes = [2, 48], strides = [1, 1]} : vector<2x64xf32> to vector<2x48xf32>
    %571 = arith.negf %570 : vector<2x48xf32>
    %572 = math.exp %571 : vector<2x48xf32>
    %cst_114 = arith.constant 1.000000e+00 : f32
    %573 = vector.broadcast %cst_114 : f32 to vector<2x48xf32>
    %574 = arith.addf %573, %572 : vector<2x48xf32>
    %575 = arith.divf %573, %574 : vector<2x48xf32>
    %576 = vector.extract_strided_slice %575 {offsets = [0, 0], sizes = [2, 16], strides = [1, 1]} : vector<2x48xf32> to vector<2x16xf32>
    %577 = vector.extract_strided_slice %575 {offsets = [0, 16], sizes = [2, 16], strides = [1, 1]} : vector<2x48xf32> to vector<2x16xf32>
    %578 = vector.extract_strided_slice %575 {offsets = [0, 32], sizes = [2, 16], strides = [1, 1]} : vector<2x48xf32> to vector<2x16xf32>
    %579 = vector.extract_strided_slice %569 {offsets = [0, 48], sizes = [2, 16], strides = [1, 1]} : vector<2x64xf32> to vector<2x16xf32>
    %580 = math.tanh %579 : vector<2x16xf32>
    %581 = arith.mulf %577, %533 : vector<2x16xf32>
    %582 = arith.mulf %576, %580 : vector<2x16xf32>
    %583 = arith.addf %581, %582 : vector<2x16xf32>
    %584 = math.tanh %583 : vector<2x16xf32>
    %585 = arith.mulf %578, %584 : vector<2x16xf32>
    %586 = vector.extract_strided_slice %374 {offsets = [0, 0], sizes = [16, 64], strides = [1, 1]} : vector<32x64xf32> to vector<16x64xf32>
    %cst_115 = arith.constant dense<0.000000e+00> : vector<2x64xf32>
    %587 = tpu.matmul %221, %586, %cst_115 {dimension_numbers = #tpu.dot_dimension_numbers<[1], [0], [0], [1], [0, 0, 1, 1], [], []>} : vector<2x16xf32>, vector<16x64xf32>, vector<2x64xf32> -> vector<2x64xf32>
    %588 = vector.extract_strided_slice %374 {offsets = [16, 0], sizes = [16, 64], strides = [1, 1]} : vector<32x64xf32> to vector<16x64xf32>
    %cst_116 = arith.constant dense<0.000000e+00> : vector<2x64xf32>
    %589 = tpu.matmul %199, %588, %cst_116 {dimension_numbers = #tpu.dot_dimension_numbers<[1], [0], [0], [1], [0, 0, 1, 1], [], []>} : vector<2x16xf32>, vector<16x64xf32>, vector<2x64xf32> -> vector<2x64xf32>
    %590 = arith.addf %587, %589 : vector<2x64xf32>
    %591 = vector.extract_strided_slice %376 {offsets = [0, 0], sizes = [16, 64], strides = [1, 1]} : vector<32x64xf32> to vector<16x64xf32>
    %cst_117 = arith.constant dense<0.000000e+00> : vector<2x64xf32>
    %592 = tpu.matmul %179, %591, %cst_117 {dimension_numbers = #tpu.dot_dimension_numbers<[1], [0], [0], [1], [0, 0, 1, 1], [], []>} : vector<2x16xf32>, vector<16x64xf32>, vector<2x64xf32> -> vector<2x64xf32>
    %593 = vector.extract_strided_slice %376 {offsets = [16, 0], sizes = [16, 64], strides = [1, 1]} : vector<32x64xf32> to vector<16x64xf32>
    %cst_118 = arith.constant dense<0.000000e+00> : vector<2x64xf32>
    %594 = tpu.matmul %241, %593, %cst_118 {dimension_numbers = #tpu.dot_dimension_numbers<[1], [0], [0], [1], [0, 0, 1, 1], [], []>} : vector<2x16xf32>, vector<16x64xf32>, vector<2x64xf32> -> vector<2x64xf32>
    %595 = arith.addf %592, %594 : vector<2x64xf32>
    %cst_119 = arith.constant dense<0.000000e+00> : vector<2x64xf32>
    %596 = tpu.matmul %565, %378, %cst_119 {dimension_numbers = #tpu.dot_dimension_numbers<[1], [0], [0], [1], [0, 0, 1, 1], [], []>} : vector<2x16xf32>, vector<16x64xf32>, vector<2x64xf32> -> vector<2x64xf32>
    %597 = arith.addf %590, %596 : vector<2x64xf32>
    %598 = vector.broadcast %382 : vector<1x64xf32> to vector<2x64xf32>
    %599 = arith.addf %597, %598 : vector<2x64xf32>
    %600 = vector.extract_strided_slice %599 {offsets = [0, 0], sizes = [2, 48], strides = [1, 1]} : vector<2x64xf32> to vector<2x48xf32>
    %601 = arith.negf %600 : vector<2x48xf32>
    %602 = math.exp %601 : vector<2x48xf32>
    %cst_120 = arith.constant 1.000000e+00 : f32
    %603 = vector.broadcast %cst_120 : f32 to vector<2x48xf32>
    %604 = arith.addf %603, %602 : vector<2x48xf32>
    %605 = arith.divf %603, %604 : vector<2x48xf32>
    %606 = vector.extract_strided_slice %605 {offsets = [0, 0], sizes = [2, 16], strides = [1, 1]} : vector<2x48xf32> to vector<2x16xf32>
    %607 = vector.extract_strided_slice %605 {offsets = [0, 16], sizes = [2, 16], strides = [1, 1]} : vector<2x48xf32> to vector<2x16xf32>
    %608 = vector.extract_strided_slice %605 {offsets = [0, 32], sizes = [2, 16], strides = [1, 1]} : vector<2x48xf32> to vector<2x16xf32>
    %609 = vector.extract_strided_slice %599 {offsets = [0, 48], sizes = [2, 16], strides = [1, 1]} : vector<2x64xf32> to vector<2x16xf32>
    %610 = math.tanh %609 : vector<2x16xf32>
    %611 = arith.mulf %607, %563 : vector<2x16xf32>
    %612 = arith.mulf %606, %610 : vector<2x16xf32>
    %613 = arith.addf %611, %612 : vector<2x16xf32>
    %614 = math.tanh %613 : vector<2x16xf32>
    %615 = arith.mulf %608, %614 : vector<2x16xf32>
    %cst_121 = arith.constant dense<0.000000e+00> : vector<2x64xf32>
    %616 = tpu.matmul %585, %380, %cst_121 {dimension_numbers = #tpu.dot_dimension_numbers<[1], [0], [0], [1], [0, 0, 1, 1], [], []>} : vector<2x16xf32>, vector<16x64xf32>, vector<2x64xf32> -> vector<2x64xf32>
    %617 = arith.addf %595, %616 : vector<2x64xf32>
    %618 = vector.broadcast %384 : vector<1x64xf32> to vector<2x64xf32>
    %619 = arith.addf %617, %618 : vector<2x64xf32>
    %620 = vector.extract_strided_slice %619 {offsets = [0, 0], sizes = [2, 48], strides = [1, 1]} : vector<2x64xf32> to vector<2x48xf32>
    %621 = arith.negf %620 : vector<2x48xf32>
    %622 = math.exp %621 : vector<2x48xf32>
    %cst_122 = arith.constant 1.000000e+00 : f32
    %623 = vector.broadcast %cst_122 : f32 to vector<2x48xf32>
    %624 = arith.addf %623, %622 : vector<2x48xf32>
    %625 = arith.divf %623, %624 : vector<2x48xf32>
    %626 = vector.extract_strided_slice %625 {offsets = [0, 0], sizes = [2, 16], strides = [1, 1]} : vector<2x48xf32> to vector<2x16xf32>
    %627 = vector.extract_strided_slice %625 {offsets = [0, 16], sizes = [2, 16], strides = [1, 1]} : vector<2x48xf32> to vector<2x16xf32>
    %628 = vector.extract_strided_slice %625 {offsets = [0, 32], sizes = [2, 16], strides = [1, 1]} : vector<2x48xf32> to vector<2x16xf32>
    %629 = vector.extract_strided_slice %619 {offsets = [0, 48], sizes = [2, 16], strides = [1, 1]} : vector<2x64xf32> to vector<2x16xf32>
    %630 = math.tanh %629 : vector<2x16xf32>
    %631 = arith.mulf %627, %583 : vector<2x16xf32>
    %632 = arith.mulf %626, %630 : vector<2x16xf32>
    %633 = arith.addf %631, %632 : vector<2x16xf32>
    %634 = math.tanh %633 : vector<2x16xf32>
    %635 = arith.mulf %628, %634 : vector<2x16xf32>
    %636 = vector.extract_strided_slice %374 {offsets = [0, 0], sizes = [16, 64], strides = [1, 1]} : vector<32x64xf32> to vector<16x64xf32>
    %cst_123 = arith.constant dense<0.000000e+00> : vector<2x64xf32>
    %637 = tpu.matmul %263, %636, %cst_123 {dimension_numbers = #tpu.dot_dimension_numbers<[1], [0], [0], [1], [0, 0, 1, 1], [], []>} : vector<2x16xf32>, vector<16x64xf32>, vector<2x64xf32> -> vector<2x64xf32>
    %638 = vector.extract_strided_slice %374 {offsets = [16, 0], sizes = [16, 64], strides = [1, 1]} : vector<32x64xf32> to vector<16x64xf32>
    %cst_124 = arith.constant dense<0.000000e+00> : vector<2x64xf32>
    %639 = tpu.matmul %157, %638, %cst_124 {dimension_numbers = #tpu.dot_dimension_numbers<[1], [0], [0], [1], [0, 0, 1, 1], [], []>} : vector<2x16xf32>, vector<16x64xf32>, vector<2x64xf32> -> vector<2x64xf32>
    %640 = arith.addf %637, %639 : vector<2x64xf32>
    %641 = vector.extract_strided_slice %376 {offsets = [0, 0], sizes = [16, 64], strides = [1, 1]} : vector<32x64xf32> to vector<16x64xf32>
    %cst_125 = arith.constant dense<0.000000e+00> : vector<2x64xf32>
    %642 = tpu.matmul %137, %641, %cst_125 {dimension_numbers = #tpu.dot_dimension_numbers<[1], [0], [0], [1], [0, 0, 1, 1], [], []>} : vector<2x16xf32>, vector<16x64xf32>, vector<2x64xf32> -> vector<2x64xf32>
    %643 = vector.extract_strided_slice %376 {offsets = [16, 0], sizes = [16, 64], strides = [1, 1]} : vector<32x64xf32> to vector<16x64xf32>
    %cst_126 = arith.constant dense<0.000000e+00> : vector<2x64xf32>
    %644 = tpu.matmul %283, %643, %cst_126 {dimension_numbers = #tpu.dot_dimension_numbers<[1], [0], [0], [1], [0, 0, 1, 1], [], []>} : vector<2x16xf32>, vector<16x64xf32>, vector<2x64xf32> -> vector<2x64xf32>
    %645 = arith.addf %642, %644 : vector<2x64xf32>
    %cst_127 = arith.constant dense<0.000000e+00> : vector<2x64xf32>
    %646 = tpu.matmul %615, %378, %cst_127 {dimension_numbers = #tpu.dot_dimension_numbers<[1], [0], [0], [1], [0, 0, 1, 1], [], []>} : vector<2x16xf32>, vector<16x64xf32>, vector<2x64xf32> -> vector<2x64xf32>
    %647 = arith.addf %640, %646 : vector<2x64xf32>
    %648 = vector.broadcast %382 : vector<1x64xf32> to vector<2x64xf32>
    %649 = arith.addf %647, %648 : vector<2x64xf32>
    %650 = vector.extract_strided_slice %649 {offsets = [0, 0], sizes = [2, 48], strides = [1, 1]} : vector<2x64xf32> to vector<2x48xf32>
    %651 = arith.negf %650 : vector<2x48xf32>
    %652 = math.exp %651 : vector<2x48xf32>
    %cst_128 = arith.constant 1.000000e+00 : f32
    %653 = vector.broadcast %cst_128 : f32 to vector<2x48xf32>
    %654 = arith.addf %653, %652 : vector<2x48xf32>
    %655 = arith.divf %653, %654 : vector<2x48xf32>
    %656 = vector.extract_strided_slice %655 {offsets = [0, 0], sizes = [2, 16], strides = [1, 1]} : vector<2x48xf32> to vector<2x16xf32>
    %657 = vector.extract_strided_slice %655 {offsets = [0, 16], sizes = [2, 16], strides = [1, 1]} : vector<2x48xf32> to vector<2x16xf32>
    %658 = vector.extract_strided_slice %655 {offsets = [0, 32], sizes = [2, 16], strides = [1, 1]} : vector<2x48xf32> to vector<2x16xf32>
    %659 = vector.extract_strided_slice %649 {offsets = [0, 48], sizes = [2, 16], strides = [1, 1]} : vector<2x64xf32> to vector<2x16xf32>
    %660 = math.tanh %659 : vector<2x16xf32>
    %661 = arith.mulf %657, %613 : vector<2x16xf32>
    %662 = arith.mulf %656, %660 : vector<2x16xf32>
    %663 = arith.addf %661, %662 : vector<2x16xf32>
    %664 = math.tanh %663 : vector<2x16xf32>
    %665 = arith.mulf %658, %664 : vector<2x16xf32>
    %cst_129 = arith.constant dense<0.000000e+00> : vector<2x64xf32>
    %666 = tpu.matmul %635, %380, %cst_129 {dimension_numbers = #tpu.dot_dimension_numbers<[1], [0], [0], [1], [0, 0, 1, 1], [], []>} : vector<2x16xf32>, vector<16x64xf32>, vector<2x64xf32> -> vector<2x64xf32>
    %667 = arith.addf %645, %666 : vector<2x64xf32>
    %668 = vector.broadcast %384 : vector<1x64xf32> to vector<2x64xf32>
    %669 = arith.addf %667, %668 : vector<2x64xf32>
    %670 = vector.extract_strided_slice %669 {offsets = [0, 0], sizes = [2, 48], strides = [1, 1]} : vector<2x64xf32> to vector<2x48xf32>
    %671 = arith.negf %670 : vector<2x48xf32>
    %672 = math.exp %671 : vector<2x48xf32>
    %cst_130 = arith.constant 1.000000e+00 : f32
    %673 = vector.broadcast %cst_130 : f32 to vector<2x48xf32>
    %674 = arith.addf %673, %672 : vector<2x48xf32>
    %675 = arith.divf %673, %674 : vector<2x48xf32>
    %676 = vector.extract_strided_slice %675 {offsets = [0, 0], sizes = [2, 16], strides = [1, 1]} : vector<2x48xf32> to vector<2x16xf32>
    %677 = vector.extract_strided_slice %675 {offsets = [0, 16], sizes = [2, 16], strides = [1, 1]} : vector<2x48xf32> to vector<2x16xf32>
    %678 = vector.extract_strided_slice %675 {offsets = [0, 32], sizes = [2, 16], strides = [1, 1]} : vector<2x48xf32> to vector<2x16xf32>
    %679 = vector.extract_strided_slice %669 {offsets = [0, 48], sizes = [2, 16], strides = [1, 1]} : vector<2x64xf32> to vector<2x16xf32>
    %680 = math.tanh %679 : vector<2x16xf32>
    %681 = arith.mulf %677, %633 : vector<2x16xf32>
    %682 = arith.mulf %676, %680 : vector<2x16xf32>
    %683 = arith.addf %681, %682 : vector<2x16xf32>
    %684 = math.tanh %683 : vector<2x16xf32>
    %685 = arith.mulf %678, %684 : vector<2x16xf32>
    %686 = vector.extract_strided_slice %374 {offsets = [0, 0], sizes = [16, 64], strides = [1, 1]} : vector<32x64xf32> to vector<16x64xf32>
    %cst_131 = arith.constant dense<0.000000e+00> : vector<2x64xf32>
    %687 = tpu.matmul %305, %686, %cst_131 {dimension_numbers = #tpu.dot_dimension_numbers<[1], [0], [0], [1], [0, 0, 1, 1], [], []>} : vector<2x16xf32>, vector<16x64xf32>, vector<2x64xf32> -> vector<2x64xf32>
    %688 = vector.extract_strided_slice %374 {offsets = [16, 0], sizes = [16, 64], strides = [1, 1]} : vector<32x64xf32> to vector<16x64xf32>
    %cst_132 = arith.constant dense<0.000000e+00> : vector<2x64xf32>
    %689 = tpu.matmul %115, %688, %cst_132 {dimension_numbers = #tpu.dot_dimension_numbers<[1], [0], [0], [1], [0, 0, 1, 1], [], []>} : vector<2x16xf32>, vector<16x64xf32>, vector<2x64xf32> -> vector<2x64xf32>
    %690 = arith.addf %687, %689 : vector<2x64xf32>
    %691 = vector.extract_strided_slice %376 {offsets = [0, 0], sizes = [16, 64], strides = [1, 1]} : vector<32x64xf32> to vector<16x64xf32>
    %cst_133 = arith.constant dense<0.000000e+00> : vector<2x64xf32>
    %692 = tpu.matmul %95, %691, %cst_133 {dimension_numbers = #tpu.dot_dimension_numbers<[1], [0], [0], [1], [0, 0, 1, 1], [], []>} : vector<2x16xf32>, vector<16x64xf32>, vector<2x64xf32> -> vector<2x64xf32>
    %693 = vector.extract_strided_slice %376 {offsets = [16, 0], sizes = [16, 64], strides = [1, 1]} : vector<32x64xf32> to vector<16x64xf32>
    %cst_134 = arith.constant dense<0.000000e+00> : vector<2x64xf32>
    %694 = tpu.matmul %325, %693, %cst_134 {dimension_numbers = #tpu.dot_dimension_numbers<[1], [0], [0], [1], [0, 0, 1, 1], [], []>} : vector<2x16xf32>, vector<16x64xf32>, vector<2x64xf32> -> vector<2x64xf32>
    %695 = arith.addf %692, %694 : vector<2x64xf32>
    %cst_135 = arith.constant dense<0.000000e+00> : vector<2x64xf32>
    %696 = tpu.matmul %665, %378, %cst_135 {dimension_numbers = #tpu.dot_dimension_numbers<[1], [0], [0], [1], [0, 0, 1, 1], [], []>} : vector<2x16xf32>, vector<16x64xf32>, vector<2x64xf32> -> vector<2x64xf32>
    %697 = arith.addf %690, %696 : vector<2x64xf32>
    %698 = vector.broadcast %382 : vector<1x64xf32> to vector<2x64xf32>
    %699 = arith.addf %697, %698 : vector<2x64xf32>
    %700 = vector.extract_strided_slice %699 {offsets = [0, 0], sizes = [2, 48], strides = [1, 1]} : vector<2x64xf32> to vector<2x48xf32>
    %701 = arith.negf %700 : vector<2x48xf32>
    %702 = math.exp %701 : vector<2x48xf32>
    %cst_136 = arith.constant 1.000000e+00 : f32
    %703 = vector.broadcast %cst_136 : f32 to vector<2x48xf32>
    %704 = arith.addf %703, %702 : vector<2x48xf32>
    %705 = arith.divf %703, %704 : vector<2x48xf32>
    %706 = vector.extract_strided_slice %705 {offsets = [0, 0], sizes = [2, 16], strides = [1, 1]} : vector<2x48xf32> to vector<2x16xf32>
    %707 = vector.extract_strided_slice %705 {offsets = [0, 16], sizes = [2, 16], strides = [1, 1]} : vector<2x48xf32> to vector<2x16xf32>
    %708 = vector.extract_strided_slice %705 {offsets = [0, 32], sizes = [2, 16], strides = [1, 1]} : vector<2x48xf32> to vector<2x16xf32>
    %709 = vector.extract_strided_slice %699 {offsets = [0, 48], sizes = [2, 16], strides = [1, 1]} : vector<2x64xf32> to vector<2x16xf32>
    %710 = math.tanh %709 : vector<2x16xf32>
    %711 = arith.mulf %707, %663 : vector<2x16xf32>
    %712 = arith.mulf %706, %710 : vector<2x16xf32>
    %713 = arith.addf %711, %712 : vector<2x16xf32>
    %714 = math.tanh %713 : vector<2x16xf32>
    %715 = arith.mulf %708, %714 : vector<2x16xf32>
    %cst_137 = arith.constant dense<0.000000e+00> : vector<2x64xf32>
    %716 = tpu.matmul %685, %380, %cst_137 {dimension_numbers = #tpu.dot_dimension_numbers<[1], [0], [0], [1], [0, 0, 1, 1], [], []>} : vector<2x16xf32>, vector<16x64xf32>, vector<2x64xf32> -> vector<2x64xf32>
    %717 = arith.addf %695, %716 : vector<2x64xf32>
    %718 = vector.broadcast %384 : vector<1x64xf32> to vector<2x64xf32>
    %719 = arith.addf %717, %718 : vector<2x64xf32>
    %720 = vector.extract_strided_slice %719 {offsets = [0, 0], sizes = [2, 48], strides = [1, 1]} : vector<2x64xf32> to vector<2x48xf32>
    %721 = arith.negf %720 : vector<2x48xf32>
    %722 = math.exp %721 : vector<2x48xf32>
    %cst_138 = arith.constant 1.000000e+00 : f32
    %723 = vector.broadcast %cst_138 : f32 to vector<2x48xf32>
    %724 = arith.addf %723, %722 : vector<2x48xf32>
    %725 = arith.divf %723, %724 : vector<2x48xf32>
    %726 = vector.extract_strided_slice %725 {offsets = [0, 0], sizes = [2, 16], strides = [1, 1]} : vector<2x48xf32> to vector<2x16xf32>
    %727 = vector.extract_strided_slice %725 {offsets = [0, 16], sizes = [2, 16], strides = [1, 1]} : vector<2x48xf32> to vector<2x16xf32>
    %728 = vector.extract_strided_slice %725 {offsets = [0, 32], sizes = [2, 16], strides = [1, 1]} : vector<2x48xf32> to vector<2x16xf32>
    %729 = vector.extract_strided_slice %719 {offsets = [0, 48], sizes = [2, 16], strides = [1, 1]} : vector<2x64xf32> to vector<2x16xf32>
    %730 = math.tanh %729 : vector<2x16xf32>
    %731 = arith.mulf %727, %683 : vector<2x16xf32>
    %732 = arith.mulf %726, %730 : vector<2x16xf32>
    %733 = arith.addf %731, %732 : vector<2x16xf32>
    %734 = math.tanh %733 : vector<2x16xf32>
    %735 = arith.mulf %728, %734 : vector<2x16xf32>
    %736 = vector.extract_strided_slice %374 {offsets = [0, 0], sizes = [16, 64], strides = [1, 1]} : vector<32x64xf32> to vector<16x64xf32>
    %cst_139 = arith.constant dense<0.000000e+00> : vector<2x64xf32>
    %737 = tpu.matmul %347, %736, %cst_139 {dimension_numbers = #tpu.dot_dimension_numbers<[1], [0], [0], [1], [0, 0, 1, 1], [], []>} : vector<2x16xf32>, vector<16x64xf32>, vector<2x64xf32> -> vector<2x64xf32>
    %738 = vector.extract_strided_slice %374 {offsets = [16, 0], sizes = [16, 64], strides = [1, 1]} : vector<32x64xf32> to vector<16x64xf32>
    %cst_140 = arith.constant dense<0.000000e+00> : vector<2x64xf32>
    %739 = tpu.matmul %73, %738, %cst_140 {dimension_numbers = #tpu.dot_dimension_numbers<[1], [0], [0], [1], [0, 0, 1, 1], [], []>} : vector<2x16xf32>, vector<16x64xf32>, vector<2x64xf32> -> vector<2x64xf32>
    %740 = arith.addf %737, %739 : vector<2x64xf32>
    %741 = vector.extract_strided_slice %376 {offsets = [0, 0], sizes = [16, 64], strides = [1, 1]} : vector<32x64xf32> to vector<16x64xf32>
    %cst_141 = arith.constant dense<0.000000e+00> : vector<2x64xf32>
    %742 = tpu.matmul %53, %741, %cst_141 {dimension_numbers = #tpu.dot_dimension_numbers<[1], [0], [0], [1], [0, 0, 1, 1], [], []>} : vector<2x16xf32>, vector<16x64xf32>, vector<2x64xf32> -> vector<2x64xf32>
    %743 = vector.extract_strided_slice %376 {offsets = [16, 0], sizes = [16, 64], strides = [1, 1]} : vector<32x64xf32> to vector<16x64xf32>
    %cst_142 = arith.constant dense<0.000000e+00> : vector<2x64xf32>
    %744 = tpu.matmul %367, %743, %cst_142 {dimension_numbers = #tpu.dot_dimension_numbers<[1], [0], [0], [1], [0, 0, 1, 1], [], []>} : vector<2x16xf32>, vector<16x64xf32>, vector<2x64xf32> -> vector<2x64xf32>
    %745 = arith.addf %742, %744 : vector<2x64xf32>
    %cst_143 = arith.constant dense<0.000000e+00> : vector<2x64xf32>
    %746 = tpu.matmul %715, %378, %cst_143 {dimension_numbers = #tpu.dot_dimension_numbers<[1], [0], [0], [1], [0, 0, 1, 1], [], []>} : vector<2x16xf32>, vector<16x64xf32>, vector<2x64xf32> -> vector<2x64xf32>
    %747 = arith.addf %740, %746 : vector<2x64xf32>
    %748 = vector.broadcast %382 : vector<1x64xf32> to vector<2x64xf32>
    %749 = arith.addf %747, %748 : vector<2x64xf32>
    %750 = vector.extract_strided_slice %749 {offsets = [0, 0], sizes = [2, 48], strides = [1, 1]} : vector<2x64xf32> to vector<2x48xf32>
    %751 = arith.negf %750 : vector<2x48xf32>
    %752 = math.exp %751 : vector<2x48xf32>
    %cst_144 = arith.constant 1.000000e+00 : f32
    %753 = vector.broadcast %cst_144 : f32 to vector<2x48xf32>
    %754 = arith.addf %753, %752 : vector<2x48xf32>
    %755 = arith.divf %753, %754 : vector<2x48xf32>
    %756 = vector.extract_strided_slice %755 {offsets = [0, 0], sizes = [2, 16], strides = [1, 1]} : vector<2x48xf32> to vector<2x16xf32>
    %757 = vector.extract_strided_slice %755 {offsets = [0, 16], sizes = [2, 16], strides = [1, 1]} : vector<2x48xf32> to vector<2x16xf32>
    %758 = vector.extract_strided_slice %755 {offsets = [0, 32], sizes = [2, 16], strides = [1, 1]} : vector<2x48xf32> to vector<2x16xf32>
    %759 = vector.extract_strided_slice %749 {offsets = [0, 48], sizes = [2, 16], strides = [1, 1]} : vector<2x64xf32> to vector<2x16xf32>
    %760 = math.tanh %759 : vector<2x16xf32>
    %761 = arith.mulf %757, %713 : vector<2x16xf32>
    %762 = arith.mulf %756, %760 : vector<2x16xf32>
    %763 = arith.addf %761, %762 : vector<2x16xf32>
    %764 = math.tanh %763 : vector<2x16xf32>
    %765 = arith.mulf %758, %764 : vector<2x16xf32>
    %cst_145 = arith.constant dense<0.000000e+00> : vector<2x64xf32>
    %766 = tpu.matmul %735, %380, %cst_145 {dimension_numbers = #tpu.dot_dimension_numbers<[1], [0], [0], [1], [0, 0, 1, 1], [], []>} : vector<2x16xf32>, vector<16x64xf32>, vector<2x64xf32> -> vector<2x64xf32>
    %767 = arith.addf %745, %766 : vector<2x64xf32>
    %768 = vector.broadcast %384 : vector<1x64xf32> to vector<2x64xf32>
    %769 = arith.addf %767, %768 : vector<2x64xf32>
    %770 = vector.extract_strided_slice %769 {offsets = [0, 0], sizes = [2, 48], strides = [1, 1]} : vector<2x64xf32> to vector<2x48xf32>
    %771 = arith.negf %770 : vector<2x48xf32>
    %772 = math.exp %771 : vector<2x48xf32>
    %cst_146 = arith.constant 1.000000e+00 : f32
    %773 = vector.broadcast %cst_146 : f32 to vector<2x48xf32>
    %774 = arith.addf %773, %772 : vector<2x48xf32>
    %775 = arith.divf %773, %774 : vector<2x48xf32>
    %776 = vector.extract_strided_slice %775 {offsets = [0, 0], sizes = [2, 16], strides = [1, 1]} : vector<2x48xf32> to vector<2x16xf32>
    %777 = vector.extract_strided_slice %775 {offsets = [0, 16], sizes = [2, 16], strides = [1, 1]} : vector<2x48xf32> to vector<2x16xf32>
    %778 = vector.extract_strided_slice %775 {offsets = [0, 32], sizes = [2, 16], strides = [1, 1]} : vector<2x48xf32> to vector<2x16xf32>
    %779 = vector.extract_strided_slice %769 {offsets = [0, 48], sizes = [2, 16], strides = [1, 1]} : vector<2x64xf32> to vector<2x16xf32>
    %780 = math.tanh %779 : vector<2x16xf32>
    %781 = arith.mulf %777, %733 : vector<2x16xf32>
    %782 = arith.mulf %776, %780 : vector<2x16xf32>
    %783 = arith.addf %781, %782 : vector<2x16xf32>
    %784 = math.tanh %783 : vector<2x16xf32>
    %785 = arith.mulf %778, %784 : vector<2x16xf32>
    %786 = arith.addf %765, %785 : vector<2x16xf32>
    %787 = arith.addf %763, %783 : vector<2x16xf32>
    %c0_147 = arith.constant 0 : index
    %c0_148 = arith.constant 0 : index
    %788 = vector.load %arg15[%c0_147, %c0_148] : memref<16x32xf32, #tpu.memory_space<vmem>>, vector<16x32xf32>
    %c0_149 = arith.constant 0 : index
    %c0_150 = arith.constant 0 : index
    %789 = vector.load %arg16[%c0_149, %c0_150] : memref<1x32xf32, #tpu.memory_space<vmem>>, vector<1x32xf32>
    %c0_151 = arith.constant 0 : index
    %c0_152 = arith.constant 0 : index
    %790 = vector.load %arg17[%c0_151, %c0_152] : memref<1x32xf32, #tpu.memory_space<vmem>>, vector<1x32xf32>
    %c0_153 = arith.constant 0 : index
    %c0_154 = arith.constant 0 : index
    %791 = vector.load %arg18[%c0_153, %c0_154] : memref<1x1xf32, #tpu.memory_space<vmem>>, vector<1x1xf32>
    %c0_155 = arith.constant 0 : index
    %c0_156 = arith.constant 0 : index
    %792 = vector.load %arg9[%c0_155, %c0_156] : memref<8x64xf32, #tpu.memory_space<vmem>>, vector<8x64xf32>
    %c0_157 = arith.constant 0 : index
    %c0_158 = arith.constant 0 : index
    %793 = vector.load %arg10[%c0_157, %c0_158] : memref<16x64xf32, #tpu.memory_space<vmem>>, vector<16x64xf32>
    %c0_159 = arith.constant 0 : index
    %c0_160 = arith.constant 0 : index
    %794 = vector.load %arg11[%c0_159, %c0_160] : memref<1x64xf32, #tpu.memory_space<vmem>>, vector<1x64xf32>
    %c0_161 = arith.constant 0 : index
    %c0_162 = arith.constant 0 : index
    %795 = vector.load %arg12[%c0_161, %c0_162] : memref<16x64xf32, #tpu.memory_space<vmem>>, vector<16x64xf32>
    %c0_163 = arith.constant 0 : index
    %c0_164 = arith.constant 0 : index
    %796 = vector.load %arg13[%c0_163, %c0_164] : memref<16x64xf32, #tpu.memory_space<vmem>>, vector<16x64xf32>
    %c0_165 = arith.constant 0 : index
    %c0_166 = arith.constant 0 : index
    %797 = vector.load %arg14[%c0_165, %c0_166] : memref<1x64xf32, #tpu.memory_space<vmem>>, vector<1x64xf32>
    %798 = tpu.iota {dimensions = array<i32: 1>} : vector<2x8xi32>
    %c0_i32 = arith.constant 0 : i32
    %799 = vector.broadcast %c0_i32 : i32 to vector<2x8xi32>
    %800 = arith.cmpi eq, %798, %799 : vector<2x8xi32>
    %c0_167 = arith.constant 0 : index
    %c0_168 = arith.constant 0 : index
    %801 = vector.load %arg1[%c0_167, %c0_168] : memref<2x8xf32, #tpu.memory_space<vmem>>, vector<2x8xf32>
    %cst_169 = arith.constant dense<0.000000e+00> : vector<2x64xf32>
    %802 = tpu.matmul %801, %792, %cst_169 {dimension_numbers = #tpu.dot_dimension_numbers<[1], [0], [0], [1], [0, 0, 1, 1], [], []>} : vector<2x8xf32>, vector<8x64xf32>, vector<2x64xf32> -> vector<2x64xf32>
    %cst_170 = arith.constant dense<0.000000e+00> : vector<2x64xf32>
    %803 = tpu.matmul %368, %793, %cst_170 {dimension_numbers = #tpu.dot_dimension_numbers<[1], [0], [0], [1], [0, 0, 1, 1], [], []>} : vector<2x16xf32>, vector<16x64xf32>, vector<2x64xf32> -> vector<2x64xf32>
    %804 = arith.addf %802, %803 : vector<2x64xf32>
    %805 = vector.broadcast %794 : vector<1x64xf32> to vector<2x64xf32>
    %806 = arith.addf %804, %805 : vector<2x64xf32>
    %807 = vector.extract_strided_slice %806 {offsets = [0, 0], sizes = [2, 48], strides = [1, 1]} : vector<2x64xf32> to vector<2x48xf32>
    %808 = arith.negf %807 : vector<2x48xf32>
    %809 = math.exp %808 : vector<2x48xf32>
    %cst_171 = arith.constant 1.000000e+00 : f32
    %810 = vector.broadcast %cst_171 : f32 to vector<2x48xf32>
    %811 = arith.addf %810, %809 : vector<2x48xf32>
    %812 = arith.divf %810, %811 : vector<2x48xf32>
    %813 = vector.extract_strided_slice %812 {offsets = [0, 0], sizes = [2, 16], strides = [1, 1]} : vector<2x48xf32> to vector<2x16xf32>
    %814 = vector.extract_strided_slice %812 {offsets = [0, 16], sizes = [2, 16], strides = [1, 1]} : vector<2x48xf32> to vector<2x16xf32>
    %815 = vector.extract_strided_slice %812 {offsets = [0, 32], sizes = [2, 16], strides = [1, 1]} : vector<2x48xf32> to vector<2x16xf32>
    %816 = vector.extract_strided_slice %806 {offsets = [0, 48], sizes = [2, 16], strides = [1, 1]} : vector<2x64xf32> to vector<2x16xf32>
    %817 = math.tanh %816 : vector<2x16xf32>
    %818 = arith.mulf %814, %369 : vector<2x16xf32>
    %819 = arith.mulf %813, %817 : vector<2x16xf32>
    %820 = arith.addf %818, %819 : vector<2x16xf32>
    %821 = math.tanh %820 : vector<2x16xf32>
    %822 = arith.mulf %815, %821 : vector<2x16xf32>
    %cst_172 = arith.constant dense<0.000000e+00> : vector<2x64xf32>
    %823 = tpu.matmul %822, %795, %cst_172 {dimension_numbers = #tpu.dot_dimension_numbers<[1], [0], [0], [1], [0, 0, 1, 1], [], []>} : vector<2x16xf32>, vector<16x64xf32>, vector<2x64xf32> -> vector<2x64xf32>
    %cst_173 = arith.constant dense<0.000000e+00> : vector<2x64xf32>
    %824 = tpu.matmul %786, %796, %cst_173 {dimension_numbers = #tpu.dot_dimension_numbers<[1], [0], [0], [1], [0, 0, 1, 1], [], []>} : vector<2x16xf32>, vector<16x64xf32>, vector<2x64xf32> -> vector<2x64xf32>
    %825 = arith.addf %823, %824 : vector<2x64xf32>
    %826 = vector.broadcast %797 : vector<1x64xf32> to vector<2x64xf32>
    %827 = arith.addf %825, %826 : vector<2x64xf32>
    %828 = vector.extract_strided_slice %827 {offsets = [0, 0], sizes = [2, 48], strides = [1, 1]} : vector<2x64xf32> to vector<2x48xf32>
    %829 = arith.negf %828 : vector<2x48xf32>
    %830 = math.exp %829 : vector<2x48xf32>
    %cst_174 = arith.constant 1.000000e+00 : f32
    %831 = vector.broadcast %cst_174 : f32 to vector<2x48xf32>
    %832 = arith.addf %831, %830 : vector<2x48xf32>
    %833 = arith.divf %831, %832 : vector<2x48xf32>
    %834 = vector.extract_strided_slice %833 {offsets = [0, 0], sizes = [2, 16], strides = [1, 1]} : vector<2x48xf32> to vector<2x16xf32>
    %835 = vector.extract_strided_slice %833 {offsets = [0, 16], sizes = [2, 16], strides = [1, 1]} : vector<2x48xf32> to vector<2x16xf32>
    %836 = vector.extract_strided_slice %833 {offsets = [0, 32], sizes = [2, 16], strides = [1, 1]} : vector<2x48xf32> to vector<2x16xf32>
    %837 = vector.extract_strided_slice %827 {offsets = [0, 48], sizes = [2, 16], strides = [1, 1]} : vector<2x64xf32> to vector<2x16xf32>
    %838 = math.tanh %837 : vector<2x16xf32>
    %839 = arith.mulf %835, %787 : vector<2x16xf32>
    %840 = arith.mulf %834, %838 : vector<2x16xf32>
    %841 = arith.addf %839, %840 : vector<2x16xf32>
    %842 = math.tanh %841 : vector<2x16xf32>
    %843 = arith.mulf %836, %842 : vector<2x16xf32>
    %cst_175 = arith.constant dense<0.000000e+00> : vector<2x32xf32>
    %844 = tpu.matmul %843, %788, %cst_175 {dimension_numbers = #tpu.dot_dimension_numbers<[1], [0], [0], [1], [0, 0, 1, 1], [], []>} : vector<2x16xf32>, vector<16x32xf32>, vector<2x32xf32> -> vector<2x32xf32>
    %845 = vector.broadcast %789 : vector<1x32xf32> to vector<2x32xf32>
    %846 = arith.addf %844, %845 : vector<2x32xf32>
    %cst_176 = arith.constant 0.000000e+00 : f32
    %847 = vector.broadcast %cst_176 : f32 to vector<2x32xf32>
    %848 = arith.maximumf %846, %847 : vector<2x32xf32>
    %849 = vector.broadcast %790 : vector<1x32xf32> to vector<2x32xf32>
    %850 = arith.mulf %848, %849 : vector<2x32xf32>
    %cst_177 = arith.constant dense<0.000000e+00> : vector<2xf32>
    %851 = vector.multi_reduction <add>, %850, %cst_177 [1] : vector<2x32xf32> to vector<2xf32>
    %852 = vector.shape_cast %851 : vector<2xf32> to vector<2x1xf32>
    %853 = vector.broadcast %791 : vector<1x1xf32> to vector<2x1xf32>
    %854 = arith.addf %852, %853 : vector<2x1xf32>
    %c0_178 = arith.constant 0 : index
    %c0_179 = arith.constant 0 : index
    %c0_180 = arith.constant 0 : index
    %855 = vector.load %arg2[%c0_178, %c0_179, %c0_180] : memref<4x2x8xf32, #tpu.memory_space<vmem>>, vector<1x2x8xf32>
    %856 = vector.shape_cast %855 : vector<1x2x8xf32> to vector<2x8xf32>
    %857 = vector.shape_cast %854 : vector<2x1xf32> to vector<2x1xf32>
    %858 = vector.broadcast %857 : vector<2x1xf32> to vector<2x8xf32>
    %859 = arith.select %800, %858, %856 : vector<2x8xi1>, vector<2x8xf32>
    %cst_181 = arith.constant dense<0.000000e+00> : vector<2x64xf32>
    %860 = tpu.matmul %859, %792, %cst_181 {dimension_numbers = #tpu.dot_dimension_numbers<[1], [0], [0], [1], [0, 0, 1, 1], [], []>} : vector<2x8xf32>, vector<8x64xf32>, vector<2x64xf32> -> vector<2x64xf32>
    %cst_182 = arith.constant dense<0.000000e+00> : vector<2x64xf32>
    %861 = tpu.matmul %822, %793, %cst_182 {dimension_numbers = #tpu.dot_dimension_numbers<[1], [0], [0], [1], [0, 0, 1, 1], [], []>} : vector<2x16xf32>, vector<16x64xf32>, vector<2x64xf32> -> vector<2x64xf32>
    %862 = arith.addf %860, %861 : vector<2x64xf32>
    %863 = vector.broadcast %794 : vector<1x64xf32> to vector<2x64xf32>
    %864 = arith.addf %862, %863 : vector<2x64xf32>
    %865 = vector.extract_strided_slice %864 {offsets = [0, 0], sizes = [2, 48], strides = [1, 1]} : vector<2x64xf32> to vector<2x48xf32>
    %866 = arith.negf %865 : vector<2x48xf32>
    %867 = math.exp %866 : vector<2x48xf32>
    %cst_183 = arith.constant 1.000000e+00 : f32
    %868 = vector.broadcast %cst_183 : f32 to vector<2x48xf32>
    %869 = arith.addf %868, %867 : vector<2x48xf32>
    %870 = arith.divf %868, %869 : vector<2x48xf32>
    %871 = vector.extract_strided_slice %870 {offsets = [0, 0], sizes = [2, 16], strides = [1, 1]} : vector<2x48xf32> to vector<2x16xf32>
    %872 = vector.extract_strided_slice %870 {offsets = [0, 16], sizes = [2, 16], strides = [1, 1]} : vector<2x48xf32> to vector<2x16xf32>
    %873 = vector.extract_strided_slice %870 {offsets = [0, 32], sizes = [2, 16], strides = [1, 1]} : vector<2x48xf32> to vector<2x16xf32>
    %874 = vector.extract_strided_slice %864 {offsets = [0, 48], sizes = [2, 16], strides = [1, 1]} : vector<2x64xf32> to vector<2x16xf32>
    %875 = math.tanh %874 : vector<2x16xf32>
    %876 = arith.mulf %872, %820 : vector<2x16xf32>
    %877 = arith.mulf %871, %875 : vector<2x16xf32>
    %878 = arith.addf %876, %877 : vector<2x16xf32>
    %879 = math.tanh %878 : vector<2x16xf32>
    %880 = arith.mulf %873, %879 : vector<2x16xf32>
    %cst_184 = arith.constant dense<0.000000e+00> : vector<2x64xf32>
    %881 = tpu.matmul %880, %795, %cst_184 {dimension_numbers = #tpu.dot_dimension_numbers<[1], [0], [0], [1], [0, 0, 1, 1], [], []>} : vector<2x16xf32>, vector<16x64xf32>, vector<2x64xf32> -> vector<2x64xf32>
    %cst_185 = arith.constant dense<0.000000e+00> : vector<2x64xf32>
    %882 = tpu.matmul %843, %796, %cst_185 {dimension_numbers = #tpu.dot_dimension_numbers<[1], [0], [0], [1], [0, 0, 1, 1], [], []>} : vector<2x16xf32>, vector<16x64xf32>, vector<2x64xf32> -> vector<2x64xf32>
    %883 = arith.addf %881, %882 : vector<2x64xf32>
    %884 = vector.broadcast %797 : vector<1x64xf32> to vector<2x64xf32>
    %885 = arith.addf %883, %884 : vector<2x64xf32>
    %886 = vector.extract_strided_slice %885 {offsets = [0, 0], sizes = [2, 48], strides = [1, 1]} : vector<2x64xf32> to vector<2x48xf32>
    %887 = arith.negf %886 : vector<2x48xf32>
    %888 = math.exp %887 : vector<2x48xf32>
    %cst_186 = arith.constant 1.000000e+00 : f32
    %889 = vector.broadcast %cst_186 : f32 to vector<2x48xf32>
    %890 = arith.addf %889, %888 : vector<2x48xf32>
    %891 = arith.divf %889, %890 : vector<2x48xf32>
    %892 = vector.extract_strided_slice %891 {offsets = [0, 0], sizes = [2, 16], strides = [1, 1]} : vector<2x48xf32> to vector<2x16xf32>
    %893 = vector.extract_strided_slice %891 {offsets = [0, 16], sizes = [2, 16], strides = [1, 1]} : vector<2x48xf32> to vector<2x16xf32>
    %894 = vector.extract_strided_slice %891 {offsets = [0, 32], sizes = [2, 16], strides = [1, 1]} : vector<2x48xf32> to vector<2x16xf32>
    %895 = vector.extract_strided_slice %885 {offsets = [0, 48], sizes = [2, 16], strides = [1, 1]} : vector<2x64xf32> to vector<2x16xf32>
    %896 = math.tanh %895 : vector<2x16xf32>
    %897 = arith.mulf %893, %841 : vector<2x16xf32>
    %898 = arith.mulf %892, %896 : vector<2x16xf32>
    %899 = arith.addf %897, %898 : vector<2x16xf32>
    %900 = math.tanh %899 : vector<2x16xf32>
    %901 = arith.mulf %894, %900 : vector<2x16xf32>
    %cst_187 = arith.constant dense<0.000000e+00> : vector<2x32xf32>
    %902 = tpu.matmul %901, %788, %cst_187 {dimension_numbers = #tpu.dot_dimension_numbers<[1], [0], [0], [1], [0, 0, 1, 1], [], []>} : vector<2x16xf32>, vector<16x32xf32>, vector<2x32xf32> -> vector<2x32xf32>
    %903 = vector.broadcast %789 : vector<1x32xf32> to vector<2x32xf32>
    %904 = arith.addf %902, %903 : vector<2x32xf32>
    %cst_188 = arith.constant 0.000000e+00 : f32
    %905 = vector.broadcast %cst_188 : f32 to vector<2x32xf32>
    %906 = arith.maximumf %904, %905 : vector<2x32xf32>
    %907 = vector.broadcast %790 : vector<1x32xf32> to vector<2x32xf32>
    %908 = arith.mulf %906, %907 : vector<2x32xf32>
    %cst_189 = arith.constant dense<0.000000e+00> : vector<2xf32>
    %909 = vector.multi_reduction <add>, %908, %cst_189 [1] : vector<2x32xf32> to vector<2xf32>
    %910 = vector.shape_cast %909 : vector<2xf32> to vector<2x1xf32>
    %911 = vector.broadcast %791 : vector<1x1xf32> to vector<2x1xf32>
    %912 = arith.addf %910, %911 : vector<2x1xf32>
    %c1_190 = arith.constant 1 : index
    %c0_191 = arith.constant 0 : index
    %c0_192 = arith.constant 0 : index
    %913 = vector.load %arg2[%c1_190, %c0_191, %c0_192] : memref<4x2x8xf32, #tpu.memory_space<vmem>>, vector<1x2x8xf32>
    %914 = vector.shape_cast %913 : vector<1x2x8xf32> to vector<2x8xf32>
    %915 = vector.shape_cast %912 : vector<2x1xf32> to vector<2x1xf32>
    %916 = vector.broadcast %915 : vector<2x1xf32> to vector<2x8xf32>
    %917 = arith.select %800, %916, %914 : vector<2x8xi1>, vector<2x8xf32>
    %cst_193 = arith.constant dense<0.000000e+00> : vector<2x64xf32>
    %918 = tpu.matmul %917, %792, %cst_193 {dimension_numbers = #tpu.dot_dimension_numbers<[1], [0], [0], [1], [0, 0, 1, 1], [], []>} : vector<2x8xf32>, vector<8x64xf32>, vector<2x64xf32> -> vector<2x64xf32>
    %cst_194 = arith.constant dense<0.000000e+00> : vector<2x64xf32>
    %919 = tpu.matmul %880, %793, %cst_194 {dimension_numbers = #tpu.dot_dimension_numbers<[1], [0], [0], [1], [0, 0, 1, 1], [], []>} : vector<2x16xf32>, vector<16x64xf32>, vector<2x64xf32> -> vector<2x64xf32>
    %920 = arith.addf %918, %919 : vector<2x64xf32>
    %921 = vector.broadcast %794 : vector<1x64xf32> to vector<2x64xf32>
    %922 = arith.addf %920, %921 : vector<2x64xf32>
    %923 = vector.extract_strided_slice %922 {offsets = [0, 0], sizes = [2, 48], strides = [1, 1]} : vector<2x64xf32> to vector<2x48xf32>
    %924 = arith.negf %923 : vector<2x48xf32>
    %925 = math.exp %924 : vector<2x48xf32>
    %cst_195 = arith.constant 1.000000e+00 : f32
    %926 = vector.broadcast %cst_195 : f32 to vector<2x48xf32>
    %927 = arith.addf %926, %925 : vector<2x48xf32>
    %928 = arith.divf %926, %927 : vector<2x48xf32>
    %929 = vector.extract_strided_slice %928 {offsets = [0, 0], sizes = [2, 16], strides = [1, 1]} : vector<2x48xf32> to vector<2x16xf32>
    %930 = vector.extract_strided_slice %928 {offsets = [0, 16], sizes = [2, 16], strides = [1, 1]} : vector<2x48xf32> to vector<2x16xf32>
    %931 = vector.extract_strided_slice %928 {offsets = [0, 32], sizes = [2, 16], strides = [1, 1]} : vector<2x48xf32> to vector<2x16xf32>
    %932 = vector.extract_strided_slice %922 {offsets = [0, 48], sizes = [2, 16], strides = [1, 1]} : vector<2x64xf32> to vector<2x16xf32>
    %933 = math.tanh %932 : vector<2x16xf32>
    %934 = arith.mulf %930, %878 : vector<2x16xf32>
    %935 = arith.mulf %929, %933 : vector<2x16xf32>
    %936 = arith.addf %934, %935 : vector<2x16xf32>
    %937 = math.tanh %936 : vector<2x16xf32>
    %938 = arith.mulf %931, %937 : vector<2x16xf32>
    %cst_196 = arith.constant dense<0.000000e+00> : vector<2x64xf32>
    %939 = tpu.matmul %938, %795, %cst_196 {dimension_numbers = #tpu.dot_dimension_numbers<[1], [0], [0], [1], [0, 0, 1, 1], [], []>} : vector<2x16xf32>, vector<16x64xf32>, vector<2x64xf32> -> vector<2x64xf32>
    %cst_197 = arith.constant dense<0.000000e+00> : vector<2x64xf32>
    %940 = tpu.matmul %901, %796, %cst_197 {dimension_numbers = #tpu.dot_dimension_numbers<[1], [0], [0], [1], [0, 0, 1, 1], [], []>} : vector<2x16xf32>, vector<16x64xf32>, vector<2x64xf32> -> vector<2x64xf32>
    %941 = arith.addf %939, %940 : vector<2x64xf32>
    %942 = vector.broadcast %797 : vector<1x64xf32> to vector<2x64xf32>
    %943 = arith.addf %941, %942 : vector<2x64xf32>
    %944 = vector.extract_strided_slice %943 {offsets = [0, 0], sizes = [2, 48], strides = [1, 1]} : vector<2x64xf32> to vector<2x48xf32>
    %945 = arith.negf %944 : vector<2x48xf32>
    %946 = math.exp %945 : vector<2x48xf32>
    %cst_198 = arith.constant 1.000000e+00 : f32
    %947 = vector.broadcast %cst_198 : f32 to vector<2x48xf32>
    %948 = arith.addf %947, %946 : vector<2x48xf32>
    %949 = arith.divf %947, %948 : vector<2x48xf32>
    %950 = vector.extract_strided_slice %949 {offsets = [0, 0], sizes = [2, 16], strides = [1, 1]} : vector<2x48xf32> to vector<2x16xf32>
    %951 = vector.extract_strided_slice %949 {offsets = [0, 16], sizes = [2, 16], strides = [1, 1]} : vector<2x48xf32> to vector<2x16xf32>
    %952 = vector.extract_strided_slice %949 {offsets = [0, 32], sizes = [2, 16], strides = [1, 1]} : vector<2x48xf32> to vector<2x16xf32>
    %953 = vector.extract_strided_slice %943 {offsets = [0, 48], sizes = [2, 16], strides = [1, 1]} : vector<2x64xf32> to vector<2x16xf32>
    %954 = math.tanh %953 : vector<2x16xf32>
    %955 = arith.mulf %951, %899 : vector<2x16xf32>
    %956 = arith.mulf %950, %954 : vector<2x16xf32>
    %957 = arith.addf %955, %956 : vector<2x16xf32>
    %958 = math.tanh %957 : vector<2x16xf32>
    %959 = arith.mulf %952, %958 : vector<2x16xf32>
    %cst_199 = arith.constant dense<0.000000e+00> : vector<2x32xf32>
    %960 = tpu.matmul %959, %788, %cst_199 {dimension_numbers = #tpu.dot_dimension_numbers<[1], [0], [0], [1], [0, 0, 1, 1], [], []>} : vector<2x16xf32>, vector<16x32xf32>, vector<2x32xf32> -> vector<2x32xf32>
    %961 = vector.broadcast %789 : vector<1x32xf32> to vector<2x32xf32>
    %962 = arith.addf %960, %961 : vector<2x32xf32>
    %cst_200 = arith.constant 0.000000e+00 : f32
    %963 = vector.broadcast %cst_200 : f32 to vector<2x32xf32>
    %964 = arith.maximumf %962, %963 : vector<2x32xf32>
    %965 = vector.broadcast %790 : vector<1x32xf32> to vector<2x32xf32>
    %966 = arith.mulf %964, %965 : vector<2x32xf32>
    %cst_201 = arith.constant dense<0.000000e+00> : vector<2xf32>
    %967 = vector.multi_reduction <add>, %966, %cst_201 [1] : vector<2x32xf32> to vector<2xf32>
    %968 = vector.shape_cast %967 : vector<2xf32> to vector<2x1xf32>
    %969 = vector.broadcast %791 : vector<1x1xf32> to vector<2x1xf32>
    %970 = arith.addf %968, %969 : vector<2x1xf32>
    %c2_202 = arith.constant 2 : index
    %c0_203 = arith.constant 0 : index
    %c0_204 = arith.constant 0 : index
    %971 = vector.load %arg2[%c2_202, %c0_203, %c0_204] : memref<4x2x8xf32, #tpu.memory_space<vmem>>, vector<1x2x8xf32>
    %972 = vector.shape_cast %971 : vector<1x2x8xf32> to vector<2x8xf32>
    %973 = vector.shape_cast %970 : vector<2x1xf32> to vector<2x1xf32>
    %974 = vector.broadcast %973 : vector<2x1xf32> to vector<2x8xf32>
    %975 = arith.select %800, %974, %972 : vector<2x8xi1>, vector<2x8xf32>
    %cst_205 = arith.constant dense<0.000000e+00> : vector<2x64xf32>
    %976 = tpu.matmul %975, %792, %cst_205 {dimension_numbers = #tpu.dot_dimension_numbers<[1], [0], [0], [1], [0, 0, 1, 1], [], []>} : vector<2x8xf32>, vector<8x64xf32>, vector<2x64xf32> -> vector<2x64xf32>
    %cst_206 = arith.constant dense<0.000000e+00> : vector<2x64xf32>
    %977 = tpu.matmul %938, %793, %cst_206 {dimension_numbers = #tpu.dot_dimension_numbers<[1], [0], [0], [1], [0, 0, 1, 1], [], []>} : vector<2x16xf32>, vector<16x64xf32>, vector<2x64xf32> -> vector<2x64xf32>
    %978 = arith.addf %976, %977 : vector<2x64xf32>
    %979 = vector.broadcast %794 : vector<1x64xf32> to vector<2x64xf32>
    %980 = arith.addf %978, %979 : vector<2x64xf32>
    %981 = vector.extract_strided_slice %980 {offsets = [0, 0], sizes = [2, 48], strides = [1, 1]} : vector<2x64xf32> to vector<2x48xf32>
    %982 = arith.negf %981 : vector<2x48xf32>
    %983 = math.exp %982 : vector<2x48xf32>
    %cst_207 = arith.constant 1.000000e+00 : f32
    %984 = vector.broadcast %cst_207 : f32 to vector<2x48xf32>
    %985 = arith.addf %984, %983 : vector<2x48xf32>
    %986 = arith.divf %984, %985 : vector<2x48xf32>
    %987 = vector.extract_strided_slice %986 {offsets = [0, 0], sizes = [2, 16], strides = [1, 1]} : vector<2x48xf32> to vector<2x16xf32>
    %988 = vector.extract_strided_slice %986 {offsets = [0, 16], sizes = [2, 16], strides = [1, 1]} : vector<2x48xf32> to vector<2x16xf32>
    %989 = vector.extract_strided_slice %986 {offsets = [0, 32], sizes = [2, 16], strides = [1, 1]} : vector<2x48xf32> to vector<2x16xf32>
    %990 = vector.extract_strided_slice %980 {offsets = [0, 48], sizes = [2, 16], strides = [1, 1]} : vector<2x64xf32> to vector<2x16xf32>
    %991 = math.tanh %990 : vector<2x16xf32>
    %992 = arith.mulf %988, %936 : vector<2x16xf32>
    %993 = arith.mulf %987, %991 : vector<2x16xf32>
    %994 = arith.addf %992, %993 : vector<2x16xf32>
    %995 = math.tanh %994 : vector<2x16xf32>
    %996 = arith.mulf %989, %995 : vector<2x16xf32>
    %cst_208 = arith.constant dense<0.000000e+00> : vector<2x64xf32>
    %997 = tpu.matmul %996, %795, %cst_208 {dimension_numbers = #tpu.dot_dimension_numbers<[1], [0], [0], [1], [0, 0, 1, 1], [], []>} : vector<2x16xf32>, vector<16x64xf32>, vector<2x64xf32> -> vector<2x64xf32>
    %cst_209 = arith.constant dense<0.000000e+00> : vector<2x64xf32>
    %998 = tpu.matmul %959, %796, %cst_209 {dimension_numbers = #tpu.dot_dimension_numbers<[1], [0], [0], [1], [0, 0, 1, 1], [], []>} : vector<2x16xf32>, vector<16x64xf32>, vector<2x64xf32> -> vector<2x64xf32>
    %999 = arith.addf %997, %998 : vector<2x64xf32>
    %1000 = vector.broadcast %797 : vector<1x64xf32> to vector<2x64xf32>
    %1001 = arith.addf %999, %1000 : vector<2x64xf32>
    %1002 = vector.extract_strided_slice %1001 {offsets = [0, 0], sizes = [2, 48], strides = [1, 1]} : vector<2x64xf32> to vector<2x48xf32>
    %1003 = arith.negf %1002 : vector<2x48xf32>
    %1004 = math.exp %1003 : vector<2x48xf32>
    %cst_210 = arith.constant 1.000000e+00 : f32
    %1005 = vector.broadcast %cst_210 : f32 to vector<2x48xf32>
    %1006 = arith.addf %1005, %1004 : vector<2x48xf32>
    %1007 = arith.divf %1005, %1006 : vector<2x48xf32>
    %1008 = vector.extract_strided_slice %1007 {offsets = [0, 0], sizes = [2, 16], strides = [1, 1]} : vector<2x48xf32> to vector<2x16xf32>
    %1009 = vector.extract_strided_slice %1007 {offsets = [0, 16], sizes = [2, 16], strides = [1, 1]} : vector<2x48xf32> to vector<2x16xf32>
    %1010 = vector.extract_strided_slice %1007 {offsets = [0, 32], sizes = [2, 16], strides = [1, 1]} : vector<2x48xf32> to vector<2x16xf32>
    %1011 = vector.extract_strided_slice %1001 {offsets = [0, 48], sizes = [2, 16], strides = [1, 1]} : vector<2x64xf32> to vector<2x16xf32>
    %1012 = math.tanh %1011 : vector<2x16xf32>
    %1013 = arith.mulf %1009, %957 : vector<2x16xf32>
    %1014 = arith.mulf %1008, %1012 : vector<2x16xf32>
    %1015 = arith.addf %1013, %1014 : vector<2x16xf32>
    %1016 = math.tanh %1015 : vector<2x16xf32>
    %1017 = arith.mulf %1010, %1016 : vector<2x16xf32>
    %cst_211 = arith.constant dense<0.000000e+00> : vector<2x32xf32>
    %1018 = tpu.matmul %1017, %788, %cst_211 {dimension_numbers = #tpu.dot_dimension_numbers<[1], [0], [0], [1], [0, 0, 1, 1], [], []>} : vector<2x16xf32>, vector<16x32xf32>, vector<2x32xf32> -> vector<2x32xf32>
    %1019 = vector.broadcast %789 : vector<1x32xf32> to vector<2x32xf32>
    %1020 = arith.addf %1018, %1019 : vector<2x32xf32>
    %cst_212 = arith.constant 0.000000e+00 : f32
    %1021 = vector.broadcast %cst_212 : f32 to vector<2x32xf32>
    %1022 = arith.maximumf %1020, %1021 : vector<2x32xf32>
    %1023 = vector.broadcast %790 : vector<1x32xf32> to vector<2x32xf32>
    %1024 = arith.mulf %1022, %1023 : vector<2x32xf32>
    %cst_213 = arith.constant dense<0.000000e+00> : vector<2xf32>
    %1025 = vector.multi_reduction <add>, %1024, %cst_213 [1] : vector<2x32xf32> to vector<2xf32>
    %1026 = vector.shape_cast %1025 : vector<2xf32> to vector<2x1xf32>
    %1027 = vector.broadcast %791 : vector<1x1xf32> to vector<2x1xf32>
    %1028 = arith.addf %1026, %1027 : vector<2x1xf32>
    %1029 = tpu.concatenate %854, %912, %970, %1028 in 1 : vector<2x1xf32>, vector<2x1xf32>, vector<2x1xf32>, vector<2x1xf32> -> vector<2x4xf32>
    %c0_214 = arith.constant 0 : index
    %c0_215 = arith.constant 0 : index
    %1030 = vector.load %arg19[%c0_214, %c0_215] : memref<2x4xf32, #tpu.memory_space<vmem>>, vector<2x4xf32>
    tpu.vector_store %arg19[%c0_214, %c0_215], %1029 {strides = array<i32>} : memref<2x4xf32, #tpu.memory_space<vmem>>, vector<2x4xf32>,
    return
  }
}

</mosaic_0001>

<llo_original>
// kernel: model_forward.1
$region0: #{model_forward.1}
  #allocation0 [shape = 'u32[]', space=smem, size = 0x4, offset = 0x4, fixed_abs, tag = 'smem constant byte address 0x4 - core index']
  #allocation1 [shape = 'u32[72,128]{1,0:T(1,128)}', space=vmem, size = 0x9000, scoped, tag = 'internal scratch']
  #allocation2 [shape = 'f32[1,1]{1,0:T(1,128)S(1)}', space=vmem, size = 0x200, scoped, tag = 'scoped memory for model_forward.1']
  %s0 = inlined_call_operand.vmem [shape: f32[8,2,8], index: 0, kind: input, shape index: {}]
  %s1 = inlined_call_operand.vmem [shape: f32[2,8], index: 1, kind: input, shape index: {}]
  %s2 = inlined_call_operand.vmem [shape: f32[4,2,8], index: 2, kind: input, shape index: {}]
  %s3 = inlined_call_operand.vmem [shape: f32[2,8,64], index: 3, kind: input, shape index: {}]
  %s4 = inlined_call_operand.vmem [shape: f32[2,16,64], index: 4, kind: input, shape index: {}]
  %s5 = inlined_call_operand.hbm [shape: f32[2,1,64], index: 5, kind: input, shape index: {}]
  %s6 = inlined_call_operand.vmem [shape: f32[2,32,64], index: 6, kind: input, shape index: {}]
  %s7 = inlined_call_operand.vmem [shape: f32[2,16,64], index: 7, kind: input, shape index: {}]
  %s8 = inlined_call_operand.hbm [shape: f32[2,1,64], index: 8, kind: input, shape index: {}]
  %s9 = inlined_call_operand.hbm [shape: f32[8,64], index: 9, kind: input, shape index: {}]
  %s10 = inlined_call_operand.hbm [shape: f32[16,64], index: 10, kind: input, shape index: {}]
  %s11 = inlined_call_operand.hbm [shape: f32[1,64], index: 11, kind: input, shape index: {}]
  %s12 = inlined_call_operand.hbm [shape: f32[16,64], index: 12, kind: input, shape index: {}]
  %s13 = inlined_call_operand.hbm [shape: f32[16,64], index: 13, kind: input, shape index: {}]
  %s14 = inlined_call_operand.hbm [shape: f32[1,64], index: 14, kind: input, shape index: {}]
  %s15 = inlined_call_operand.hbm [shape: f32[16,32], index: 15, kind: input, shape index: {}]
  %s16 = inlined_call_operand.vmem [shape: f32[1,32], index: 16, kind: input, shape index: {}]
  %s17 = inlined_call_operand.vmem [shape: f32[1,32], index: 17, kind: input, shape index: {}]
  %s18 = inlined_call_operand.<no memory space> [shape: f32[1,1], index: 18, kind: input, shape index: {}]
  %s19 = inlined_call_operand.hbm [shape: f32[2,4], index: 19, kind: output, shape index: {}]
  %s20 = sld [smem:[#allocation0]]
  $region122: #{model_forward.1} parent=0
    _
  %s22 = ssub.s32 1, %s20
  %s23 = scalar_select 0, %s22, %s20
  %v24 = vstv %s18
  %25 = vst [vmem:[#allocation2] sm:$0x1] %v24
  $region1: #{model_forward.1} parent=0
    #allocation3 [shape = 'u8[1024]{0}', space=vmem, size = 0x400, scoped, tag = 'input window, operand 5, single buffered']
    #allocation4 [shape = 's32[1]{0}', space=sflag, size = 0x4, scoped, tag = 'scoped memory for model_forward.1']
    #allocation5 [shape = 's32[1]{0}', space=sflag, size = 0x4, scoped, tag = 'scoped memory for model_forward.1']
    #allocation6 [shape = 'u8[1024]{0}', space=vmem, size = 0x400, scoped, tag = 'input window, operand 8, single buffered']
    #allocation7 [shape = 's32[1]{0}', space=sflag, size = 0x4, scoped, tag = 'scoped memory for model_forward.1']
    #allocation8 [shape = 'u8[4096]{0}', space=vmem, size = 0x1000, scoped, tag = 'input window, operand 9, single buffered']
    #allocation9 [shape = 'u8[8192]{0}', space=vmem, size = 0x2000, scoped, tag = 'input window, operand 10, single buffered']
    #allocation10 [shape = 's32[1]{0}', space=sflag, size = 0x4, scoped, tag = 'scoped memory for model_forward.1']
    #allocation11 [shape = 'u8[512]{0}', space=vmem, size = 0x400, scoped, tag = 'input window, operand 11, single buffered']
    #allocation12 [shape = 'u8[8192]{0}', space=vmem, size = 0x2000, scoped, tag = 'input window, operand 12, single buffered']
    #allocation13 [shape = 's32[1]{0}', space=sflag, size = 0x4, scoped, tag = 'scoped memory for model_forward.1']
    #allocation14 [shape = 'u8[8192]{0}', space=vmem, size = 0x2000, scoped, tag = 'input window, operand 13, single buffered']
    #allocation15 [shape = 'u8[512]{0}', space=vmem, size = 0x400, scoped, tag = 'input window, operand 14, single buffered']
    #allocation16 [shape = 's32[1]{0}', space=sflag, size = 0x4, scoped, tag = 'scoped memory for model_forward.1']
    #allocation17 [shape = 'u8[8192]{0}', space=vmem, size = 0x2000, scoped, tag = 'input window, operand 15, single buffered']
    #allocation18 [shape = 'u8[1024]{0}', space=vmem, size = 0x400, scoped, tag = 'output window, operand 0, single buffered']
    %26 = vsyncpa [#allocation4], 0
    %27 = vsyncpa [#allocation7], 0
    %28 = vsyncpa [#allocation10], 0
    %29 = vsyncpa [#allocation13], 0
    %30 = vsyncpa [#allocation16], 0
    %31 = vsyncpa [#allocation5], 0
    // Predicated region
    $region2: #{model_forward.1} parent=1 // pred_check
      _
    $region3: #{model_forward.1} parent=1 // pred_check_branch
      %33 = sbr.rel (0) target = $region5
    $region4: #{model_forward.1} parent=1 // pred_region
      _
    $region5: #{model_forward.1} parent=1 // pred_fallthru
      _
    // Predicated region
    $region6: #{model_forward.1} parent=1 // pred_check
      _
    $region7: #{model_forward.1} parent=1 // pred_check_branch
      %35 = sbr.rel (0) target = $region9
    $region8: #{model_forward.1} parent=1 // pred_region
      _
    $region9: #{model_forward.1} parent=1 // pred_fallthru
      _
    // Predicated region
    $region10: #{model_forward.1} parent=1 // pred_check
      _
    $region11: #{model_forward.1} parent=1 // pred_check_branch
      %37 = sbr.rel (0) target = $region13
    $region12: #{model_forward.1} parent=1 // pred_region
      _
    $region13: #{model_forward.1} parent=1 // pred_fallthru
      _
    // Predicated region
    $region14: #{model_forward.1} parent=1 // pred_check
      _
    $region15: #{model_forward.1} parent=1 // pred_check_branch
      %39 = sbr.rel (0) target = $region17
    $region16: #{model_forward.1} parent=1 // pred_region
      _
    $region17: #{model_forward.1} parent=1 // pred_fallthru
      _
    // Predicated region
    $region18: #{model_forward.1} parent=1 // pred_check
      _
    $region19: #{model_forward.1} parent=1 // pred_check_branch
      %41 = sbr.rel (0) target = $region21
    $region20: #{model_forward.1} parent=1 // pred_region
      _
    $region21: #{model_forward.1} parent=1 // pred_fallthru
      _
    // Predicated region
    $region22: #{model_forward.1} parent=1 // pred_check
      _
    $region23: #{model_forward.1} parent=1 // pred_check_branch
      %43 = sbr.rel (0) target = $region25
    $region24: #{model_forward.1} parent=1 // pred_region
      %45 = vsyncadd [#allocation4], 0
      %s46 = sshll.u32 %s5, 4
      %s47 = int_to_ptr.hbm [resolvable:$true] %s46
      %s48 = sshll.u32 [#allocation3], 4
      %s49 = int_to_ptr.vmem [resolvable:$true] %s48
      %54 = dma.hbm_to_vmem [thread:$0]  %s47, 32, %s49, [#allocation4], 16, 16, 1
    $region25: #{model_forward.1} parent=1 // pred_fallthru
      _
    // Predicated region
    $region26: #{model_forward.1} parent=1 // pred_check
      _
    $region27: #{model_forward.1} parent=1 // pred_check_branch
      %56 = sbr.rel (0) target = $region29
    $region28: #{model_forward.1} parent=1 // pred_region
      _
    $region29: #{model_forward.1} parent=1 // pred_fallthru
      _
    // Predicated region
    $region30: #{model_forward.1} parent=1 // pred_check
      _
    $region31: #{model_forward.1} parent=1 // pred_check_branch
      %58 = sbr.rel (0) target = $region33
    $region32: #{model_forward.1} parent=1 // pred_region
      _
    $region33: #{model_forward.1} parent=1 // pred_fallthru
      _
    // Predicated region
    $region34: #{model_forward.1} parent=1 // pred_check
      _
    $region35: #{model_forward.1} parent=1 // pred_check_branch
      %60 = sbr.rel (0) target = $region37
    $region36: #{model_forward.1} parent=1 // pred_region
      %62 = vsyncadd [#allocation7], 0
      %s63 = sshll.u32 %s8, 4
      %s64 = int_to_ptr.hbm [resolvable:$true] %s63
      %s65 = sshll.u32 [#allocation6], 4
      %s66 = int_to_ptr.vmem [resolvable:$true] %s65
      %71 = dma.hbm_to_vmem [thread:$0]  %s64, 32, %s66, [#allocation7], 16, 16, 1
    $region37: #{model_forward.1} parent=1 // pred_fallthru
      _
    // Predicated region
    $region38: #{model_forward.1} parent=1 // pred_check
      _
    $region39: #{model_forward.1} parent=1 // pred_check_branch
      %73 = sbr.rel (0) target = $region41
    $region40: #{model_forward.1} parent=1 // pred_region
      %75 = vsyncadd [#allocation7], 0
      %s77 = sshll.u32 %s9, 4
      %s78 = int_to_ptr.hbm [resolvable:$true] %s77
      %s79 = sshll.u32 [#allocation8], 4
      %s80 = int_to_ptr.vmem [resolvable:$true] %s79
      %82 = dma.hbm_to_vmem [thread:$0]  %s78, 128, %s80, [#allocation7]
    $region41: #{model_forward.1} parent=1 // pred_fallthru
      _
    // Predicated region
    $region42: #{model_forward.1} parent=1 // pred_check
      _
    $region43: #{model_forward.1} parent=1 // pred_check_branch
      %84 = sbr.rel (0) target = $region45
    $region44: #{model_forward.1} parent=1 // pred_region
      %86 = vsyncadd [#allocation10], 0
      %s87 = sshll.u32 %s10, 4
      %s88 = int_to_ptr.hbm [resolvable:$true] %s87
      %s89 = sshll.u32 [#allocation9], 4
      %s90 = int_to_ptr.vmem [resolvable:$true] %s89
      %95 = dma.hbm_to_vmem [thread:$0]  %s88, 256, %s90, [#allocation10], 128, 128, 8
    $region45: #{model_forward.1} parent=1 // pred_fallthru
      _
    // Predicated region
    $region46: #{model_forward.1} parent=1 // pred_check
      _
    $region47: #{model_forward.1} parent=1 // pred_check_branch
      %97 = sbr.rel (0) target = $region49
    $region48: #{model_forward.1} parent=1 // pred_region
      %99 = vsyncadd [#allocation10], 0
      %s101 = sshll.u32 %s11, 4
      %s102 = int_to_ptr.hbm [resolvable:$true] %s101
      %s103 = sshll.u32 [#allocation11], 4
      %s104 = int_to_ptr.vmem [resolvable:$true] %s103
      %106 = dma.hbm_to_vmem [thread:$0]  %s102, 16, %s104, [#allocation10]
    $region49: #{model_forward.1} parent=1 // pred_fallthru
      _
    // Predicated region
    $region50: #{model_forward.1} parent=1 // pred_check
      _
    $region51: #{model_forward.1} parent=1 // pred_check_branch
      %108 = sbr.rel (0) target = $region53
    $region52: #{model_forward.1} parent=1 // pred_region
      %110 = vsyncadd [#allocation13], 0
      %s111 = sshll.u32 %s12, 4
      %s112 = int_to_ptr.hbm [resolvable:$true] %s111
      %s113 = sshll.u32 [#allocation12], 4
      %s114 = int_to_ptr.vmem [resolvable:$true] %s113
      %119 = dma.hbm_to_vmem [thread:$0]  %s112, 256, %s114, [#allocation13], 128, 128, 8
    $region53: #{model_forward.1} parent=1 // pred_fallthru
      _
    // Predicated region
    $region54: #{model_forward.1} parent=1 // pred_check
      _
    $region55: #{model_forward.1} parent=1 // pred_check_branch
      %121 = sbr.rel (0) target = $region57
    $region56: #{model_forward.1} parent=1 // pred_region
      %123 = vsyncadd [#allocation13], 0
      %s124 = sshll.u32 %s13, 4
      %s125 = int_to_ptr.hbm [resolvable:$true] %s124
      %s126 = sshll.u32 [#allocation14], 4
      %s127 = int_to_ptr.vmem [resolvable:$true] %s126
      %132 = dma.hbm_to_vmem [thread:$0]  %s125, 256, %s127, [#allocation13], 128, 128, 8
    $region57: #{model_forward.1} parent=1 // pred_fallthru
      _
    // Predicated region
    $region58: #{model_forward.1} parent=1 // pred_check
      _
    $region59: #{model_forward.1} parent=1 // pred_check_branch
      %134 = sbr.rel (0) target = $region61
    $region60: #{model_forward.1} parent=1 // pred_region
      %136 = vsyncadd [#allocation16], 0
      %s138 = sshll.u32 %s14, 4
      %s139 = int_to_ptr.hbm [resolvable:$true] %s138
      %s140 = sshll.u32 [#allocation15], 4
      %s141 = int_to_ptr.vmem [resolvable:$true] %s140
      %143 = dma.hbm_to_vmem [thread:$0]  %s139, 16, %s141, [#allocation16]
    $region61: #{model_forward.1} parent=1 // pred_fallthru
      _
    // Predicated region
    $region62: #{model_forward.1} parent=1 // pred_check
      _
    $region63: #{model_forward.1} parent=1 // pred_check_branch
      %145 = sbr.rel (0) target = $region65
    $region64: #{model_forward.1} parent=1 // pred_region
      %147 = vsyncadd [#allocation16], 0
      %s148 = sshll.u32 %s15, 4
      %s149 = int_to_ptr.hbm [resolvable:$true] %s148
      %s150 = sshll.u32 [#allocation17], 4
      %s151 = int_to_ptr.vmem [resolvable:$true] %s150
      %156 = dma.hbm_to_vmem [thread:$0]  %s149, 256, %s151, [#allocation16], 128, 128, 8
    $region65: #{model_forward.1} parent=1 // pred_fallthru
      _
    // Predicated region
    $region66: #{model_forward.1} parent=1 // pred_check
      _
    $region67: #{model_forward.1} parent=1 // pred_check_branch
      %158 = sbr.rel (0) target = $region69
    $region68: #{model_forward.1} parent=1 // pred_region
      _
    $region69: #{model_forward.1} parent=1 // pred_fallthru
      _
    // Predicated region
    $region70: #{model_forward.1} parent=1 // pred_check
      _
    $region71: #{model_forward.1} parent=1 // pred_check_branch
      %160 = sbr.rel (0) target = $region73
    $region72: #{model_forward.1} parent=1 // pred_region
      _
    $region73: #{model_forward.1} parent=1 // pred_fallthru
      _
    // Predicated region
    $region74: #{model_forward.1} parent=1 // pred_check
      _
    $region75: #{model_forward.1} parent=1 // pred_check_branch
      %162 = sbr.rel (0) target = $region77
    $region76: #{model_forward.1} parent=1 // pred_region
      _
    $region77: #{model_forward.1} parent=1 // pred_fallthru
      _
    // Predicated region
    $region78: #{model_forward.1} parent=1 // pred_check
      _
    $region79: #{model_forward.1} parent=1 // pred_check_branch
      %164 = sbr.rel (0) target = $region81
    $region80: #{model_forward.1} parent=1 // pred_region
      %166 = dma.done [#allocation4], 32
    $region81: #{model_forward.1} parent=1 // pred_fallthru
      _
    // Predicated region
    $region82: #{model_forward.1} parent=1 // pred_check
      _
    $region83: #{model_forward.1} parent=1 // pred_check_branch
      %168 = sbr.rel (0) target = $region85
    $region84: #{model_forward.1} parent=1 // pred_region
      %170 = dma.done [#allocation7], 32
    $region85: #{model_forward.1} parent=1 // pred_fallthru
      _
    // Predicated region
    $region86: #{model_forward.1} parent=1 // pred_check
      _
    $region87: #{model_forward.1} parent=1 // pred_check_branch
      %172 = sbr.rel (0) target = $region89
    $region88: #{model_forward.1} parent=1 // pred_region
      %174 = dma.done [#allocation7], 128
    $region89: #{model_forward.1} parent=1 // pred_fallthru
      _
    // Predicated region
    $region90: #{model_forward.1} parent=1 // pred_check
      _
    $region91: #{model_forward.1} parent=1 // pred_check_branch
      %176 = sbr.rel (0) target = $region93
    $region92: #{model_forward.1} parent=1 // pred_region
      %178 = dma.done [#allocation10], 256
    $region93: #{model_forward.1} parent=1 // pred_fallthru
      _
    // Predicated region
    $region94: #{model_forward.1} parent=1 // pred_check
      _
    $region95: #{model_forward.1} parent=1 // pred_check_branch
      %180 = sbr.rel (0) target = $region97
    $region96: #{model_forward.1} parent=1 // pred_region
      %182 = dma.done [#allocation10], 16
    $region97: #{model_forward.1} parent=1 // pred_fallthru
      _
    // Predicated region
    $region98: #{model_forward.1} parent=1 // pred_check
      _
    $region99: #{model_forward.1} parent=1 // pred_check_branch
      %184 = sbr.rel (0) target = $region101
    $region100: #{model_forward.1} parent=1 // pred_region
      %186 = dma.done [#allocation13], 256
    $region101: #{model_forward.1} parent=1 // pred_fallthru
      _
    // Predicated region
    $region102: #{model_forward.1} parent=1 // pred_check
      _
    $region103: #{model_forward.1} parent=1 // pred_check_branch
      %188 = sbr.rel (0) target = $region105
    $region104: #{model_forward.1} parent=1 // pred_region
      %190 = dma.done [#allocation13], 256
    $region105: #{model_forward.1} parent=1 // pred_fallthru
      _
    // Predicated region
    $region106: #{model_forward.1} parent=1 // pred_check
      _
    $region107: #{model_forward.1} parent=1 // pred_check_branch
      %192 = sbr.rel (0) target = $region109
    $region108: #{model_forward.1} parent=1 // pred_region
      %194 = dma.done [#allocation16], 16
    $region109: #{model_forward.1} parent=1 // pred_fallthru
      _
    // Predicated region
    $region110: #{model_forward.1} parent=1 // pred_check
      _
    $region111: #{model_forward.1} parent=1 // pred_check_branch
      %196 = sbr.rel (0) target = $region113
    $region112: #{model_forward.1} parent=1 // pred_region
      %198 = dma.done [#allocation16], 256
    $region113: #{model_forward.1} parent=1 // pred_fallthru
      _
    %v199 = vld [vmem:[%s0] sm:$0x3]
    %s200 = scalar_lea.vmem %s0, 2
    %v201 = vld [vmem:[%s200] sm:$0x3]
    %s202 = scalar_lea.vmem %s0, 4
    %v203 = vld [vmem:[%s202] sm:$0x3]
    %s204 = scalar_lea.vmem %s0, 6
    %v205 = vld [vmem:[%s204] sm:$0x3]
    %s206 = scalar_lea.vmem %s0, 8
    %v207 = vld [vmem:[%s206] sm:$0x3]
    %s208 = scalar_lea.vmem %s0, 10
    %v209 = vld [vmem:[%s208] sm:$0x3]
    %s210 = scalar_lea.vmem %s0, 12
    %v211 = vld [vmem:[%s210] sm:$0x3]
    %s212 = scalar_lea.vmem %s0, 14
    %v213 = vld [vmem:[%s212] sm:$0x3]
    %v214 = vld [vmem:[%s3] sm:$0xff]
    %v215 = vld [vmem:[%s3 + $0x8] sm:$0xff]
    %v216 = vld [vmem:[%s4] sm:$0xff]
    %v217 = vld [vmem:[%s4 + $0x8] sm:$0xff]
    %v218 = vld [vmem:[%s4 + $0x10] sm:$0xff]
    %v219 = vld [vmem:[%s4 + $0x18] sm:$0xff]
    %v220 = vld [vmem:[#allocation3] sm:$0x1]
    %v221 = vld [vmem:[#allocation3 + $0x1] sm:$0x1]
    %vm222 = vcmask 130048
    %v224 = vsel %vm222, 0.0, 0
    %226 = vmatpush.msra.mxu0 0.0
    %227 = vmatpush.msra.mxu0 0.0
    %228 = vmatpush.msra.mxu0 0.0
    %229 = vmatpush.msra.mxu0 0.0
    %230 = vmatpush.msra.mxu0 0.0
    %231 = vmatpush.msra.mxu0 0.0
    %232 = vmatpush.msra.mxu0 0.0
    %233 = vmatpush.msra.mxu0 0.0
    %234 = vmatpush.msra.mxu0 0.0
    %235 = vmatpush.msra.mxu0 0.0
    %236 = vmatpush.msra.mxu0 0.0
    %237 = vmatpush.msra.mxu0 0.0
    %238 = vmatpush.msra.mxu0 0.0
    %239 = vmatpush.msra.mxu0 0.0
    %240 = vmatpush.msra.mxu0 %v217
    %241 = vmatpush.msra.mxu0 %v216
    %242 = vmatmul.f32.gmra.mxu0 %v224
    %v243 = vpop.f32.mrf.mxu0
    %v244 = vadd.f32 0.0, %v243
    %245 = vdwg.mxu0
    %vm246 = vcmask 64512
    %v248 = vsel %vm246, %v199, 0
    %250 = vmatpush.msra.mxu0 0.0
    %251 = vmatpush.msra.mxu0 0.0
    %252 = vmatpush.msra.mxu0 0.0
    %253 = vmatpush.msra.mxu0 0.0
    %254 = vmatpush.msra.mxu0 0.0
    %255 = vmatpush.msra.mxu0 0.0
    %256 = vmatpush.msra.mxu0 0.0
    %257 = vmatpush.msra.mxu0 0.0
    %258 = vmatpush.msra.mxu0 0.0
    %259 = vmatpush.msra.mxu0 0.0
    %260 = vmatpush.msra.mxu0 0.0
    %261 = vmatpush.msra.mxu0 0.0
    %262 = vmatpush.msra.mxu0 0.0
    %263 = vmatpush.msra.mxu0 0.0
    %264 = vmatpush.msra.mxu0 0.0
    %265 = vmatpush.msra.mxu0 %v214
    %266 = vmatmul.f32.gmra.mxu0 %v248
    %v267 = vpop.f32.mrf.mxu0
    %v268 = vadd.f32 %v244, %v267
    %269 = vdwg.mxu0
    %v271 = vperm.slane %v220, 0
    %v273 = vadd.f32 %v268, %v271
    %v274 = vxor.u32 %v273, 2147483648
    %v275 = vmul.f32 %v274, 1.442695
    %v276 = vpow.pop %v275
    %v277 = vadd.f32 %v276, 1.0
    %v278 = vrcp.pop %v277
    %v279 = vmul.f32 %v277, %v278
    %v280 = vsub.f32 1.0, %v279
    %v281 = vmul.f32 %v278, %v280
    %v282 = vadd.f32 %v278, %v281
    %vm283 = vweird.f32 %v277
    %vm284 = vweird.f32 %v278
    %vm285 = vmor %vm283, %vm284
    %v286 = vsel %vm285, %v278, %v282
    %v287 = vand.u32 2147483647, %v277
    %vm288 = vcmp.eq.f32.partialorder %v287, 8.507059e+37
    %v289 = vand.u32 %v277, 2147483648
    %v290 = vor.u32 1.1754944e-38, %v289
    %v291 = vsel %vm288, %v290, %v286
    %v292 = vmul.f32 1.0, %v291
    %v293 = vtanh.pop %v273
    %v294 = vmul.f32 %v292, 0.0
    %296 = vrot.lane.b32.xlu0 %v293, 80
    %v297 = vpop.permute.xlu0 %296
    %v299 = vmul.f32 %v292, %v297
    %301 = vrot.lane.b32.xlu0 %v299, 16
    %v302 = vpop.permute.xlu0 %301
    %v304 = vadd.f32 %v294, %v302
    %v305 = vtanh.pop %v304
    %307 = vrot.lane.b32.xlu0 %v305, 16
    %v308 = vpop.permute.xlu0 %307
    %v310 = vmul.f32 %v292, %v308
    %311 = vmatpush.msra.mxu0 0.0
    %312 = vmatpush.msra.mxu0 0.0
    %313 = vmatpush.msra.mxu0 0.0
    %314 = vmatpush.msra.mxu0 0.0
    %315 = vmatpush.msra.mxu0 0.0
    %316 = vmatpush.msra.mxu0 0.0
    %317 = vmatpush.msra.mxu0 0.0
    %318 = vmatpush.msra.mxu0 0.0
    %319 = vmatpush.msra.mxu0 0.0
    %320 = vmatpush.msra.mxu0 0.0
    %321 = vmatpush.msra.mxu0 0.0
    %322 = vmatpush.msra.mxu0 0.0
    %323 = vmatpush.msra.mxu0 0.0
    %324 = vmatpush.msra.mxu0 0.0
    %325 = vmatpush.msra.mxu0 %v219
    %326 = vmatpush.msra.mxu0 %v218
    %327 = vmatmul.f32.gmra.mxu0 %v224
    %v328 = vpop.f32.mrf.mxu0
    %v329 = vadd.f32 0.0, %v328
    %330 = vdwg.mxu0
    %v332 = vsel %vm246, %v213, 0
    %334 = vmatpush.msra.mxu0 0.0
    %335 = vmatpush.msra.mxu0 0.0
    %336 = vmatpush.msra.mxu0 0.0
    %337 = vmatpush.msra.mxu0 0.0
    %338 = vmatpush.msra.mxu0 0.0
    %339 = vmatpush.msra.mxu0 0.0
    %340 = vmatpush.msra.mxu0 0.0
    %341 = vmatpush.msra.mxu0 0.0
    %342 = vmatpush.msra.mxu0 0.0
    %343 = vmatpush.msra.mxu0 0.0
    %344 = vmatpush.msra.mxu0 0.0
    %345 = vmatpush.msra.mxu0 0.0
    %346 = vmatpush.msra.mxu0 0.0
    %347 = vmatpush.msra.mxu0 0.0
    %348 = vmatpush.msra.mxu0 0.0
    %349 = vmatpush.msra.mxu0 %v215
    %350 = vmatmul.f32.gmra.mxu0 %v332
    %v351 = vpop.f32.mrf.mxu0
    %v352 = vadd.f32 %v329, %v351
    %353 = vdwg.mxu0
    %v355 = vperm.slane %v221, 0
    %v357 = vadd.f32 %v352, %v355
    %v358 = vxor.u32 %v357, 2147483648
    %v359 = vmul.f32 %v358, 1.442695
    %v360 = vpow.pop %v359
    %v361 = vadd.f32 %v360, 1.0
    %v362 = vrcp.pop %v361
    %v363 = vmul.f32 %v361, %v362
    %v364 = vsub.f32 1.0, %v363
    %v365 = vmul.f32 %v362, %v364
    %v366 = vadd.f32 %v362, %v365
    %vm367 = vweird.f32 %v361
    %vm368 = vweird.f32 %v362
    %vm369 = vmor %vm367, %vm368
    %v370 = vsel %vm369, %v362, %v366
    %v371 = vand.u32 2147483647, %v361
    %vm372 = vcmp.eq.f32.partialorder %v371, 8.507059e+37
    %v373 = vand.u32 %v361, 2147483648
    %v374 = vor.u32 1.1754944e-38, %v373
    %v375 = vsel %vm372, %v374, %v370
    %v376 = vmul.f32 1.0, %v375
    %v377 = vtanh.pop %v357
    %v378 = vmul.f32 %v376, 0.0
    %380 = vrot.lane.b32.xlu0 %v377, 80
    %v381 = vpop.permute.xlu0 %380
    %v383 = vmul.f32 %v376, %v381
    %385 = vrot.lane.b32.xlu0 %v383, 16
    %v386 = vpop.permute.xlu0 %385
    %v388 = vadd.f32 %v378, %v386
    %v389 = vtanh.pop %v388
    %391 = vrot.lane.b32.xlu0 %v389, 16
    %v392 = vpop.permute.xlu0 %391
    %v394 = vmul.f32 %v376, %v392
    %396 = vrot.lane.b32.xlu0 %v310, 96
    %v397 = vpop.permute.xlu0 %396
    %v398 = vsel %vm222, %v397, 0
    %400 = vmatpush.msra.mxu0 0.0
    %401 = vmatpush.msra.mxu0 0.0
    %402 = vmatpush.msra.mxu0 0.0
    %403 = vmatpush.msra.mxu0 0.0
    %404 = vmatpush.msra.mxu0 0.0
    %405 = vmatpush.msra.mxu0 0.0
    %406 = vmatpush.msra.mxu0 0.0
    %407 = vmatpush.msra.mxu0 0.0
    %408 = vmatpush.msra.mxu0 0.0
    %409 = vmatpush.msra.mxu0 0.0
    %410 = vmatpush.msra.mxu0 0.0
    %411 = vmatpush.msra.mxu0 0.0
    %412 = vmatpush.msra.mxu0 0.0
    %413 = vmatpush.msra.mxu0 0.0
    %414 = vmatpush.msra.mxu0 %v217
    %415 = vmatpush.msra.mxu0 %v216
    %416 = vmatmul.f32.gmra.mxu0 %v398
    %v417 = vpop.f32.mrf.mxu0
    %v418 = vadd.f32 0.0, %v417
    %419 = vdwg.mxu0
    %v421 = vsel %vm246, %v201, 0
    %423 = vmatpush.msra.mxu0 0.0
    %424 = vmatpush.msra.mxu0 0.0
    %425 = vmatpush.msra.mxu0 0.0
    %426 = vmatpush.msra.mxu0 0.0
    %427 = vmatpush.msra.mxu0 0.0
    %428 = vmatpush.msra.mxu0 0.0
    %429 = vmatpush.msra.mxu0 0.0
    %430 = vmatpush.msra.mxu0 0.0
    %431 = vmatpush.msra.mxu0 0.0
    %432 = vmatpush.msra.mxu0 0.0
    %433 = vmatpush.msra.mxu0 0.0
    %434 = vmatpush.msra.mxu0 0.0
    %435 = vmatpush.msra.mxu0 0.0
    %436 = vmatpush.msra.mxu0 0.0
    %437 = vmatpush.msra.mxu0 0.0
    %438 = vmatpush.msra.mxu0 %v214
    %439 = vmatmul.f32.gmra.mxu0 %v421
    %v440 = vpop.f32.mrf.mxu0
    %v441 = vadd.f32 %v418, %v440
    %442 = vdwg.mxu0
    %v443 = vadd.f32 %v441, %v271
    %v444 = vxor.u32 %v443, 2147483648
    %v445 = vmul.f32 %v444, 1.442695
    %v446 = vpow.pop %v445
    %v447 = vadd.f32 %v446, 1.0
    %v448 = vrcp.pop %v447
    %v449 = vmul.f32 %v447, %v448
    %v450 = vsub.f32 1.0, %v449
    %v451 = vmul.f32 %v448, %v450
    %v452 = vadd.f32 %v448, %v451
    %vm453 = vweird.f32 %v447
    %vm454 = vweird.f32 %v448
    %vm455 = vmor %vm453, %vm454
    %v456 = vsel %vm455, %v448, %v452
    %v457 = vand.u32 2147483647, %v447
    %vm458 = vcmp.eq.f32.partialorder %v457, 8.507059e+37
    %v459 = vand.u32 %v447, 2147483648
    %v460 = vor.u32 1.1754944e-38, %v459
    %v461 = vsel %vm458, %v460, %v456
    %v462 = vmul.f32 1.0, %v461
    %v463 = vtanh.pop %v443
    %v464 = vmul.f32 %v462, %v304
    %466 = vrot.lane.b32.xlu0 %v463, 80
    %v467 = vpop.permute.xlu0 %466
    %v469 = vmul.f32 %v462, %v467
    %471 = vrot.lane.b32.xlu0 %v469, 16
    %v472 = vpop.permute.xlu0 %471
    %v474 = vadd.f32 %v464, %v472
    %v475 = vtanh.pop %v474
    %477 = vrot.lane.b32.xlu0 %v475, 16
    %v478 = vpop.permute.xlu0 %477
    %v480 = vmul.f32 %v462, %v478
    %482 = vrot.lane.b32.xlu0 %v394, 96
    %v483 = vpop.permute.xlu0 %482
    %v484 = vsel %vm222, %v483, 0
    %486 = vmatpush.msra.mxu0 0.0
    %487 = vmatpush.msra.mxu0 0.0
    %488 = vmatpush.msra.mxu0 0.0
    %489 = vmatpush.msra.mxu0 0.0
    %490 = vmatpush.msra.mxu0 0.0
    %491 = vmatpush.msra.mxu0 0.0
    %492 = vmatpush.msra.mxu0 0.0
    %493 = vmatpush.msra.mxu0 0.0
    %494 = vmatpush.msra.mxu0 0.0
    %495 = vmatpush.msra.mxu0 0.0
    %496 = vmatpush.msra.mxu0 0.0
    %497 = vmatpush.msra.mxu0 0.0
    %498 = vmatpush.msra.mxu0 0.0
    %499 = vmatpush.msra.mxu0 0.0
    %500 = vmatpush.msra.mxu0 %v219
    %501 = vmatpush.msra.mxu0 %v218
    %502 = vmatmul.f32.gmra.mxu0 %v484
    %v503 = vpop.f32.mrf.mxu0
    %v504 = vadd.f32 0.0, %v503
    %505 = vdwg.mxu0
    %v507 = vsel %vm246, %v211, 0
    %509 = vmatpush.msra.mxu0 0.0
    %510 = vmatpush.msra.mxu0 0.0
    %511 = vmatpush.msra.mxu0 0.0
    %512 = vmatpush.msra.mxu0 0.0
    %513 = vmatpush.msra.mxu0 0.0
    %514 = vmatpush.msra.mxu0 0.0
    %515 = vmatpush.msra.mxu0 0.0
    %516 = vmatpush.msra.mxu0 0.0
    %517 = vmatpush.msra.mxu0 0.0
    %518 = vmatpush.msra.mxu0 0.0
    %519 = vmatpush.msra.mxu0 0.0
    %520 = vmatpush.msra.mxu0 0.0
    %521 = vmatpush.msra.mxu0 0.0
    %522 = vmatpush.msra.mxu0 0.0
    %523 = vmatpush.msra.mxu0 0.0
    %524 = vmatpush.msra.mxu0 %v215
    %525 = vmatmul.f32.gmra.mxu0 %v507
    %v526 = vpop.f32.mrf.mxu0
    %v527 = vadd.f32 %v504, %v526
    %528 = vdwg.mxu0
    %v529 = vadd.f32 %v527, %v355
    %v530 = vxor.u32 %v529, 2147483648
    %v531 = vmul.f32 %v530, 1.442695
    %v532 = vpow.pop %v531
    %v533 = vadd.f32 %v532, 1.0
    %v534 = vrcp.pop %v533
    %v535 = vmul.f32 %v533, %v534
    %v536 = vsub.f32 1.0, %v535
    %v537 = vmul.f32 %v534, %v536
    %v538 = vadd.f32 %v534, %v537
    %vm539 = vweird.f32 %v533
    %vm540 = vweird.f32 %v534
    %vm541 = vmor %vm539, %vm540
    %v542 = vsel %vm541, %v534, %v538
    %v543 = vand.u32 2147483647, %v533
    %vm544 = vcmp.eq.f32.partialorder %v543, 8.507059e+37
    %v545 = vand.u32 %v533, 2147483648
    %v546 = vor.u32 1.1754944e-38, %v545
    %v547 = vsel %vm544, %v546, %v542
    %v548 = vmul.f32 1.0, %v547
    %v549 = vtanh.pop %v529
    %v550 = vmul.f32 %v548, %v388
    %552 = vrot.lane.b32.xlu0 %v549, 80
    %v553 = vpop.permute.xlu0 %552
    %v555 = vmul.f32 %v548, %v553
    %557 = vrot.lane.b32.xlu0 %v555, 16
    %v558 = vpop.permute.xlu0 %557
    %v560 = vadd.f32 %v550, %v558
    %v561 = vtanh.pop %v560
    %563 = vrot.lane.b32.xlu0 %v561, 16
    %v564 = vpop.permute.xlu0 %563
    %v566 = vmul.f32 %v548, %v564
    %568 = vrot.lane.b32.xlu0 %v480, 96
    %v569 = vpop.permute.xlu0 %568
    %v570 = vsel %vm222, %v569, 0
    %572 = vmatpush.msra.mxu0 0.0
    %573 = vmatpush.msra.mxu0 0.0
    %574 = vmatpush.msra.mxu0 0.0
    %575 = vmatpush.msra.mxu0 0.0
    %576 = vmatpush.msra.mxu0 0.0
    %577 = vmatpush.msra.mxu0 0.0
    %578 = vmatpush.msra.mxu0 0.0
    %579 = vmatpush.msra.mxu0 0.0
    %580 = vmatpush.msra.mxu0 0.0
    %581 = vmatpush.msra.mxu0 0.0
    %582 = vmatpush.msra.mxu0 0.0
    %583 = vmatpush.msra.mxu0 0.0
    %584 = vmatpush.msra.mxu0 0.0
    %585 = vmatpush.msra.mxu0 0.0
    %586 = vmatpush.msra.mxu0 %v217
    %587 = vmatpush.msra.mxu0 %v216
    %588 = vmatmul.f32.gmra.mxu0 %v570
    %v589 = vpop.f32.mrf.mxu0
    %v590 = vadd.f32 0.0, %v589
    %591 = vdwg.mxu0
    %v593 = vsel %vm246, %v203, 0
    %595 = vmatpush.msra.mxu0 0.0
    %596 = vmatpush.msra.mxu0 0.0
    %597 = vmatpush.msra.mxu0 0.0
    %598 = vmatpush.msra.mxu0 0.0
    %599 = vmatpush.msra.mxu0 0.0
    %600 = vmatpush.msra.mxu0 0.0
    %601 = vmatpush.msra.mxu0 0.0
    %602 = vmatpush.msra.mxu0 0.0
    %603 = vmatpush.msra.mxu0 0.0
    %604 = vmatpush.msra.mxu0 0.0
    %605 = vmatpush.msra.mxu0 0.0
    %606 = vmatpush.msra.mxu0 0.0
    %607 = vmatpush.msra.mxu0 0.0
    %608 = vmatpush.msra.mxu0 0.0
    %609 = vmatpush.msra.mxu0 0.0
    %610 = vmatpush.msra.mxu0 %v214
    %611 = vmatmul.f32.gmra.mxu0 %v593
    %v612 = vpop.f32.mrf.mxu0
    %v613 = vadd.f32 %v590, %v612
    %614 = vdwg.mxu0
    %v615 = vadd.f32 %v613, %v271
    %v616 = vxor.u32 %v615, 2147483648
    %v617 = vmul.f32 %v616, 1.442695
    %v618 = vpow.pop %v617
    %v619 = vadd.f32 %v618, 1.0
    %v620 = vrcp.pop %v619
    %v621 = vmul.f32 %v619, %v620
    %v622 = vsub.f32 1.0, %v621
    %v623 = vmul.f32 %v620, %v622
    %v624 = vadd.f32 %v620, %v623
    %vm625 = vweird.f32 %v619
    %vm626 = vweird.f32 %v620
    %vm627 = vmor %vm625, %vm626
    %v628 = vsel %vm627, %v620, %v624
    %v629 = vand.u32 2147483647, %v619
    %vm630 = vcmp.eq.f32.partialorder %v629, 8.507059e+37
    %v631 = vand.u32 %v619, 2147483648
    %v632 = vor.u32 1.1754944e-38, %v631
    %v633 = vsel %vm630, %v632, %v628
    %v634 = vmul.f32 1.0, %v633
    %v635 = vtanh.pop %v615
    %v636 = vmul.f32 %v634, %v474
    %638 = vrot.lane.b32.xlu0 %v635, 80
    %v639 = vpop.permute.xlu0 %638
    %v641 = vmul.f32 %v634, %v639
    %643 = vrot.lane.b32.xlu0 %v641, 16
    %v644 = vpop.permute.xlu0 %643
    %v646 = vadd.f32 %v636, %v644
    %v647 = vtanh.pop %v646
    %649 = vrot.lane.b32.xlu0 %v647, 16
    %v650 = vpop.permute.xlu0 %649
    %v652 = vmul.f32 %v634, %v650
    %654 = vrot.lane.b32.xlu0 %v566, 96
    %v655 = vpop.permute.xlu0 %654
    %v656 = vsel %vm222, %v655, 0
    %658 = vmatpush.msra.mxu0 0.0
    %659 = vmatpush.msra.mxu0 0.0
    %660 = vmatpush.msra.mxu0 0.0
    %661 = vmatpush.msra.mxu0 0.0
    %662 = vmatpush.msra.mxu0 0.0
    %663 = vmatpush.msra.mxu0 0.0
    %664 = vmatpush.msra.mxu0 0.0
    %665 = vmatpush.msra.mxu0 0.0
    %666 = vmatpush.msra.mxu0 0.0
    %667 = vmatpush.msra.mxu0 0.0
    %668 = vmatpush.msra.mxu0 0.0
    %669 = vmatpush.msra.mxu0 0.0
    %670 = vmatpush.msra.mxu0 0.0
    %671 = vmatpush.msra.mxu0 0.0
    %672 = vmatpush.msra.mxu0 %v219
    %673 = vmatpush.msra.mxu0 %v218
    %674 = vmatmul.f32.gmra.mxu0 %v656
    %v675 = vpop.f32.mrf.mxu0
    %v676 = vadd.f32 0.0, %v675
    %677 = vdwg.mxu0
    %v679 = vsel %vm246, %v209, 0
    %681 = vmatpush.msra.mxu0 0.0
    %682 = vmatpush.msra.mxu0 0.0
    %683 = vmatpush.msra.mxu0 0.0
    %684 = vmatpush.msra.mxu0 0.0
    %685 = vmatpush.msra.mxu0 0.0
    %686 = vmatpush.msra.mxu0 0.0
    %687 = vmatpush.msra.mxu0 0.0
    %688 = vmatpush.msra.mxu0 0.0
    %689 = vmatpush.msra.mxu0 0.0
    %690 = vmatpush.msra.mxu0 0.0
    %691 = vmatpush.msra.mxu0 0.0
    %692 = vmatpush.msra.mxu0 0.0
    %693 = vmatpush.msra.mxu0 0.0
    %694 = vmatpush.msra.mxu0 0.0
    %695 = vmatpush.msra.mxu0 0.0
    %696 = vmatpush.msra.mxu0 %v215
    %697 = vmatmul.f32.gmra.mxu0 %v679
    %v698 = vpop.f32.mrf.mxu0
    %v699 = vadd.f32 %v676, %v698
    %700 = vdwg.mxu0
    %v701 = vadd.f32 %v699, %v355
    %v702 = vxor.u32 %v701, 2147483648
    %v703 = vmul.f32 %v702, 1.442695
    %v704 = vpow.pop %v703
    %v705 = vadd.f32 %v704, 1.0
    %v706 = vrcp.pop %v705
    %v707 = vmul.f32 %v705, %v706
    %v708 = vsub.f32 1.0, %v707
    %v709 = vmul.f32 %v706, %v708
    %v710 = vadd.f32 %v706, %v709
    %vm711 = vweird.f32 %v705
    %vm712 = vweird.f32 %v706
    %vm713 = vmor %vm711, %vm712
    %v714 = vsel %vm713, %v706, %v710
    %v715 = vand.u32 2147483647, %v705
    %vm716 = vcmp.eq.f32.partialorder %v715, 8.507059e+37
    %v717 = vand.u32 %v705, 2147483648
    %v718 = vor.u32 1.1754944e-38, %v717
    %v719 = vsel %vm716, %v718, %v714
    %v720 = vmul.f32 1.0, %v719
    %v721 = vtanh.pop %v701
    %v722 = vmul.f32 %v720, %v560
    %724 = vrot.lane.b32.xlu0 %v721, 80
    %v725 = vpop.permute.xlu0 %724
    %v727 = vmul.f32 %v720, %v725
    %729 = vrot.lane.b32.xlu0 %v727, 16
    %v730 = vpop.permute.xlu0 %729
    %v732 = vadd.f32 %v722, %v730
    %v733 = vtanh.pop %v732
    %735 = vrot.lane.b32.xlu0 %v733, 16
    %v736 = vpop.permute.xlu0 %735
    %v738 = vmul.f32 %v720, %v736
    %740 = vrot.lane.b32.xlu0 %v652, 96
    %v741 = vpop.permute.xlu0 %740
    %v742 = vsel %vm222, %v741, 0
    %744 = vmatpush.msra.mxu0 0.0
    %745 = vmatpush.msra.mxu0 0.0
    %746 = vmatpush.msra.mxu0 0.0
    %747 = vmatpush.msra.mxu0 0.0
    %748 = vmatpush.msra.mxu0 0.0
    %749 = vmatpush.msra.mxu0 0.0
    %750 = vmatpush.msra.mxu0 0.0
    %751 = vmatpush.msra.mxu0 0.0
    %752 = vmatpush.msra.mxu0 0.0
    %753 = vmatpush.msra.mxu0 0.0
    %754 = vmatpush.msra.mxu0 0.0
    %755 = vmatpush.msra.mxu0 0.0
    %756 = vmatpush.msra.mxu0 0.0
    %757 = vmatpush.msra.mxu0 0.0
    %758 = vmatpush.msra.mxu0 %v217
    %759 = vmatpush.msra.mxu0 %v216
    %760 = vmatmul.f32.gmra.mxu0 %v742
    %v761 = vpop.f32.mrf.mxu0
    %v762 = vadd.f32 0.0, %v761
    %763 = vdwg.mxu0
    %v765 = vsel %vm246, %v205, 0
    %767 = vmatpush.msra.mxu0 0.0
    %768 = vmatpush.msra.mxu0 0.0
    %769 = vmatpush.msra.mxu0 0.0
    %770 = vmatpush.msra.mxu0 0.0
    %771 = vmatpush.msra.mxu0 0.0
    %772 = vmatpush.msra.mxu0 0.0
    %773 = vmatpush.msra.mxu0 0.0
    %774 = vmatpush.msra.mxu0 0.0
    %775 = vmatpush.msra.mxu0 0.0
    %776 = vmatpush.msra.mxu0 0.0
    %777 = vmatpush.msra.mxu0 0.0
    %778 = vmatpush.msra.mxu0 0.0
    %779 = vmatpush.msra.mxu0 0.0
    %780 = vmatpush.msra.mxu0 0.0
    %781 = vmatpush.msra.mxu0 0.0
    %782 = vmatpush.msra.mxu0 %v214
    %783 = vmatmul.f32.gmra.mxu0 %v765
    %v784 = vpop.f32.mrf.mxu0
    %v785 = vadd.f32 %v762, %v784
    %786 = vdwg.mxu0
    %v787 = vadd.f32 %v785, %v271
    %v788 = vxor.u32 %v787, 2147483648
    %v789 = vmul.f32 %v788, 1.442695
    %v790 = vpow.pop %v789
    %v791 = vadd.f32 %v790, 1.0
    %v792 = vrcp.pop %v791
    %v793 = vmul.f32 %v791, %v792
    %v794 = vsub.f32 1.0, %v793
    %v795 = vmul.f32 %v792, %v794
    %v796 = vadd.f32 %v792, %v795
    %vm797 = vweird.f32 %v791
    %vm798 = vweird.f32 %v792
    %vm799 = vmor %vm797, %vm798
    %v800 = vsel %vm799, %v792, %v796
    %v801 = vand.u32 2147483647, %v791
    %vm802 = vcmp.eq.f32.partialorder %v801, 8.507059e+37
    %v803 = vand.u32 %v791, 2147483648
    %v804 = vor.u32 1.1754944e-38, %v803
    %v805 = vsel %vm802, %v804, %v800
    %v806 = vmul.f32 1.0, %v805
    %v807 = vtanh.pop %v787
    %v808 = vmul.f32 %v806, %v646
    %810 = vrot.lane.b32.xlu0 %v807, 80
    %v811 = vpop.permute.xlu0 %810
    %v813 = vmul.f32 %v806, %v811
    %815 = vrot.lane.b32.xlu0 %v813, 16
    %v816 = vpop.permute.xlu0 %815
    %v818 = vadd.f32 %v808, %v816
    %v819 = vtanh.pop %v818
    %821 = vrot.lane.b32.xlu0 %v819, 16
    %v822 = vpop.permute.xlu0 %821
    %v824 = vmul.f32 %v806, %v822
    %826 = vrot.lane.b32.xlu0 %v738, 96
    %v827 = vpop.permute.xlu0 %826
    %v828 = vsel %vm222, %v827, 0
    %830 = vmatpush.msra.mxu0 0.0
    %831 = vmatpush.msra.mxu0 0.0
    %832 = vmatpush.msra.mxu0 0.0
    %833 = vmatpush.msra.mxu0 0.0
    %834 = vmatpush.msra.mxu0 0.0
    %835 = vmatpush.msra.mxu0 0.0
    %836 = vmatpush.msra.mxu0 0.0
    %837 = vmatpush.msra.mxu0 0.0
    %838 = vmatpush.msra.mxu0 0.0
    %839 = vmatpush.msra.mxu0 0.0
    %840 = vmatpush.msra.mxu0 0.0
    %841 = vmatpush.msra.mxu0 0.0
    %842 = vmatpush.msra.mxu0 0.0
    %843 = vmatpush.msra.mxu0 0.0
    %844 = vmatpush.msra.mxu0 %v219
    %845 = vmatpush.msra.mxu0 %v218
    %846 = vmatmul.f32.gmra.mxu0 %v828
    %v847 = vpop.f32.mrf.mxu0
    %v848 = vadd.f32 0.0, %v847
    %849 = vdwg.mxu0
    %v851 = vsel %vm246, %v207, 0
    %853 = vmatpush.msra.mxu0 0.0
    %854 = vmatpush.msra.mxu0 0.0
    %855 = vmatpush.msra.mxu0 0.0
    %856 = vmatpush.msra.mxu0 0.0
    %857 = vmatpush.msra.mxu0 0.0
    %858 = vmatpush.msra.mxu0 0.0
    %859 = vmatpush.msra.mxu0 0.0
    %860 = vmatpush.msra.mxu0 0.0
    %861 = vmatpush.msra.mxu0 0.0
    %862 = vmatpush.msra.mxu0 0.0
    %863 = vmatpush.msra.mxu0 0.0
    %864 = vmatpush.msra.mxu0 0.0
    %865 = vmatpush.msra.mxu0 0.0
    %866 = vmatpush.msra.mxu0 0.0
    %867 = vmatpush.msra.mxu0 0.0
    %868 = vmatpush.msra.mxu0 %v215
    %869 = vmatmul.f32.gmra.mxu0 %v851
    %v870 = vpop.f32.mrf.mxu0
    %v871 = vadd.f32 %v848, %v870
    %872 = vdwg.mxu0
    %v873 = vadd.f32 %v871, %v355
    %v874 = vxor.u32 %v873, 2147483648
    %v875 = vmul.f32 %v874, 1.442695
    %v876 = vpow.pop %v875
    %v877 = vadd.f32 %v876, 1.0
    %v878 = vrcp.pop %v877
    %v879 = vmul.f32 %v877, %v878
    %v880 = vsub.f32 1.0, %v879
    %v881 = vmul.f32 %v878, %v880
    %v882 = vadd.f32 %v878, %v881
    %vm883 = vweird.f32 %v877
    %vm884 = vweird.f32 %v878
    %vm885 = vmor %vm883, %vm884
    %v886 = vsel %vm885, %v878, %v882
    %v887 = vand.u32 2147483647, %v877
    %vm888 = vcmp.eq.f32.partialorder %v887, 8.507059e+37
    %v889 = vand.u32 %v877, 2147483648
    %v890 = vor.u32 1.1754944e-38, %v889
    %v891 = vsel %vm888, %v890, %v886
    %v892 = vmul.f32 1.0, %v891
    %v893 = vtanh.pop %v873
    %v894 = vmul.f32 %v892, %v732
    %896 = vrot.lane.b32.xlu0 %v893, 80
    %v897 = vpop.permute.xlu0 %896
    %v899 = vmul.f32 %v892, %v897
    %901 = vrot.lane.b32.xlu0 %v899, 16
    %v902 = vpop.permute.xlu0 %901
    %v904 = vadd.f32 %v894, %v902
    %v905 = vtanh.pop %v904
    %907 = vrot.lane.b32.xlu0 %v905, 16
    %v908 = vpop.permute.xlu0 %907
    %v910 = vmul.f32 %v892, %v908
    %912 = vrot.lane.b32.xlu0 %v824, 96
    %v913 = vpop.permute.xlu0 %912
    %v914 = vsel %vm222, %v913, 0
    %916 = vmatpush.msra.mxu0 0.0
    %917 = vmatpush.msra.mxu0 0.0
    %918 = vmatpush.msra.mxu0 0.0
    %919 = vmatpush.msra.mxu0 0.0
    %920 = vmatpush.msra.mxu0 0.0
    %921 = vmatpush.msra.mxu0 0.0
    %922 = vmatpush.msra.mxu0 0.0
    %923 = vmatpush.msra.mxu0 0.0
    %924 = vmatpush.msra.mxu0 0.0
    %925 = vmatpush.msra.mxu0 0.0
    %926 = vmatpush.msra.mxu0 0.0
    %927 = vmatpush.msra.mxu0 0.0
    %928 = vmatpush.msra.mxu0 0.0
    %929 = vmatpush.msra.mxu0 0.0
    %930 = vmatpush.msra.mxu0 %v217
    %931 = vmatpush.msra.mxu0 %v216
    %932 = vmatmul.f32.gmra.mxu0 %v914
    %v933 = vpop.f32.mrf.mxu0
    %v934 = vadd.f32 0.0, %v933
    %935 = vdwg.mxu0
    %936 = vmatpush.msra.mxu0 0.0
    %937 = vmatpush.msra.mxu0 0.0
    %938 = vmatpush.msra.mxu0 0.0
    %939 = vmatpush.msra.mxu0 0.0
    %940 = vmatpush.msra.mxu0 0.0
    %941 = vmatpush.msra.mxu0 0.0
    %942 = vmatpush.msra.mxu0 0.0
    %943 = vmatpush.msra.mxu0 0.0
    %944 = vmatpush.msra.mxu0 0.0
    %945 = vmatpush.msra.mxu0 0.0
    %946 = vmatpush.msra.mxu0 0.0
    %947 = vmatpush.msra.mxu0 0.0
    %948 = vmatpush.msra.mxu0 0.0
    %949 = vmatpush.msra.mxu0 0.0
    %950 = vmatpush.msra.mxu0 0.0
    %951 = vmatpush.msra.mxu0 %v214
    %952 = vmatmul.f32.gmra.mxu0 %v851
    %v953 = vpop.f32.mrf.mxu0
    %v954 = vadd.f32 %v934, %v953
    %955 = vdwg.mxu0
    %v956 = vadd.f32 %v954, %v271
    %v957 = vxor.u32 %v956, 2147483648
    %v958 = vmul.f32 %v957, 1.442695
    %v959 = vpow.pop %v958
    %v960 = vadd.f32 %v959, 1.0
    %v961 = vrcp.pop %v960
    %v962 = vmul.f32 %v960, %v961
    %v963 = vsub.f32 1.0, %v962
    %v964 = vmul.f32 %v961, %v963
    %v965 = vadd.f32 %v961, %v964
    %vm966 = vweird.f32 %v960
    %vm967 = vweird.f32 %v961
    %vm968 = vmor %vm966, %vm967
    %v969 = vsel %vm968, %v961, %v965
    %v970 = vand.u32 2147483647, %v960
    %vm971 = vcmp.eq.f32.partialorder %v970, 8.507059e+37
    %v972 = vand.u32 %v960, 2147483648
    %v973 = vor.u32 1.1754944e-38, %v972
    %v974 = vsel %vm971, %v973, %v969
    %v975 = vmul.f32 1.0, %v974
    %v976 = vtanh.pop %v956
    %v977 = vmul.f32 %v975, %v818
    %979 = vrot.lane.b32.xlu0 %v976, 80
    %v980 = vpop.permute.xlu0 %979
    %v982 = vmul.f32 %v975, %v980
    %984 = vrot.lane.b32.xlu0 %v982, 16
    %v985 = vpop.permute.xlu0 %984
    %v987 = vadd.f32 %v977, %v985
    %v988 = vtanh.pop %v987
    %990 = vrot.lane.b32.xlu0 %v988, 16
    %v991 = vpop.permute.xlu0 %990
    %v993 = vmul.f32 %v975, %v991
    %995 = vrot.lane.b32.xlu0 %v910, 96
    %v996 = vpop.permute.xlu0 %995
    %v997 = vsel %vm222, %v996, 0
    %999 = vmatpush.msra.mxu0 0.0
    %1000 = vmatpush.msra.mxu0 0.0
    %1001 = vmatpush.msra.mxu0 0.0
    %1002 = vmatpush.msra.mxu0 0.0
    %1003 = vmatpush.msra.mxu0 0.0
    %1004 = vmatpush.msra.mxu0 0.0
    %1005 = vmatpush.msra.mxu0 0.0
    %1006 = vmatpush.msra.mxu0 0.0
    %1007 = vmatpush.msra.mxu0 0.0
    %1008 = vmatpush.msra.mxu0 0.0
    %1009 = vmatpush.msra.mxu0 0.0
    %1010 = vmatpush.msra.mxu0 0.0
    %1011 = vmatpush.msra.mxu0 0.0
    %1012 = vmatpush.msra.mxu0 0.0
    %1013 = vmatpush.msra.mxu0 %v219
    %1014 = vmatpush.msra.mxu0 %v218
    %1015 = vmatmul.f32.gmra.mxu0 %v997
    %v1016 = vpop.f32.mrf.mxu0
    %v1017 = vadd.f32 0.0, %v1016
    %1018 = vdwg.mxu0
    %1019 = vmatpush.msra.mxu0 0.0
    %1020 = vmatpush.msra.mxu0 0.0
    %1021 = vmatpush.msra.mxu0 0.0
    %1022 = vmatpush.msra.mxu0 0.0
    %1023 = vmatpush.msra.mxu0 0.0
    %1024 = vmatpush.msra.mxu0 0.0
    %1025 = vmatpush.msra.mxu0 0.0
    %1026 = vmatpush.msra.mxu0 0.0
    %1027 = vmatpush.msra.mxu0 0.0
    %1028 = vmatpush.msra.mxu0 0.0
    %1029 = vmatpush.msra.mxu0 0.0
    %1030 = vmatpush.msra.mxu0 0.0
    %1031 = vmatpush.msra.mxu0 0.0
    %1032 = vmatpush.msra.mxu0 0.0
    %1033 = vmatpush.msra.mxu0 0.0
    %1034 = vmatpush.msra.mxu0 %v215
    %1035 = vmatmul.f32.gmra.mxu0 %v765
    %v1036 = vpop.f32.mrf.mxu0
    %v1037 = vadd.f32 %v1017, %v1036
    %1038 = vdwg.mxu0
    %v1039 = vadd.f32 %v1037, %v355
    %v1040 = vxor.u32 %v1039, 2147483648
    %v1041 = vmul.f32 %v1040, 1.442695
    %v1042 = vpow.pop %v1041
    %v1043 = vadd.f32 %v1042, 1.0
    %v1044 = vrcp.pop %v1043
    %v1045 = vmul.f32 %v1043, %v1044
    %v1046 = vsub.f32 1.0, %v1045
    %v1047 = vmul.f32 %v1044, %v1046
    %v1048 = vadd.f32 %v1044, %v1047
    %vm1049 = vweird.f32 %v1043
    %vm1050 = vweird.f32 %v1044
    %vm1051 = vmor %vm1049, %vm1050
    %v1052 = vsel %vm1051, %v1044, %v1048
    %v1053 = vand.u32 2147483647, %v1043
    %vm1054 = vcmp.eq.f32.partialorder %v1053, 8.507059e+37
    %v1055 = vand.u32 %v1043, 2147483648
    %v1056 = vor.u32 1.1754944e-38, %v1055
    %v1057 = vsel %vm1054, %v1056, %v1052
    %v1058 = vmul.f32 1.0, %v1057
    %v1059 = vtanh.pop %v1039
    %v1060 = vmul.f32 %v1058, %v904
    %1062 = vrot.lane.b32.xlu0 %v1059, 80
    %v1063 = vpop.permute.xlu0 %1062
    %v1065 = vmul.f32 %v1058, %v1063
    %1067 = vrot.lane.b32.xlu0 %v1065, 16
    %v1068 = vpop.permute.xlu0 %1067
    %v1070 = vadd.f32 %v1060, %v1068
    %v1071 = vtanh.pop %v1070
    %1073 = vrot.lane.b32.xlu0 %v1071, 16
    %v1074 = vpop.permute.xlu0 %1073
    %v1076 = vmul.f32 %v1058, %v1074
    %1078 = vrot.lane.b32.xlu0 %v993, 96
    %v1079 = vpop.permute.xlu0 %1078
    %v1080 = vsel %vm222, %v1079, 0
    %1082 = vmatpush.msra.mxu0 0.0
    %1083 = vmatpush.msra.mxu0 0.0
    %1084 = vmatpush.msra.mxu0 0.0
    %1085 = vmatpush.msra.mxu0 0.0
    %1086 = vmatpush.msra.mxu0 0.0
    %1087 = vmatpush.msra.mxu0 0.0
    %1088 = vmatpush.msra.mxu0 0.0
    %1089 = vmatpush.msra.mxu0 0.0
    %1090 = vmatpush.msra.mxu0 0.0
    %1091 = vmatpush.msra.mxu0 0.0
    %1092 = vmatpush.msra.mxu0 0.0
    %1093 = vmatpush.msra.mxu0 0.0
    %1094 = vmatpush.msra.mxu0 0.0
    %1095 = vmatpush.msra.mxu0 0.0
    %1096 = vmatpush.msra.mxu0 %v217
    %1097 = vmatpush.msra.mxu0 %v216
    %1098 = vmatmul.f32.gmra.mxu0 %v1080
    %v1099 = vpop.f32.mrf.mxu0
    %v1100 = vadd.f32 0.0, %v1099
    %1101 = vdwg.mxu0
    %1102 = vmatpush.msra.mxu0 0.0
    %1103 = vmatpush.msra.mxu0 0.0
    %1104 = vmatpush.msra.mxu0 0.0
    %1105 = vmatpush.msra.mxu0 0.0
    %1106 = vmatpush.msra.mxu0 0.0
    %1107 = vmatpush.msra.mxu0 0.0
    %1108 = vmatpush.msra.mxu0 0.0
    %1109 = vmatpush.msra.mxu0 0.0
    %1110 = vmatpush.msra.mxu0 0.0
    %1111 = vmatpush.msra.mxu0 0.0
    %1112 = vmatpush.msra.mxu0 0.0
    %1113 = vmatpush.msra.mxu0 0.0
    %1114 = vmatpush.msra.mxu0 0.0
    %1115 = vmatpush.msra.mxu0 0.0
    %1116 = vmatpush.msra.mxu0 0.0
    %1117 = vmatpush.msra.mxu0 %v214
    %1118 = vmatmul.f32.gmra.mxu0 %v679
    %v1119 = vpop.f32.mrf.mxu0
    %v1120 = vadd.f32 %v1100, %v1119
    %1121 = vdwg.mxu0
    %v1122 = vadd.f32 %v1120, %v271
    %v1123 = vxor.u32 %v1122, 2147483648
    %v1124 = vmul.f32 %v1123, 1.442695
    %v1125 = vpow.pop %v1124
    %v1126 = vadd.f32 %v1125, 1.0
    %v1127 = vrcp.pop %v1126
    %v1128 = vmul.f32 %v1126, %v1127
    %v1129 = vsub.f32 1.0, %v1128
    %v1130 = vmul.f32 %v1127, %v1129
    %v1131 = vadd.f32 %v1127, %v1130
    %vm1132 = vweird.f32 %v1126
    %vm1133 = vweird.f32 %v1127
    %vm1134 = vmor %vm1132, %vm1133
    %v1135 = vsel %vm1134, %v1127, %v1131
    %v1136 = vand.u32 2147483647, %v1126
    %vm1137 = vcmp.eq.f32.partialorder %v1136, 8.507059e+37
    %v1138 = vand.u32 %v1126, 2147483648
    %v1139 = vor.u32 1.1754944e-38, %v1138
    %v1140 = vsel %vm1137, %v1139, %v1135
    %v1141 = vmul.f32 1.0, %v1140
    %v1142 = vtanh.pop %v1122
    %v1143 = vmul.f32 %v1141, %v987
    %1145 = vrot.lane.b32.xlu0 %v1142, 80
    %v1146 = vpop.permute.xlu0 %1145
    %v1148 = vmul.f32 %v1141, %v1146
    %1150 = vrot.lane.b32.xlu0 %v1148, 16
    %v1151 = vpop.permute.xlu0 %1150
    %v1153 = vadd.f32 %v1143, %v1151
    %v1154 = vtanh.pop %v1153
    %1156 = vrot.lane.b32.xlu0 %v1154, 16
    %v1157 = vpop.permute.xlu0 %1156
    %v1159 = vmul.f32 %v1141, %v1157
    %1161 = vrot.lane.b32.xlu0 %v1076, 96
    %v1162 = vpop.permute.xlu0 %1161
    %v1163 = vsel %vm222, %v1162, 0
    %1165 = vmatpush.msra.mxu0 0.0
    %1166 = vmatpush.msra.mxu0 0.0
    %1167 = vmatpush.msra.mxu0 0.0
    %1168 = vmatpush.msra.mxu0 0.0
    %1169 = vmatpush.msra.mxu0 0.0
    %1170 = vmatpush.msra.mxu0 0.0
    %1171 = vmatpush.msra.mxu0 0.0
    %1172 = vmatpush.msra.mxu0 0.0
    %1173 = vmatpush.msra.mxu0 0.0
    %1174 = vmatpush.msra.mxu0 0.0
    %1175 = vmatpush.msra.mxu0 0.0
    %1176 = vmatpush.msra.mxu0 0.0
    %1177 = vmatpush.msra.mxu0 0.0
    %1178 = vmatpush.msra.mxu0 0.0
    %1179 = vmatpush.msra.mxu0 %v219
    %1180 = vmatpush.msra.mxu0 %v218
    %1181 = vmatmul.f32.gmra.mxu0 %v1163
    %v1182 = vpop.f32.mrf.mxu0
    %v1183 = vadd.f32 0.0, %v1182
    %1184 = vdwg.mxu0
    %1185 = vmatpush.msra.mxu0 0.0
    %1186 = vmatpush.msra.mxu0 0.0
    %1187 = vmatpush.msra.mxu0 0.0
    %1188 = vmatpush.msra.mxu0 0.0
    %1189 = vmatpush.msra.mxu0 0.0
    %1190 = vmatpush.msra.mxu0 0.0
    %1191 = vmatpush.msra.mxu0 0.0
    %1192 = vmatpush.msra.mxu0 0.0
    %1193 = vmatpush.msra.mxu0 0.0
    %1194 = vmatpush.msra.mxu0 0.0
    %1195 = vmatpush.msra.mxu0 0.0
    %1196 = vmatpush.msra.mxu0 0.0
    %1197 = vmatpush.msra.mxu0 0.0
    %1198 = vmatpush.msra.mxu0 0.0
    %1199 = vmatpush.msra.mxu0 0.0
    %1200 = vmatpush.msra.mxu0 %v215
    %1201 = vmatmul.f32.gmra.mxu0 %v593
    %v1202 = vpop.f32.mrf.mxu0
    %v1203 = vadd.f32 %v1183, %v1202
    %1204 = vdwg.mxu0
    %v1205 = vadd.f32 %v1203, %v355
    %v1206 = vxor.u32 %v1205, 2147483648
    %v1207 = vmul.f32 %v1206, 1.442695
    %v1208 = vpow.pop %v1207
    %v1209 = vadd.f32 %v1208, 1.0
    %v1210 = vrcp.pop %v1209
    %v1211 = vmul.f32 %v1209, %v1210
    %v1212 = vsub.f32 1.0, %v1211
    %v1213 = vmul.f32 %v1210, %v1212
    %v1214 = vadd.f32 %v1210, %v1213
    %vm1215 = vweird.f32 %v1209
    %vm1216 = vweird.f32 %v1210
    %vm1217 = vmor %vm1215, %vm1216
    %v1218 = vsel %vm1217, %v1210, %v1214
    %v1219 = vand.u32 2147483647, %v1209
    %vm1220 = vcmp.eq.f32.partialorder %v1219, 8.507059e+37
    %v1221 = vand.u32 %v1209, 2147483648
    %v1222 = vor.u32 1.1754944e-38, %v1221
    %v1223 = vsel %vm1220, %v1222, %v1218
    %v1224 = vmul.f32 1.0, %v1223
    %v1225 = vtanh.pop %v1205
    %v1226 = vmul.f32 %v1224, %v1070
    %1228 = vrot.lane.b32.xlu0 %v1225, 80
    %v1229 = vpop.permute.xlu0 %1228
    %v1231 = vmul.f32 %v1224, %v1229
    %1233 = vrot.lane.b32.xlu0 %v1231, 16
    %v1234 = vpop.permute.xlu0 %1233
    %v1236 = vadd.f32 %v1226, %v1234
    %v1237 = vtanh.pop %v1236
    %1239 = vrot.lane.b32.xlu0 %v1237, 16
    %v1240 = vpop.permute.xlu0 %1239
    %v1242 = vmul.f32 %v1224, %v1240
    %1244 = vrot.lane.b32.xlu0 %v1159, 96
    %v1245 = vpop.permute.xlu0 %1244
    %v1246 = vsel %vm222, %v1245, 0
    %1248 = vmatpush.msra.mxu0 0.0
    %1249 = vmatpush.msra.mxu0 0.0
    %1250 = vmatpush.msra.mxu0 0.0
    %1251 = vmatpush.msra.mxu0 0.0
    %1252 = vmatpush.msra.mxu0 0.0
    %1253 = vmatpush.msra.mxu0 0.0
    %1254 = vmatpush.msra.mxu0 0.0
    %1255 = vmatpush.msra.mxu0 0.0
    %1256 = vmatpush.msra.mxu0 0.0
    %1257 = vmatpush.msra.mxu0 0.0
    %1258 = vmatpush.msra.mxu0 0.0
    %1259 = vmatpush.msra.mxu0 0.0
    %1260 = vmatpush.msra.mxu0 0.0
    %1261 = vmatpush.msra.mxu0 0.0
    %1262 = vmatpush.msra.mxu0 %v217
    %1263 = vmatpush.msra.mxu0 %v216
    %1264 = vmatmul.f32.gmra.mxu0 %v1246
    %v1265 = vpop.f32.mrf.mxu0
    %v1266 = vadd.f32 0.0, %v1265
    %1267 = vdwg.mxu0
    %1268 = vmatpush.msra.mxu0 0.0
    %1269 = vmatpush.msra.mxu0 0.0
    %1270 = vmatpush.msra.mxu0 0.0
    %1271 = vmatpush.msra.mxu0 0.0
    %1272 = vmatpush.msra.mxu0 0.0
    %1273 = vmatpush.msra.mxu0 0.0
    %1274 = vmatpush.msra.mxu0 0.0
    %1275 = vmatpush.msra.mxu0 0.0
    %1276 = vmatpush.msra.mxu0 0.0
    %1277 = vmatpush.msra.mxu0 0.0
    %1278 = vmatpush.msra.mxu0 0.0
    %1279 = vmatpush.msra.mxu0 0.0
    %1280 = vmatpush.msra.mxu0 0.0
    %1281 = vmatpush.msra.mxu0 0.0
    %1282 = vmatpush.msra.mxu0 0.0
    %1283 = vmatpush.msra.mxu0 %v214
    %1284 = vmatmul.f32.gmra.mxu0 %v507
    %v1285 = vpop.f32.mrf.mxu0
    %v1286 = vadd.f32 %v1266, %v1285
    %1287 = vdwg.mxu0
    %v1288 = vadd.f32 %v1286, %v271
    %v1289 = vxor.u32 %v1288, 2147483648
    %v1290 = vmul.f32 %v1289, 1.442695
    %v1291 = vpow.pop %v1290
    %v1292 = vadd.f32 %v1291, 1.0
    %v1293 = vrcp.pop %v1292
    %v1294 = vmul.f32 %v1292, %v1293
    %v1295 = vsub.f32 1.0, %v1294
    %v1296 = vmul.f32 %v1293, %v1295
    %v1297 = vadd.f32 %v1293, %v1296
    %vm1298 = vweird.f32 %v1292
    %vm1299 = vweird.f32 %v1293
    %vm1300 = vmor %vm1298, %vm1299
    %v1301 = vsel %vm1300, %v1293, %v1297
    %v1302 = vand.u32 2147483647, %v1292
    %vm1303 = vcmp.eq.f32.partialorder %v1302, 8.507059e+37
    %v1304 = vand.u32 %v1292, 2147483648
    %v1305 = vor.u32 1.1754944e-38, %v1304
    %v1306 = vsel %vm1303, %v1305, %v1301
    %v1307 = vmul.f32 1.0, %v1306
    %v1308 = vtanh.pop %v1288
    %v1309 = vmul.f32 %v1307, %v1153
    %1311 = vrot.lane.b32.xlu0 %v1308, 80
    %v1312 = vpop.permute.xlu0 %1311
    %v1314 = vmul.f32 %v1307, %v1312
    %1316 = vrot.lane.b32.xlu0 %v1314, 16
    %v1317 = vpop.permute.xlu0 %1316
    %v1319 = vadd.f32 %v1309, %v1317
    %v1320 = vtanh.pop %v1319
    %1322 = vrot.lane.b32.xlu0 %v1320, 16
    %v1323 = vpop.permute.xlu0 %1322
    %v1325 = vmul.f32 %v1307, %v1323
    %1327 = vrot.lane.b32.xlu0 %v1242, 96
    %v1328 = vpop.permute.xlu0 %1327
    %v1329 = vsel %vm222, %v1328, 0
    %1331 = vmatpush.msra.mxu0 0.0
    %1332 = vmatpush.msra.mxu0 0.0
    %1333 = vmatpush.msra.mxu0 0.0
    %1334 = vmatpush.msra.mxu0 0.0
    %1335 = vmatpush.msra.mxu0 0.0
    %1336 = vmatpush.msra.mxu0 0.0
    %1337 = vmatpush.msra.mxu0 0.0
    %1338 = vmatpush.msra.mxu0 0.0
    %1339 = vmatpush.msra.mxu0 0.0
    %1340 = vmatpush.msra.mxu0 0.0
    %1341 = vmatpush.msra.mxu0 0.0
    %1342 = vmatpush.msra.mxu0 0.0
    %1343 = vmatpush.msra.mxu0 0.0
    %1344 = vmatpush.msra.mxu0 0.0
    %1345 = vmatpush.msra.mxu0 %v219
    %1346 = vmatpush.msra.mxu0 %v218
    %1347 = vmatmul.f32.gmra.mxu0 %v1329
    %v1348 = vpop.f32.mrf.mxu0
    %v1349 = vadd.f32 0.0, %v1348
    %1350 = vdwg.mxu0
    %1351 = vmatpush.msra.mxu0 0.0
    %1352 = vmatpush.msra.mxu0 0.0
    %1353 = vmatpush.msra.mxu0 0.0
    %1354 = vmatpush.msra.mxu0 0.0
    %1355 = vmatpush.msra.mxu0 0.0
    %1356 = vmatpush.msra.mxu0 0.0
    %1357 = vmatpush.msra.mxu0 0.0
    %1358 = vmatpush.msra.mxu0 0.0
    %1359 = vmatpush.msra.mxu0 0.0
    %1360 = vmatpush.msra.mxu0 0.0
    %1361 = vmatpush.msra.mxu0 0.0
    %1362 = vmatpush.msra.mxu0 0.0
    %1363 = vmatpush.msra.mxu0 0.0
    %1364 = vmatpush.msra.mxu0 0.0
    %1365 = vmatpush.msra.mxu0 0.0
    %1366 = vmatpush.msra.mxu0 %v215
    %1367 = vmatmul.f32.gmra.mxu0 %v421
    %v1368 = vpop.f32.mrf.mxu0
    %v1369 = vadd.f32 %v1349, %v1368
    %1370 = vdwg.mxu0
    %v1371 = vadd.f32 %v1369, %v355
    %v1372 = vxor.u32 %v1371, 2147483648
    %v1373 = vmul.f32 %v1372, 1.442695
    %v1374 = vpow.pop %v1373
    %v1375 = vadd.f32 %v1374, 1.0
    %v1376 = vrcp.pop %v1375
    %v1377 = vmul.f32 %v1375, %v1376
    %v1378 = vsub.f32 1.0, %v1377
    %v1379 = vmul.f32 %v1376, %v1378
    %v1380 = vadd.f32 %v1376, %v1379
    %vm1381 = vweird.f32 %v1375
    %vm1382 = vweird.f32 %v1376
    %vm1383 = vmor %vm1381, %vm1382
    %v1384 = vsel %vm1383, %v1376, %v1380
    %v1385 = vand.u32 2147483647, %v1375
    %vm1386 = vcmp.eq.f32.partialorder %v1385, 8.507059e+37
    %v1387 = vand.u32 %v1375, 2147483648
    %v1388 = vor.u32 1.1754944e-38, %v1387
    %v1389 = vsel %vm1386, %v1388, %v1384
    %v1390 = vmul.f32 1.0, %v1389
    %v1391 = vtanh.pop %v1371
    %v1392 = vmul.f32 %v1390, %v1236
    %1394 = vrot.lane.b32.xlu0 %v1391, 80
    %v1395 = vpop.permute.xlu0 %1394
    %v1397 = vmul.f32 %v1390, %v1395
    %1399 = vrot.lane.b32.xlu0 %v1397, 16
    %v1400 = vpop.permute.xlu0 %1399
    %v1402 = vadd.f32 %v1392, %v1400
    %v1403 = vtanh.pop %v1402
    %1405 = vrot.lane.b32.xlu0 %v1403, 16
    %v1406 = vpop.permute.xlu0 %1405
    %v1408 = vmul.f32 %v1390, %v1406
    %1410 = vrot.lane.b32.xlu0 %v1325, 96
    %v1411 = vpop.permute.xlu0 %1410
    %v1412 = vsel %vm222, %v1411, 0
    %1414 = vmatpush.msra.mxu0 0.0
    %1415 = vmatpush.msra.mxu0 0.0
    %1416 = vmatpush.msra.mxu0 0.0
    %1417 = vmatpush.msra.mxu0 0.0
    %1418 = vmatpush.msra.mxu0 0.0
    %1419 = vmatpush.msra.mxu0 0.0
    %1420 = vmatpush.msra.mxu0 0.0
    %1421 = vmatpush.msra.mxu0 0.0
    %1422 = vmatpush.msra.mxu0 0.0
    %1423 = vmatpush.msra.mxu0 0.0
    %1424 = vmatpush.msra.mxu0 0.0
    %1425 = vmatpush.msra.mxu0 0.0
    %1426 = vmatpush.msra.mxu0 0.0
    %1427 = vmatpush.msra.mxu0 0.0
    %1428 = vmatpush.msra.mxu0 %v217
    %1429 = vmatpush.msra.mxu0 %v216
    %1430 = vmatmul.f32.gmra.mxu0 %v1412
    %v1431 = vpop.f32.mrf.mxu0
    %v1432 = vadd.f32 0.0, %v1431
    %1433 = vdwg.mxu0
    %1434 = vmatpush.msra.mxu0 0.0
    %1435 = vmatpush.msra.mxu0 0.0
    %1436 = vmatpush.msra.mxu0 0.0
    %1437 = vmatpush.msra.mxu0 0.0
    %1438 = vmatpush.msra.mxu0 0.0
    %1439 = vmatpush.msra.mxu0 0.0
    %1440 = vmatpush.msra.mxu0 0.0
    %1441 = vmatpush.msra.mxu0 0.0
    %1442 = vmatpush.msra.mxu0 0.0
    %1443 = vmatpush.msra.mxu0 0.0
    %1444 = vmatpush.msra.mxu0 0.0
    %1445 = vmatpush.msra.mxu0 0.0
    %1446 = vmatpush.msra.mxu0 0.0
    %1447 = vmatpush.msra.mxu0 0.0
    %1448 = vmatpush.msra.mxu0 0.0
    %1449 = vmatpush.msra.mxu0 %v214
    %1450 = vmatmul.f32.gmra.mxu0 %v332
    %v1451 = vpop.f32.mrf.mxu0
    %v1452 = vadd.f32 %v1432, %v1451
    %1453 = vdwg.mxu0
    %v1454 = vadd.f32 %v1452, %v271
    %v1455 = vxor.u32 %v1454, 2147483648
    %v1456 = vmul.f32 %v1455, 1.442695
    %v1457 = vpow.pop %v1456
    %v1458 = vadd.f32 %v1457, 1.0
    %v1459 = vrcp.pop %v1458
    %v1460 = vmul.f32 %v1458, %v1459
    %v1461 = vsub.f32 1.0, %v1460
    %v1462 = vmul.f32 %v1459, %v1461
    %v1463 = vadd.f32 %v1459, %v1462
    %vm1464 = vweird.f32 %v1458
    %vm1465 = vweird.f32 %v1459
    %vm1466 = vmor %vm1464, %vm1465
    %v1467 = vsel %vm1466, %v1459, %v1463
    %v1468 = vand.u32 2147483647, %v1458
    %vm1469 = vcmp.eq.f32.partialorder %v1468, 8.507059e+37
    %v1470 = vand.u32 %v1458, 2147483648
    %v1471 = vor.u32 1.1754944e-38, %v1470
    %v1472 = vsel %vm1469, %v1471, %v1467
    %v1473 = vmul.f32 1.0, %v1472
    %v1474 = vtanh.pop %v1454
    %v1475 = vmul.f32 %v1473, %v1319
    %1477 = vrot.lane.b32.xlu0 %v1474, 80
    %v1478 = vpop.permute.xlu0 %1477
    %v1480 = vmul.f32 %v1473, %v1478
    %1482 = vrot.lane.b32.xlu0 %v1480, 16
    %v1483 = vpop.permute.xlu0 %1482
    %v1485 = vadd.f32 %v1475, %v1483
    %v1486 = vtanh.pop %v1485
    %1488 = vrot.lane.b32.xlu0 %v1486, 16
    %v1489 = vpop.permute.xlu0 %1488
    %v1491 = vmul.f32 %v1473, %v1489
    %1493 = vrot.lane.b32.xlu0 %v1408, 96
    %v1494 = vpop.permute.xlu0 %1493
    %v1495 = vsel %vm222, %v1494, 0
    %1497 = vmatpush.msra.mxu0 0.0
    %1498 = vmatpush.msra.mxu0 0.0
    %1499 = vmatpush.msra.mxu0 0.0
    %1500 = vmatpush.msra.mxu0 0.0
    %1501 = vmatpush.msra.mxu0 0.0
    %1502 = vmatpush.msra.mxu0 0.0
    %1503 = vmatpush.msra.mxu0 0.0
    %1504 = vmatpush.msra.mxu0 0.0
    %1505 = vmatpush.msra.mxu0 0.0
    %1506 = vmatpush.msra.mxu0 0.0
    %1507 = vmatpush.msra.mxu0 0.0
    %1508 = vmatpush.msra.mxu0 0.0
    %1509 = vmatpush.msra.mxu0 0.0
    %1510 = vmatpush.msra.mxu0 0.0
    %1511 = vmatpush.msra.mxu0 %v219
    %1512 = vmatpush.msra.mxu0 %v218
    %1513 = vmatmul.f32.gmra.mxu0 %v1495
    %v1514 = vpop.f32.mrf.mxu0
    %v1515 = vadd.f32 0.0, %v1514
    %1516 = vdwg.mxu0
    %1517 = vmatpush.msra.mxu0 0.0
    %1518 = vmatpush.msra.mxu0 0.0
    %1519 = vmatpush.msra.mxu0 0.0
    %1520 = vmatpush.msra.mxu0 0.0
    %1521 = vmatpush.msra.mxu0 0.0
    %1522 = vmatpush.msra.mxu0 0.0
    %1523 = vmatpush.msra.mxu0 0.0
    %1524 = vmatpush.msra.mxu0 0.0
    %1525 = vmatpush.msra.mxu0 0.0
    %1526 = vmatpush.msra.mxu0 0.0
    %1527 = vmatpush.msra.mxu0 0.0
    %1528 = vmatpush.msra.mxu0 0.0
    %1529 = vmatpush.msra.mxu0 0.0
    %1530 = vmatpush.msra.mxu0 0.0
    %1531 = vmatpush.msra.mxu0 0.0
    %1532 = vmatpush.msra.mxu0 %v215
    %1533 = vmatmul.f32.gmra.mxu0 %v248
    %v1534 = vpop.f32.mrf.mxu0
    %v1535 = vadd.f32 %v1515, %v1534
    %1536 = vdwg.mxu0
    %v1537 = vadd.f32 %v1535, %v355
    %v1538 = vxor.u32 %v1537, 2147483648
    %v1539 = vmul.f32 %v1538, 1.442695
    %v1540 = vpow.pop %v1539
    %v1541 = vadd.f32 %v1540, 1.0
    %v1542 = vrcp.pop %v1541
    %v1543 = vmul.f32 %v1541, %v1542
    %v1544 = vsub.f32 1.0, %v1543
    %v1545 = vmul.f32 %v1542, %v1544
    %v1546 = vadd.f32 %v1542, %v1545
    %vm1547 = vweird.f32 %v1541
    %vm1548 = vweird.f32 %v1542
    %vm1549 = vmor %vm1547, %vm1548
    %v1550 = vsel %vm1549, %v1542, %v1546
    %v1551 = vand.u32 2147483647, %v1541
    %vm1552 = vcmp.eq.f32.partialorder %v1551, 8.507059e+37
    %v1553 = vand.u32 %v1541, 2147483648
    %v1554 = vor.u32 1.1754944e-38, %v1553
    %v1555 = vsel %vm1552, %v1554, %v1550
    %v1556 = vmul.f32 1.0, %v1555
    %v1557 = vtanh.pop %v1537
    %v1558 = vmul.f32 %v1556, %v1402
    %1560 = vrot.lane.b32.xlu0 %v1557, 80
    %v1561 = vpop.permute.xlu0 %1560
    %v1563 = vmul.f32 %v1556, %v1561
    %1565 = vrot.lane.b32.xlu0 %v1563, 16
    %v1566 = vpop.permute.xlu0 %1565
    %v1568 = vadd.f32 %v1558, %v1566
    %v1569 = vtanh.pop %v1568
    %1571 = vrot.lane.b32.xlu0 %v1569, 16
    %v1572 = vpop.permute.xlu0 %1571
    %v1574 = vmul.f32 %v1556, %v1572
    %v1575 = vadd.f32 %v1491, %v1574
    %v1576 = vadd.f32 %v1485, %v1568
    %v1577 = vld [vmem:[%s6] sm:$0xff]
    %v1578 = vld [vmem:[%s6 + $0x8] sm:$0xff]
    %v1579 = vld [vmem:[%s6 + $0x10] sm:$0xff]
    %v1580 = vld [vmem:[%s6 + $0x18] sm:$0xff]
    %v1581 = vld [vmem:[%s6 + $0x20] sm:$0xff]
    %v1582 = vld [vmem:[%s6 + $0x28] sm:$0xff]
    %v1583 = vld [vmem:[%s6 + $0x30] sm:$0xff]
    %v1584 = vld [vmem:[%s6 + $0x38] sm:$0xff]
    %v1585 = vld [vmem:[%s7] sm:$0xff]
    %v1586 = vld [vmem:[%s7 + $0x8] sm:$0xff]
    %v1587 = vld [vmem:[%s7 + $0x10] sm:$0xff]
    %v1588 = vld [vmem:[%s7 + $0x18] sm:$0xff]
    %v1589 = vld [vmem:[#allocation6] sm:$0x1]
    %v1590 = vld [vmem:[#allocation6 + $0x1] sm:$0x1]
    %1592 = vrot.lane.b32.xlu0 %v1574, 96
    %v1593 = vpop.permute.xlu0 %1592
    %v1594 = vsel %vm222, %v1593, 0
    %1596 = vmatpush.msra.mxu0 0.0
    %1597 = vmatpush.msra.mxu0 0.0
    %1598 = vmatpush.msra.mxu0 0.0
    %1599 = vmatpush.msra.mxu0 0.0
    %1600 = vmatpush.msra.mxu0 0.0
    %1601 = vmatpush.msra.mxu0 0.0
    %1602 = vmatpush.msra.mxu0 0.0
    %1603 = vmatpush.msra.mxu0 0.0
    %1604 = vmatpush.msra.mxu0 0.0
    %1605 = vmatpush.msra.mxu0 0.0
    %1606 = vmatpush.msra.mxu0 0.0
    %1607 = vmatpush.msra.mxu0 0.0
    %1608 = vmatpush.msra.mxu0 0.0
    %1609 = vmatpush.msra.mxu0 0.0
    %1610 = vmatpush.msra.mxu0 %v1580
    %1611 = vmatpush.msra.mxu0 %v1579
    %1612 = vmatmul.f32.gmra.mxu0 %v1594
    %v1613 = vpop.f32.mrf.mxu0
    %v1614 = vadd.f32 0.0, %v1613
    %1615 = vdwg.mxu0
    %1616 = vmatpush.msra.mxu0 0.0
    %1617 = vmatpush.msra.mxu0 0.0
    %1618 = vmatpush.msra.mxu0 0.0
    %1619 = vmatpush.msra.mxu0 0.0
    %1620 = vmatpush.msra.mxu0 0.0
    %1621 = vmatpush.msra.mxu0 0.0
    %1622 = vmatpush.msra.mxu0 0.0
    %1623 = vmatpush.msra.mxu0 0.0
    %1624 = vmatpush.msra.mxu0 0.0
    %1625 = vmatpush.msra.mxu0 0.0
    %1626 = vmatpush.msra.mxu0 0.0
    %1627 = vmatpush.msra.mxu0 0.0
    %1628 = vmatpush.msra.mxu0 0.0
    %1629 = vmatpush.msra.mxu0 0.0
    %1630 = vmatpush.msra.mxu0 %v1578
    %1631 = vmatpush.msra.mxu0 %v1577
    %1632 = vmatmul.f32.gmra.mxu0 %v398
    %v1633 = vpop.f32.mrf.mxu0
    %v1634 = vadd.f32 %v1614, %v1633
    %1635 = vdwg.mxu0
    %1636 = vmatpush.msra.mxu0 0.0
    %1637 = vmatpush.msra.mxu0 0.0
    %1638 = vmatpush.msra.mxu0 0.0
    %1639 = vmatpush.msra.mxu0 0.0
    %1640 = vmatpush.msra.mxu0 0.0
    %1641 = vmatpush.msra.mxu0 0.0
    %1642 = vmatpush.msra.mxu0 0.0
    %1643 = vmatpush.msra.mxu0 0.0
    %1644 = vmatpush.msra.mxu0 0.0
    %1645 = vmatpush.msra.mxu0 0.0
    %1646 = vmatpush.msra.mxu0 0.0
    %1647 = vmatpush.msra.mxu0 0.0
    %1648 = vmatpush.msra.mxu0 0.0
    %1649 = vmatpush.msra.mxu0 0.0
    %1650 = vmatpush.msra.mxu0 %v1584
    %1651 = vmatpush.msra.mxu0 %v1583
    %1652 = vmatmul.f32.gmra.mxu0 %v484
    %v1653 = vpop.f32.mrf.mxu0
    %v1654 = vadd.f32 0.0, %v1653
    %1655 = vdwg.mxu0
    %1657 = vrot.lane.b32.xlu0 %v1491, 96
    %v1658 = vpop.permute.xlu0 %1657
    %v1659 = vsel %vm222, %v1658, 0
    %1661 = vmatpush.msra.mxu0 0.0
    %1662 = vmatpush.msra.mxu0 0.0
    %1663 = vmatpush.msra.mxu0 0.0
    %1664 = vmatpush.msra.mxu0 0.0
    %1665 = vmatpush.msra.mxu0 0.0
    %1666 = vmatpush.msra.mxu0 0.0
    %1667 = vmatpush.msra.mxu0 0.0
    %1668 = vmatpush.msra.mxu0 0.0
    %1669 = vmatpush.msra.mxu0 0.0
    %1670 = vmatpush.msra.mxu0 0.0
    %1671 = vmatpush.msra.mxu0 0.0
    %1672 = vmatpush.msra.mxu0 0.0
    %1673 = vmatpush.msra.mxu0 0.0
    %1674 = vmatpush.msra.mxu0 0.0
    %1675 = vmatpush.msra.mxu0 %v1582
    %1676 = vmatpush.msra.mxu0 %v1581
    %1677 = vmatmul.f32.gmra.mxu0 %v1659
    %v1678 = vpop.f32.mrf.mxu0
    %v1679 = vadd.f32 %v1654, %v1678
    %1680 = vdwg.mxu0
    %1681 = vmatpush.msra.mxu0 0.0
    %1682 = vmatpush.msra.mxu0 0.0
    %1683 = vmatpush.msra.mxu0 0.0
    %1684 = vmatpush.msra.mxu0 0.0
    %1685 = vmatpush.msra.mxu0 0.0
    %1686 = vmatpush.msra.mxu0 0.0
    %1687 = vmatpush.msra.mxu0 0.0
    %1688 = vmatpush.msra.mxu0 0.0
    %1689 = vmatpush.msra.mxu0 0.0
    %1690 = vmatpush.msra.mxu0 0.0
    %1691 = vmatpush.msra.mxu0 0.0
    %1692 = vmatpush.msra.mxu0 0.0
    %1693 = vmatpush.msra.mxu0 0.0
    %1694 = vmatpush.msra.mxu0 0.0
    %1695 = vmatpush.msra.mxu0 %v1586
    %1696 = vmatpush.msra.mxu0 %v1585
    %1697 = vmatmul.f32.gmra.mxu0 %v224
    %v1698 = vpop.f32.mrf.mxu0
    %v1699 = vadd.f32 0.0, %v1698
    %1700 = vdwg.mxu0
    %v1701 = vadd.f32 %v1634, %v1699
    %v1703 = vperm.slane %v1589, 0
    %v1705 = vadd.f32 %v1701, %v1703
    %v1706 = vxor.u32 %v1705, 2147483648
    %v1707 = vmul.f32 %v1706, 1.442695
    %v1708 = vpow.pop %v1707
    %v1709 = vadd.f32 %v1708, 1.0
    %v1710 = vrcp.pop %v1709
    %v1711 = vmul.f32 %v1709, %v1710
    %v1712 = vsub.f32 1.0, %v1711
    %v1713 = vmul.f32 %v1710, %v1712
    %v1714 = vadd.f32 %v1710, %v1713
    %vm1715 = vweird.f32 %v1709
    %vm1716 = vweird.f32 %v1710
    %vm1717 = vmor %vm1715, %vm1716
    %v1718 = vsel %vm1717, %v1710, %v1714
    %v1719 = vand.u32 2147483647, %v1709
    %vm1720 = vcmp.eq.f32.partialorder %v1719, 8.507059e+37
    %v1721 = vand.u32 %v1709, 2147483648
    %v1722 = vor.u32 1.1754944e-38, %v1721
    %v1723 = vsel %vm1720, %v1722, %v1718
    %v1724 = vmul.f32 1.0, %v1723
    %v1725 = vtanh.pop %v1705
    %v1726 = vmul.f32 %v1724, 0.0
    %1728 = vrot.lane.b32.xlu0 %v1725, 80
    %v1729 = vpop.permute.xlu0 %1728
    %v1731 = vmul.f32 %v1724, %v1729
    %1733 = vrot.lane.b32.xlu0 %v1731, 16
    %v1734 = vpop.permute.xlu0 %1733
    %v1736 = vadd.f32 %v1726, %v1734
    %v1737 = vtanh.pop %v1736
    %1739 = vrot.lane.b32.xlu0 %v1737, 16
    %v1740 = vpop.permute.xlu0 %1739
    %v1742 = vmul.f32 %v1724, %v1740
    %1743 = vmatpush.msra.mxu0 0.0
    %1744 = vmatpush.msra.mxu0 0.0
    %1745 = vmatpush.msra.mxu0 0.0
    %1746 = vmatpush.msra.mxu0 0.0
    %1747 = vmatpush.msra.mxu0 0.0
    %1748 = vmatpush.msra.mxu0 0.0
    %1749 = vmatpush.msra.mxu0 0.0
    %1750 = vmatpush.msra.mxu0 0.0
    %1751 = vmatpush.msra.mxu0 0.0
    %1752 = vmatpush.msra.mxu0 0.0
    %1753 = vmatpush.msra.mxu0 0.0
    %1754 = vmatpush.msra.mxu0 0.0
    %1755 = vmatpush.msra.mxu0 0.0
    %1756 = vmatpush.msra.mxu0 0.0
    %1757 = vmatpush.msra.mxu0 %v1588
    %1758 = vmatpush.msra.mxu0 %v1587
    %1759 = vmatmul.f32.gmra.mxu0 %v224
    %v1760 = vpop.f32.mrf.mxu0
    %v1761 = vadd.f32 0.0, %v1760
    %1762 = vdwg.mxu0
    %v1763 = vadd.f32 %v1679, %v1761
    %v1765 = vperm.slane %v1590, 0
    %v1767 = vadd.f32 %v1763, %v1765
    %v1768 = vxor.u32 %v1767, 2147483648
    %v1769 = vmul.f32 %v1768, 1.442695
    %v1770 = vpow.pop %v1769
    %v1771 = vadd.f32 %v1770, 1.0
    %v1772 = vrcp.pop %v1771
    %v1773 = vmul.f32 %v1771, %v1772
    %v1774 = vsub.f32 1.0, %v1773
    %v1775 = vmul.f32 %v1772, %v1774
    %v1776 = vadd.f32 %v1772, %v1775
    %vm1777 = vweird.f32 %v1771
    %vm1778 = vweird.f32 %v1772
    %vm1779 = vmor %vm1777, %vm1778
    %v1780 = vsel %vm1779, %v1772, %v1776
    %v1781 = vand.u32 2147483647, %v1771
    %vm1782 = vcmp.eq.f32.partialorder %v1781, 8.507059e+37
    %v1783 = vand.u32 %v1771, 2147483648
    %v1784 = vor.u32 1.1754944e-38, %v1783
    %v1785 = vsel %vm1782, %v1784, %v1780
    %v1786 = vmul.f32 1.0, %v1785
    %v1787 = vtanh.pop %v1767
    %v1788 = vmul.f32 %v1786, 0.0
    %1790 = vrot.lane.b32.xlu0 %v1787, 80
    %v1791 = vpop.permute.xlu0 %1790
    %v1793 = vmul.f32 %v1786, %v1791
    %1795 = vrot.lane.b32.xlu0 %v1793, 16
    %v1796 = vpop.permute.xlu0 %1795
    %v1798 = vadd.f32 %v1788, %v1796
    %v1799 = vtanh.pop %v1798
    %1801 = vrot.lane.b32.xlu0 %v1799, 16
    %v1802 = vpop.permute.xlu0 %1801
    %v1804 = vmul.f32 %v1786, %v1802
    %1805 = vmatpush.msra.mxu0 0.0
    %1806 = vmatpush.msra.mxu0 0.0
    %1807 = vmatpush.msra.mxu0 0.0
    %1808 = vmatpush.msra.mxu0 0.0
    %1809 = vmatpush.msra.mxu0 0.0
    %1810 = vmatpush.msra.mxu0 0.0
    %1811 = vmatpush.msra.mxu0 0.0
    %1812 = vmatpush.msra.mxu0 0.0
    %1813 = vmatpush.msra.mxu0 0.0
    %1814 = vmatpush.msra.mxu0 0.0
    %1815 = vmatpush.msra.mxu0 0.0
    %1816 = vmatpush.msra.mxu0 0.0
    %1817 = vmatpush.msra.mxu0 0.0
    %1818 = vmatpush.msra.mxu0 0.0
    %1819 = vmatpush.msra.mxu0 %v1580
    %1820 = vmatpush.msra.mxu0 %v1579
    %1821 = vmatmul.f32.gmra.mxu0 %v1495
    %v1822 = vpop.f32.mrf.mxu0
    %v1823 = vadd.f32 0.0, %v1822
    %1824 = vdwg.mxu0
    %1825 = vmatpush.msra.mxu0 0.0
    %1826 = vmatpush.msra.mxu0 0.0
    %1827 = vmatpush.msra.mxu0 0.0
    %1828 = vmatpush.msra.mxu0 0.0
    %1829 = vmatpush.msra.mxu0 0.0
    %1830 = vmatpush.msra.mxu0 0.0
    %1831 = vmatpush.msra.mxu0 0.0
    %1832 = vmatpush.msra.mxu0 0.0
    %1833 = vmatpush.msra.mxu0 0.0
    %1834 = vmatpush.msra.mxu0 0.0
    %1835 = vmatpush.msra.mxu0 0.0
    %1836 = vmatpush.msra.mxu0 0.0
    %1837 = vmatpush.msra.mxu0 0.0
    %1838 = vmatpush.msra.mxu0 0.0
    %1839 = vmatpush.msra.mxu0 %v1578
    %1840 = vmatpush.msra.mxu0 %v1577
    %1841 = vmatmul.f32.gmra.mxu0 %v570
    %v1842 = vpop.f32.mrf.mxu0
    %v1843 = vadd.f32 %v1823, %v1842
    %1844 = vdwg.mxu0
    %1845 = vmatpush.msra.mxu0 0.0
    %1846 = vmatpush.msra.mxu0 0.0
    %1847 = vmatpush.msra.mxu0 0.0
    %1848 = vmatpush.msra.mxu0 0.0
    %1849 = vmatpush.msra.mxu0 0.0
    %1850 = vmatpush.msra.mxu0 0.0
    %1851 = vmatpush.msra.mxu0 0.0
    %1852 = vmatpush.msra.mxu0 0.0
    %1853 = vmatpush.msra.mxu0 0.0
    %1854 = vmatpush.msra.mxu0 0.0
    %1855 = vmatpush.msra.mxu0 0.0
    %1856 = vmatpush.msra.mxu0 0.0
    %1857 = vmatpush.msra.mxu0 0.0
    %1858 = vmatpush.msra.mxu0 0.0
    %1859 = vmatpush.msra.mxu0 %v1584
    %1860 = vmatpush.msra.mxu0 %v1583
    %1861 = vmatmul.f32.gmra.mxu0 %v656
    %v1862 = vpop.f32.mrf.mxu0
    %v1863 = vadd.f32 0.0, %v1862
    %1864 = vdwg.mxu0
    %1865 = vmatpush.msra.mxu0 0.0
    %1866 = vmatpush.msra.mxu0 0.0
    %1867 = vmatpush.msra.mxu0 0.0
    %1868 = vmatpush.msra.mxu0 0.0
    %1869 = vmatpush.msra.mxu0 0.0
    %1870 = vmatpush.msra.mxu0 0.0
    %1871 = vmatpush.msra.mxu0 0.0
    %1872 = vmatpush.msra.mxu0 0.0
    %1873 = vmatpush.msra.mxu0 0.0
    %1874 = vmatpush.msra.mxu0 0.0
    %1875 = vmatpush.msra.mxu0 0.0
    %1876 = vmatpush.msra.mxu0 0.0
    %1877 = vmatpush.msra.mxu0 0.0
    %1878 = vmatpush.msra.mxu0 0.0
    %1879 = vmatpush.msra.mxu0 %v1582
    %1880 = vmatpush.msra.mxu0 %v1581
    %1881 = vmatmul.f32.gmra.mxu0 %v1412
    %v1882 = vpop.f32.mrf.mxu0
    %v1883 = vadd.f32 %v1863, %v1882
    %1884 = vdwg.mxu0
    %1886 = vrot.lane.b32.xlu0 %v1742, 96
    %v1887 = vpop.permute.xlu0 %1886
    %v1888 = vsel %vm222, %v1887, 0
    %1890 = vmatpush.msra.mxu0 0.0
    %1891 = vmatpush.msra.mxu0 0.0
    %1892 = vmatpush.msra.mxu0 0.0
    %1893 = vmatpush.msra.mxu0 0.0
    %1894 = vmatpush.msra.mxu0 0.0
    %1895 = vmatpush.msra.mxu0 0.0
    %1896 = vmatpush.msra.mxu0 0.0
    %1897 = vmatpush.msra.mxu0 0.0
    %1898 = vmatpush.msra.mxu0 0.0
    %1899 = vmatpush.msra.mxu0 0.0
    %1900 = vmatpush.msra.mxu0 0.0
    %1901 = vmatpush.msra.mxu0 0.0
    %1902 = vmatpush.msra.mxu0 0.0
    %1903 = vmatpush.msra.mxu0 0.0
    %1904 = vmatpush.msra.mxu0 %v1586
    %1905 = vmatpush.msra.mxu0 %v1585
    %1906 = vmatmul.f32.gmra.mxu0 %v1888
    %v1907 = vpop.f32.mrf.mxu0
    %v1908 = vadd.f32 0.0, %v1907
    %1909 = vdwg.mxu0
    %v1910 = vadd.f32 %v1843, %v1908
    %v1911 = vadd.f32 %v1910, %v1703
    %v1912 = vxor.u32 %v1911, 2147483648
    %v1913 = vmul.f32 %v1912, 1.442695
    %v1914 = vpow.pop %v1913
    %v1915 = vadd.f32 %v1914, 1.0
    %v1916 = vrcp.pop %v1915
    %v1917 = vmul.f32 %v1915, %v1916
    %v1918 = vsub.f32 1.0, %v1917
    %v1919 = vmul.f32 %v1916, %v1918
    %v1920 = vadd.f32 %v1916, %v1919
    %vm1921 = vweird.f32 %v1915
    %vm1922 = vweird.f32 %v1916
    %vm1923 = vmor %vm1921, %vm1922
    %v1924 = vsel %vm1923, %v1916, %v1920
    %v1925 = vand.u32 2147483647, %v1915
    %vm1926 = vcmp.eq.f32.partialorder %v1925, 8.507059e+37
    %v1927 = vand.u32 %v1915, 2147483648
    %v1928 = vor.u32 1.1754944e-38, %v1927
    %v1929 = vsel %vm1926, %v1928, %v1924
    %v1930 = vmul.f32 1.0, %v1929
    %v1931 = vtanh.pop %v1911
    %v1932 = vmul.f32 %v1930, %v1736
    %1934 = vrot.lane.b32.xlu0 %v1931, 80
    %v1935 = vpop.permute.xlu0 %1934
    %v1937 = vmul.f32 %v1930, %v1935
    %1939 = vrot.lane.b32.xlu0 %v1937, 16
    %v1940 = vpop.permute.xlu0 %1939
    %v1942 = vadd.f32 %v1932, %v1940
    %v1943 = vtanh.pop %v1942
    %1945 = vrot.lane.b32.xlu0 %v1943, 16
    %v1946 = vpop.permute.xlu0 %1945
    %v1948 = vmul.f32 %v1930, %v1946
    %1950 = vrot.lane.b32.xlu0 %v1804, 96
    %v1951 = vpop.permute.xlu0 %1950
    %v1952 = vsel %vm222, %v1951, 0
    %1954 = vmatpush.msra.mxu0 0.0
    %1955 = vmatpush.msra.mxu0 0.0
    %1956 = vmatpush.msra.mxu0 0.0
    %1957 = vmatpush.msra.mxu0 0.0
    %1958 = vmatpush.msra.mxu0 0.0
    %1959 = vmatpush.msra.mxu0 0.0
    %1960 = vmatpush.msra.mxu0 0.0
    %1961 = vmatpush.msra.mxu0 0.0
    %1962 = vmatpush.msra.mxu0 0.0
    %1963 = vmatpush.msra.mxu0 0.0
    %1964 = vmatpush.msra.mxu0 0.0
    %1965 = vmatpush.msra.mxu0 0.0
    %1966 = vmatpush.msra.mxu0 0.0
    %1967 = vmatpush.msra.mxu0 0.0
    %1968 = vmatpush.msra.mxu0 %v1588
    %1969 = vmatpush.msra.mxu0 %v1587
    %1970 = vmatmul.f32.gmra.mxu0 %v1952
    %v1971 = vpop.f32.mrf.mxu0
    %v1972 = vadd.f32 0.0, %v1971
    %1973 = vdwg.mxu0
    %v1974 = vadd.f32 %v1883, %v1972
    %v1975 = vadd.f32 %v1974, %v1765
    %v1976 = vxor.u32 %v1975, 2147483648
    %v1977 = vmul.f32 %v1976, 1.442695
    %v1978 = vpow.pop %v1977
    %v1979 = vadd.f32 %v1978, 1.0
    %v1980 = vrcp.pop %v1979
    %v1981 = vmul.f32 %v1979, %v1980
    %v1982 = vsub.f32 1.0, %v1981
    %v1983 = vmul.f32 %v1980, %v1982
    %v1984 = vadd.f32 %v1980, %v1983
    %vm1985 = vweird.f32 %v1979
    %vm1986 = vweird.f32 %v1980
    %vm1987 = vmor %vm1985, %vm1986
    %v1988 = vsel %vm1987, %v1980, %v1984
    %v1989 = vand.u32 2147483647, %v1979
    %vm1990 = vcmp.eq.f32.partialorder %v1989, 8.507059e+37
    %v1991 = vand.u32 %v1979, 2147483648
    %v1992 = vor.u32 1.1754944e-38, %v1991
    %v1993 = vsel %vm1990, %v1992, %v1988
    %v1994 = vmul.f32 1.0, %v1993
    %v1995 = vtanh.pop %v1975
    %v1996 = vmul.f32 %v1994, %v1798
    %1998 = vrot.lane.b32.xlu0 %v1995, 80
    %v1999 = vpop.permute.xlu0 %1998
    %v2001 = vmul.f32 %v1994, %v1999
    %2003 = vrot.lane.b32.xlu0 %v2001, 16
    %v2004 = vpop.permute.xlu0 %2003
    %v2006 = vadd.f32 %v1996, %v2004
    %v2007 = vtanh.pop %v2006
    %2009 = vrot.lane.b32.xlu0 %v2007, 16
    %v2010 = vpop.permute.xlu0 %2009
    %v2012 = vmul.f32 %v1994, %v2010
    %2013 = vmatpush.msra.mxu0 0.0
    %2014 = vmatpush.msra.mxu0 0.0
    %2015 = vmatpush.msra.mxu0 0.0
    %2016 = vmatpush.msra.mxu0 0.0
    %2017 = vmatpush.msra.mxu0 0.0
    %2018 = vmatpush.msra.mxu0 0.0
    %2019 = vmatpush.msra.mxu0 0.0
    %2020 = vmatpush.msra.mxu0 0.0
    %2021 = vmatpush.msra.mxu0 0.0
    %2022 = vmatpush.msra.mxu0 0.0
    %2023 = vmatpush.msra.mxu0 0.0
    %2024 = vmatpush.msra.mxu0 0.0
    %2025 = vmatpush.msra.mxu0 0.0
    %2026 = vmatpush.msra.mxu0 0.0
    %2027 = vmatpush.msra.mxu0 %v1580
    %2028 = vmatpush.msra.mxu0 %v1579
    %2029 = vmatmul.f32.gmra.mxu0 %v1329
    %v2030 = vpop.f32.mrf.mxu0
    %v2031 = vadd.f32 0.0, %v2030
    %2032 = vdwg.mxu0
    %2033 = vmatpush.msra.mxu0 0.0
    %2034 = vmatpush.msra.mxu0 0.0
    %2035 = vmatpush.msra.mxu0 0.0
    %2036 = vmatpush.msra.mxu0 0.0
    %2037 = vmatpush.msra.mxu0 0.0
    %2038 = vmatpush.msra.mxu0 0.0
    %2039 = vmatpush.msra.mxu0 0.0
    %2040 = vmatpush.msra.mxu0 0.0
    %2041 = vmatpush.msra.mxu0 0.0
    %2042 = vmatpush.msra.mxu0 0.0
    %2043 = vmatpush.msra.mxu0 0.0
    %2044 = vmatpush.msra.mxu0 0.0
    %2045 = vmatpush.msra.mxu0 0.0
    %2046 = vmatpush.msra.mxu0 0.0
    %2047 = vmatpush.msra.mxu0 %v1578
    %2048 = vmatpush.msra.mxu0 %v1577
    %2049 = vmatmul.f32.gmra.mxu0 %v742
    %v2050 = vpop.f32.mrf.mxu0
    %v2051 = vadd.f32 %v2031, %v2050
    %2052 = vdwg.mxu0
    %2053 = vmatpush.msra.mxu0 0.0
    %2054 = vmatpush.msra.mxu0 0.0
    %2055 = vmatpush.msra.mxu0 0.0
    %2056 = vmatpush.msra.mxu0 0.0
    %2057 = vmatpush.msra.mxu0 0.0
    %2058 = vmatpush.msra.mxu0 0.0
    %2059 = vmatpush.msra.mxu0 0.0
    %2060 = vmatpush.msra.mxu0 0.0
    %2061 = vmatpush.msra.mxu0 0.0
    %2062 = vmatpush.msra.mxu0 0.0
    %2063 = vmatpush.msra.mxu0 0.0
    %2064 = vmatpush.msra.mxu0 0.0
    %2065 = vmatpush.msra.mxu0 0.0
    %2066 = vmatpush.msra.mxu0 0.0
    %2067 = vmatpush.msra.mxu0 %v1584
    %2068 = vmatpush.msra.mxu0 %v1583
    %2069 = vmatmul.f32.gmra.mxu0 %v828
    %v2070 = vpop.f32.mrf.mxu0
    %v2071 = vadd.f32 0.0, %v2070
    %2072 = vdwg.mxu0
    %2073 = vmatpush.msra.mxu0 0.0
    %2074 = vmatpush.msra.mxu0 0.0
    %2075 = vmatpush.msra.mxu0 0.0
    %2076 = vmatpush.msra.mxu0 0.0
    %2077 = vmatpush.msra.mxu0 0.0
    %2078 = vmatpush.msra.mxu0 0.0
    %2079 = vmatpush.msra.mxu0 0.0
    %2080 = vmatpush.msra.mxu0 0.0
    %2081 = vmatpush.msra.mxu0 0.0
    %2082 = vmatpush.msra.mxu0 0.0
    %2083 = vmatpush.msra.mxu0 0.0
    %2084 = vmatpush.msra.mxu0 0.0
    %2085 = vmatpush.msra.mxu0 0.0
    %2086 = vmatpush.msra.mxu0 0.0
    %2087 = vmatpush.msra.mxu0 %v1582
    %2088 = vmatpush.msra.mxu0 %v1581
    %2089 = vmatmul.f32.gmra.mxu0 %v1246
    %v2090 = vpop.f32.mrf.mxu0
    %v2091 = vadd.f32 %v2071, %v2090
    %2092 = vdwg.mxu0
    %2094 = vrot.lane.b32.xlu0 %v1948, 96
    %v2095 = vpop.permute.xlu0 %2094
    %v2096 = vsel %vm222, %v2095, 0
    %2098 = vmatpush.msra.mxu0 0.0
    %2099 = vmatpush.msra.mxu0 0.0
    %2100 = vmatpush.msra.mxu0 0.0
    %2101 = vmatpush.msra.mxu0 0.0
    %2102 = vmatpush.msra.mxu0 0.0
    %2103 = vmatpush.msra.mxu0 0.0
    %2104 = vmatpush.msra.mxu0 0.0
    %2105 = vmatpush.msra.mxu0 0.0
    %2106 = vmatpush.msra.mxu0 0.0
    %2107 = vmatpush.msra.mxu0 0.0
    %2108 = vmatpush.msra.mxu0 0.0
    %2109 = vmatpush.msra.mxu0 0.0
    %2110 = vmatpush.msra.mxu0 0.0
    %2111 = vmatpush.msra.mxu0 0.0
    %2112 = vmatpush.msra.mxu0 %v1586
    %2113 = vmatpush.msra.mxu0 %v1585
    %2114 = vmatmul.f32.gmra.mxu0 %v2096
    %v2115 = vpop.f32.mrf.mxu0
    %v2116 = vadd.f32 0.0, %v2115
    %2117 = vdwg.mxu0
    %v2118 = vadd.f32 %v2051, %v2116
    %v2119 = vadd.f32 %v2118, %v1703
    %v2120 = vxor.u32 %v2119, 2147483648
    %v2121 = vmul.f32 %v2120, 1.442695
    %v2122 = vpow.pop %v2121
    %v2123 = vadd.f32 %v2122, 1.0
    %v2124 = vrcp.pop %v2123
    %v2125 = vmul.f32 %v2123, %v2124
    %v2126 = vsub.f32 1.0, %v2125
    %v2127 = vmul.f32 %v2124, %v2126
    %v2128 = vadd.f32 %v2124, %v2127
    %vm2129 = vweird.f32 %v2123
    %vm2130 = vweird.f32 %v2124
    %vm2131 = vmor %vm2129, %vm2130
    %v2132 = vsel %vm2131, %v2124, %v2128
    %v2133 = vand.u32 2147483647, %v2123
    %vm2134 = vcmp.eq.f32.partialorder %v2133, 8.507059e+37
    %v2135 = vand.u32 %v2123, 2147483648
    %v2136 = vor.u32 1.1754944e-38, %v2135
    %v2137 = vsel %vm2134, %v2136, %v2132
    %v2138 = vmul.f32 1.0, %v2137
    %v2139 = vtanh.pop %v2119
    %v2140 = vmul.f32 %v2138, %v1942
    %2142 = vrot.lane.b32.xlu0 %v2139, 80
    %v2143 = vpop.permute.xlu0 %2142
    %v2145 = vmul.f32 %v2138, %v2143
    %2147 = vrot.lane.b32.xlu0 %v2145, 16
    %v2148 = vpop.permute.xlu0 %2147
    %v2150 = vadd.f32 %v2140, %v2148
    %v2151 = vtanh.pop %v2150
    %2153 = vrot.lane.b32.xlu0 %v2151, 16
    %v2154 = vpop.permute.xlu0 %2153
    %v2156 = vmul.f32 %v2138, %v2154
    %2158 = vrot.lane.b32.xlu0 %v2012, 96
    %v2159 = vpop.permute.xlu0 %2158
    %v2160 = vsel %vm222, %v2159, 0
    %2162 = vmatpush.msra.mxu0 0.0
    %2163 = vmatpush.msra.mxu0 0.0
    %2164 = vmatpush.msra.mxu0 0.0
    %2165 = vmatpush.msra.mxu0 0.0
    %2166 = vmatpush.msra.mxu0 0.0
    %2167 = vmatpush.msra.mxu0 0.0
    %2168 = vmatpush.msra.mxu0 0.0
    %2169 = vmatpush.msra.mxu0 0.0
    %2170 = vmatpush.msra.mxu0 0.0
    %2171 = vmatpush.msra.mxu0 0.0
    %2172 = vmatpush.msra.mxu0 0.0
    %2173 = vmatpush.msra.mxu0 0.0
    %2174 = vmatpush.msra.mxu0 0.0
    %2175 = vmatpush.msra.mxu0 0.0
    %2176 = vmatpush.msra.mxu0 %v1588
    %2177 = vmatpush.msra.mxu0 %v1587
    %2178 = vmatmul.f32.gmra.mxu0 %v2160
    %v2179 = vpop.f32.mrf.mxu0
    %v2180 = vadd.f32 0.0, %v2179
    %2181 = vdwg.mxu0
    %v2182 = vadd.f32 %v2091, %v2180
    %v2183 = vadd.f32 %v2182, %v1765
    %v2184 = vxor.u32 %v2183, 2147483648
    %v2185 = vmul.f32 %v2184, 1.442695
    %v2186 = vpow.pop %v2185
    %v2187 = vadd.f32 %v2186, 1.0
    %v2188 = vrcp.pop %v2187
    %v2189 = vmul.f32 %v2187, %v2188
    %v2190 = vsub.f32 1.0, %v2189
    %v2191 = vmul.f32 %v2188, %v2190
    %v2192 = vadd.f32 %v2188, %v2191
    %vm2193 = vweird.f32 %v2187
    %vm2194 = vweird.f32 %v2188
    %vm2195 = vmor %vm2193, %vm2194
    %v2196 = vsel %vm2195, %v2188, %v2192
    %v2197 = vand.u32 2147483647, %v2187
    %vm2198 = vcmp.eq.f32.partialorder %v2197, 8.507059e+37
    %v2199 = vand.u32 %v2187, 2147483648
    %v2200 = vor.u32 1.1754944e-38, %v2199
    %v2201 = vsel %vm2198, %v2200, %v2196
    %v2202 = vmul.f32 1.0, %v2201
    %v2203 = vtanh.pop %v2183
    %v2204 = vmul.f32 %v2202, %v2006
    %2206 = vrot.lane.b32.xlu0 %v2203, 80
    %v2207 = vpop.permute.xlu0 %2206
    %v2209 = vmul.f32 %v2202, %v2207
    %2211 = vrot.lane.b32.xlu0 %v2209, 16
    %v2212 = vpop.permute.xlu0 %2211
    %v2214 = vadd.f32 %v2204, %v2212
    %v2215 = vtanh.pop %v2214
    %2217 = vrot.lane.b32.xlu0 %v2215, 16
    %v2218 = vpop.permute.xlu0 %2217
    %v2220 = vmul.f32 %v2202, %v2218
    %2221 = vmatpush.msra.mxu0 0.0
    %2222 = vmatpush.msra.mxu0 0.0
    %2223 = vmatpush.msra.mxu0 0.0
    %2224 = vmatpush.msra.mxu0 0.0
    %2225 = vmatpush.msra.mxu0 0.0
    %2226 = vmatpush.msra.mxu0 0.0
    %2227 = vmatpush.msra.mxu0 0.0
    %2228 = vmatpush.msra.mxu0 0.0
    %2229 = vmatpush.msra.mxu0 0.0
    %2230 = vmatpush.msra.mxu0 0.0
    %2231 = vmatpush.msra.mxu0 0.0
    %2232 = vmatpush.msra.mxu0 0.0
    %2233 = vmatpush.msra.mxu0 0.0
    %2234 = vmatpush.msra.mxu0 0.0
    %2235 = vmatpush.msra.mxu0 %v1580
    %2236 = vmatpush.msra.mxu0 %v1579
    %2237 = vmatmul.f32.gmra.mxu0 %v1163
    %v2238 = vpop.f32.mrf.mxu0
    %v2239 = vadd.f32 0.0, %v2238
    %2240 = vdwg.mxu0
    %2241 = vmatpush.msra.mxu0 0.0
    %2242 = vmatpush.msra.mxu0 0.0
    %2243 = vmatpush.msra.mxu0 0.0
    %2244 = vmatpush.msra.mxu0 0.0
    %2245 = vmatpush.msra.mxu0 0.0
    %2246 = vmatpush.msra.mxu0 0.0
    %2247 = vmatpush.msra.mxu0 0.0
    %2248 = vmatpush.msra.mxu0 0.0
    %2249 = vmatpush.msra.mxu0 0.0
    %2250 = vmatpush.msra.mxu0 0.0
    %2251 = vmatpush.msra.mxu0 0.0
    %2252 = vmatpush.msra.mxu0 0.0
    %2253 = vmatpush.msra.mxu0 0.0
    %2254 = vmatpush.msra.mxu0 0.0
    %2255 = vmatpush.msra.mxu0 %v1578
    %2256 = vmatpush.msra.mxu0 %v1577
    %2257 = vmatmul.f32.gmra.mxu0 %v914
    %v2258 = vpop.f32.mrf.mxu0
    %v2259 = vadd.f32 %v2239, %v2258
    %2260 = vdwg.mxu0
    %2261 = vmatpush.msra.mxu0 0.0
    %2262 = vmatpush.msra.mxu0 0.0
    %2263 = vmatpush.msra.mxu0 0.0
    %2264 = vmatpush.msra.mxu0 0.0
    %2265 = vmatpush.msra.mxu0 0.0
    %2266 = vmatpush.msra.mxu0 0.0
    %2267 = vmatpush.msra.mxu0 0.0
    %2268 = vmatpush.msra.mxu0 0.0
    %2269 = vmatpush.msra.mxu0 0.0
    %2270 = vmatpush.msra.mxu0 0.0
    %2271 = vmatpush.msra.mxu0 0.0
    %2272 = vmatpush.msra.mxu0 0.0
    %2273 = vmatpush.msra.mxu0 0.0
    %2274 = vmatpush.msra.mxu0 0.0
    %2275 = vmatpush.msra.mxu0 %v1584
    %2276 = vmatpush.msra.mxu0 %v1583
    %2277 = vmatmul.f32.gmra.mxu0 %v997
    %v2278 = vpop.f32.mrf.mxu0
    %v2279 = vadd.f32 0.0, %v2278
    %2280 = vdwg.mxu0
    %2281 = vmatpush.msra.mxu0 0.0
    %2282 = vmatpush.msra.mxu0 0.0
    %2283 = vmatpush.msra.mxu0 0.0
    %2284 = vmatpush.msra.mxu0 0.0
    %2285 = vmatpush.msra.mxu0 0.0
    %2286 = vmatpush.msra.mxu0 0.0
    %2287 = vmatpush.msra.mxu0 0.0
    %2288 = vmatpush.msra.mxu0 0.0
    %2289 = vmatpush.msra.mxu0 0.0
    %2290 = vmatpush.msra.mxu0 0.0
    %2291 = vmatpush.msra.mxu0 0.0
    %2292 = vmatpush.msra.mxu0 0.0
    %2293 = vmatpush.msra.mxu0 0.0
    %2294 = vmatpush.msra.mxu0 0.0
    %2295 = vmatpush.msra.mxu0 %v1582
    %2296 = vmatpush.msra.mxu0 %v1581
    %2297 = vmatmul.f32.gmra.mxu0 %v1080
    %v2298 = vpop.f32.mrf.mxu0
    %v2299 = vadd.f32 %v2279, %v2298
    %2300 = vdwg.mxu0
    %2302 = vrot.lane.b32.xlu0 %v2156, 96
    %v2303 = vpop.permute.xlu0 %2302
    %v2304 = vsel %vm222, %v2303, 0
    %2306 = vmatpush.msra.mxu0 0.0
    %2307 = vmatpush.msra.mxu0 0.0
    %2308 = vmatpush.msra.mxu0 0.0
    %2309 = vmatpush.msra.mxu0 0.0
    %2310 = vmatpush.msra.mxu0 0.0
    %2311 = vmatpush.msra.mxu0 0.0
    %2312 = vmatpush.msra.mxu0 0.0
    %2313 = vmatpush.msra.mxu0 0.0
    %2314 = vmatpush.msra.mxu0 0.0
    %2315 = vmatpush.msra.mxu0 0.0
    %2316 = vmatpush.msra.mxu0 0.0
    %2317 = vmatpush.msra.mxu0 0.0
    %2318 = vmatpush.msra.mxu0 0.0
    %2319 = vmatpush.msra.mxu0 0.0
    %2320 = vmatpush.msra.mxu0 %v1586
    %2321 = vmatpush.msra.mxu0 %v1585
    %2322 = vmatmul.f32.gmra.mxu0 %v2304
    %v2323 = vpop.f32.mrf.mxu0
    %v2324 = vadd.f32 0.0, %v2323
    %2325 = vdwg.mxu0
    %v2326 = vadd.f32 %v2259, %v2324
    %v2327 = vadd.f32 %v2326, %v1703
    %v2328 = vxor.u32 %v2327, 2147483648
    %v2329 = vmul.f32 %v2328, 1.442695
    %v2330 = vpow.pop %v2329
    %v2331 = vadd.f32 %v2330, 1.0
    %v2332 = vrcp.pop %v2331
    %v2333 = vmul.f32 %v2331, %v2332
    %v2334 = vsub.f32 1.0, %v2333
    %v2335 = vmul.f32 %v2332, %v2334
    %v2336 = vadd.f32 %v2332, %v2335
    %vm2337 = vweird.f32 %v2331
    %vm2338 = vweird.f32 %v2332
    %vm2339 = vmor %vm2337, %vm2338
    %v2340 = vsel %vm2339, %v2332, %v2336
    %v2341 = vand.u32 2147483647, %v2331
    %vm2342 = vcmp.eq.f32.partialorder %v2341, 8.507059e+37
    %v2343 = vand.u32 %v2331, 2147483648
    %v2344 = vor.u32 1.1754944e-38, %v2343
    %v2345 = vsel %vm2342, %v2344, %v2340
    %v2346 = vmul.f32 1.0, %v2345
    %v2347 = vtanh.pop %v2327
    %v2348 = vmul.f32 %v2346, %v2150
    %2350 = vrot.lane.b32.xlu0 %v2347, 80
    %v2351 = vpop.permute.xlu0 %2350
    %v2353 = vmul.f32 %v2346, %v2351
    %2355 = vrot.lane.b32.xlu0 %v2353, 16
    %v2356 = vpop.permute.xlu0 %2355
    %v2358 = vadd.f32 %v2348, %v2356
    %v2359 = vtanh.pop %v2358
    %2361 = vrot.lane.b32.xlu0 %v2359, 16
    %v2362 = vpop.permute.xlu0 %2361
    %v2364 = vmul.f32 %v2346, %v2362
    %2366 = vrot.lane.b32.xlu0 %v2220, 96
    %v2367 = vpop.permute.xlu0 %2366
    %v2368 = vsel %vm222, %v2367, 0
    %2370 = vmatpush.msra.mxu0 0.0
    %2371 = vmatpush.msra.mxu0 0.0
    %2372 = vmatpush.msra.mxu0 0.0
    %2373 = vmatpush.msra.mxu0 0.0
    %2374 = vmatpush.msra.mxu0 0.0
    %2375 = vmatpush.msra.mxu0 0.0
    %2376 = vmatpush.msra.mxu0 0.0
    %2377 = vmatpush.msra.mxu0 0.0
    %2378 = vmatpush.msra.mxu0 0.0
    %2379 = vmatpush.msra.mxu0 0.0
    %2380 = vmatpush.msra.mxu0 0.0
    %2381 = vmatpush.msra.mxu0 0.0
    %2382 = vmatpush.msra.mxu0 0.0
    %2383 = vmatpush.msra.mxu0 0.0
    %2384 = vmatpush.msra.mxu0 %v1588
    %2385 = vmatpush.msra.mxu0 %v1587
    %2386 = vmatmul.f32.gmra.mxu0 %v2368
    %v2387 = vpop.f32.mrf.mxu0
    %v2388 = vadd.f32 0.0, %v2387
    %2389 = vdwg.mxu0
    %v2390 = vadd.f32 %v2299, %v2388
    %v2391 = vadd.f32 %v2390, %v1765
    %v2392 = vxor.u32 %v2391, 2147483648
    %v2393 = vmul.f32 %v2392, 1.442695
    %v2394 = vpow.pop %v2393
    %v2395 = vadd.f32 %v2394, 1.0
    %v2396 = vrcp.pop %v2395
    %v2397 = vmul.f32 %v2395, %v2396
    %v2398 = vsub.f32 1.0, %v2397
    %v2399 = vmul.f32 %v2396, %v2398
    %v2400 = vadd.f32 %v2396, %v2399
    %vm2401 = vweird.f32 %v2395
    %vm2402 = vweird.f32 %v2396
    %vm2403 = vmor %vm2401, %vm2402
    %v2404 = vsel %vm2403, %v2396, %v2400
    %v2405 = vand.u32 2147483647, %v2395
    %vm2406 = vcmp.eq.f32.partialorder %v2405, 8.507059e+37
    %v2407 = vand.u32 %v2395, 2147483648
    %v2408 = vor.u32 1.1754944e-38, %v2407
    %v2409 = vsel %vm2406, %v2408, %v2404
    %v2410 = vmul.f32 1.0, %v2409
    %v2411 = vtanh.pop %v2391
    %v2412 = vmul.f32 %v2410, %v2214
    %2414 = vrot.lane.b32.xlu0 %v2411, 80
    %v2415 = vpop.permute.xlu0 %2414
    %v2417 = vmul.f32 %v2410, %v2415
    %2419 = vrot.lane.b32.xlu0 %v2417, 16
    %v2420 = vpop.permute.xlu0 %2419
    %v2422 = vadd.f32 %v2412, %v2420
    %v2423 = vtanh.pop %v2422
    %2425 = vrot.lane.b32.xlu0 %v2423, 16
    %v2426 = vpop.permute.xlu0 %2425
    %v2428 = vmul.f32 %v2410, %v2426
    %2429 = vmatpush.msra.mxu0 0.0
    %2430 = vmatpush.msra.mxu0 0.0
    %2431 = vmatpush.msra.mxu0 0.0
    %2432 = vmatpush.msra.mxu0 0.0
    %2433 = vmatpush.msra.mxu0 0.0
    %2434 = vmatpush.msra.mxu0 0.0
    %2435 = vmatpush.msra.mxu0 0.0
    %2436 = vmatpush.msra.mxu0 0.0
    %2437 = vmatpush.msra.mxu0 0.0
    %2438 = vmatpush.msra.mxu0 0.0
    %2439 = vmatpush.msra.mxu0 0.0
    %2440 = vmatpush.msra.mxu0 0.0
    %2441 = vmatpush.msra.mxu0 0.0
    %2442 = vmatpush.msra.mxu0 0.0
    %2443 = vmatpush.msra.mxu0 %v1580
    %2444 = vmatpush.msra.mxu0 %v1579
    %2445 = vmatmul.f32.gmra.mxu0 %v997
    %v2446 = vpop.f32.mrf.mxu0
    %v2447 = vadd.f32 0.0, %v2446
    %2448 = vdwg.mxu0
    %2449 = vmatpush.msra.mxu0 0.0
    %2450 = vmatpush.msra.mxu0 0.0
    %2451 = vmatpush.msra.mxu0 0.0
    %2452 = vmatpush.msra.mxu0 0.0
    %2453 = vmatpush.msra.mxu0 0.0
    %2454 = vmatpush.msra.mxu0 0.0
    %2455 = vmatpush.msra.mxu0 0.0
    %2456 = vmatpush.msra.mxu0 0.0
    %2457 = vmatpush.msra.mxu0 0.0
    %2458 = vmatpush.msra.mxu0 0.0
    %2459 = vmatpush.msra.mxu0 0.0
    %2460 = vmatpush.msra.mxu0 0.0
    %2461 = vmatpush.msra.mxu0 0.0
    %2462 = vmatpush.msra.mxu0 0.0
    %2463 = vmatpush.msra.mxu0 %v1578
    %2464 = vmatpush.msra.mxu0 %v1577
    %2465 = vmatmul.f32.gmra.mxu0 %v1080
    %v2466 = vpop.f32.mrf.mxu0
    %v2467 = vadd.f32 %v2447, %v2466
    %2468 = vdwg.mxu0
    %2469 = vmatpush.msra.mxu0 0.0
    %2470 = vmatpush.msra.mxu0 0.0
    %2471 = vmatpush.msra.mxu0 0.0
    %2472 = vmatpush.msra.mxu0 0.0
    %2473 = vmatpush.msra.mxu0 0.0
    %2474 = vmatpush.msra.mxu0 0.0
    %2475 = vmatpush.msra.mxu0 0.0
    %2476 = vmatpush.msra.mxu0 0.0
    %2477 = vmatpush.msra.mxu0 0.0
    %2478 = vmatpush.msra.mxu0 0.0
    %2479 = vmatpush.msra.mxu0 0.0
    %2480 = vmatpush.msra.mxu0 0.0
    %2481 = vmatpush.msra.mxu0 0.0
    %2482 = vmatpush.msra.mxu0 0.0
    %2483 = vmatpush.msra.mxu0 %v1584
    %2484 = vmatpush.msra.mxu0 %v1583
    %2485 = vmatmul.f32.gmra.mxu0 %v1163
    %v2486 = vpop.f32.mrf.mxu0
    %v2487 = vadd.f32 0.0, %v2486
    %2488 = vdwg.mxu0
    %2489 = vmatpush.msra.mxu0 0.0
    %2490 = vmatpush.msra.mxu0 0.0
    %2491 = vmatpush.msra.mxu0 0.0
    %2492 = vmatpush.msra.mxu0 0.0
    %2493 = vmatpush.msra.mxu0 0.0
    %2494 = vmatpush.msra.mxu0 0.0
    %2495 = vmatpush.msra.mxu0 0.0
    %2496 = vmatpush.msra.mxu0 0.0
    %2497 = vmatpush.msra.mxu0 0.0
    %2498 = vmatpush.msra.mxu0 0.0
    %2499 = vmatpush.msra.mxu0 0.0
    %2500 = vmatpush.msra.mxu0 0.0
    %2501 = vmatpush.msra.mxu0 0.0
    %2502 = vmatpush.msra.mxu0 0.0
    %2503 = vmatpush.msra.mxu0 %v1582
    %2504 = vmatpush.msra.mxu0 %v1581
    %2505 = vmatmul.f32.gmra.mxu0 %v914
    %v2506 = vpop.f32.mrf.mxu0
    %v2507 = vadd.f32 %v2487, %v2506
    %2508 = vdwg.mxu0
    %2510 = vrot.lane.b32.xlu0 %v2364, 96
    %v2511 = vpop.permute.xlu0 %2510
    %v2512 = vsel %vm222, %v2511, 0
    %2514 = vmatpush.msra.mxu0 0.0
    %2515 = vmatpush.msra.mxu0 0.0
    %2516 = vmatpush.msra.mxu0 0.0
    %2517 = vmatpush.msra.mxu0 0.0
    %2518 = vmatpush.msra.mxu0 0.0
    %2519 = vmatpush.msra.mxu0 0.0
    %2520 = vmatpush.msra.mxu0 0.0
    %2521 = vmatpush.msra.mxu0 0.0
    %2522 = vmatpush.msra.mxu0 0.0
    %2523 = vmatpush.msra.mxu0 0.0
    %2524 = vmatpush.msra.mxu0 0.0
    %2525 = vmatpush.msra.mxu0 0.0
    %2526 = vmatpush.msra.mxu0 0.0
    %2527 = vmatpush.msra.mxu0 0.0
    %2528 = vmatpush.msra.mxu0 %v1586
    %2529 = vmatpush.msra.mxu0 %v1585
    %2530 = vmatmul.f32.gmra.mxu0 %v2512
    %v2531 = vpop.f32.mrf.mxu0
    %v2532 = vadd.f32 0.0, %v2531
    %2533 = vdwg.mxu0
    %v2534 = vadd.f32 %v2467, %v2532
    %v2535 = vadd.f32 %v2534, %v1703
    %v2536 = vxor.u32 %v2535, 2147483648
    %v2537 = vmul.f32 %v2536, 1.442695
    %v2538 = vpow.pop %v2537
    %v2539 = vadd.f32 %v2538, 1.0
    %v2540 = vrcp.pop %v2539
    %v2541 = vmul.f32 %v2539, %v2540
    %v2542 = vsub.f32 1.0, %v2541
    %v2543 = vmul.f32 %v2540, %v2542
    %v2544 = vadd.f32 %v2540, %v2543
    %vm2545 = vweird.f32 %v2539
    %vm2546 = vweird.f32 %v2540
    %vm2547 = vmor %vm2545, %vm2546
    %v2548 = vsel %vm2547, %v2540, %v2544
    %v2549 = vand.u32 2147483647, %v2539
    %vm2550 = vcmp.eq.f32.partialorder %v2549, 8.507059e+37
    %v2551 = vand.u32 %v2539, 2147483648
    %v2552 = vor.u32 1.1754944e-38, %v2551
    %v2553 = vsel %vm2550, %v2552, %v2548
    %v2554 = vmul.f32 1.0, %v2553
    %v2555 = vtanh.pop %v2535
    %v2556 = vmul.f32 %v2554, %v2358
    %2558 = vrot.lane.b32.xlu0 %v2555, 80
    %v2559 = vpop.permute.xlu0 %2558
    %v2561 = vmul.f32 %v2554, %v2559
    %2563 = vrot.lane.b32.xlu0 %v2561, 16
    %v2564 = vpop.permute.xlu0 %2563
    %v2566 = vadd.f32 %v2556, %v2564
    %v2567 = vtanh.pop %v2566
    %2569 = vrot.lane.b32.xlu0 %v2567, 16
    %v2570 = vpop.permute.xlu0 %2569
    %v2572 = vmul.f32 %v2554, %v2570
    %2574 = vrot.lane.b32.xlu0 %v2428, 96
    %v2575 = vpop.permute.xlu0 %2574
    %v2576 = vsel %vm222, %v2575, 0
    %2578 = vmatpush.msra.mxu0 0.0
    %2579 = vmatpush.msra.mxu0 0.0
    %2580 = vmatpush.msra.mxu0 0.0
    %2581 = vmatpush.msra.mxu0 0.0
    %2582 = vmatpush.msra.mxu0 0.0
    %2583 = vmatpush.msra.mxu0 0.0
    %2584 = vmatpush.msra.mxu0 0.0
    %2585 = vmatpush.msra.mxu0 0.0
    %2586 = vmatpush.msra.mxu0 0.0
    %2587 = vmatpush.msra.mxu0 0.0
    %2588 = vmatpush.msra.mxu0 0.0
    %2589 = vmatpush.msra.mxu0 0.0
    %2590 = vmatpush.msra.mxu0 0.0
    %2591 = vmatpush.msra.mxu0 0.0
    %2592 = vmatpush.msra.mxu0 %v1588
    %2593 = vmatpush.msra.mxu0 %v1587
    %2594 = vmatmul.f32.gmra.mxu0 %v2576
    %v2595 = vpop.f32.mrf.mxu0
    %v2596 = vadd.f32 0.0, %v2595
    %2597 = vdwg.mxu0
    %v2598 = vadd.f32 %v2507, %v2596
    %v2599 = vadd.f32 %v2598, %v1765
    %v2600 = vxor.u32 %v2599, 2147483648
    %v2601 = vmul.f32 %v2600, 1.442695
    %v2602 = vpow.pop %v2601
    %v2603 = vadd.f32 %v2602, 1.0
    %v2604 = vrcp.pop %v2603
    %v2605 = vmul.f32 %v2603, %v2604
    %v2606 = vsub.f32 1.0, %v2605
    %v2607 = vmul.f32 %v2604, %v2606
    %v2608 = vadd.f32 %v2604, %v2607
    %vm2609 = vweird.f32 %v2603
    %vm2610 = vweird.f32 %v2604
    %vm2611 = vmor %vm2609, %vm2610
    %v2612 = vsel %vm2611, %v2604, %v2608
    %v2613 = vand.u32 2147483647, %v2603
    %vm2614 = vcmp.eq.f32.partialorder %v2613, 8.507059e+37
    %v2615 = vand.u32 %v2603, 2147483648
    %v2616 = vor.u32 1.1754944e-38, %v2615
    %v2617 = vsel %vm2614, %v2616, %v2612
    %v2618 = vmul.f32 1.0, %v2617
    %v2619 = vtanh.pop %v2599
    %v2620 = vmul.f32 %v2618, %v2422
    %2622 = vrot.lane.b32.xlu0 %v2619, 80
    %v2623 = vpop.permute.xlu0 %2622
    %v2625 = vmul.f32 %v2618, %v2623
    %2627 = vrot.lane.b32.xlu0 %v2625, 16
    %v2628 = vpop.permute.xlu0 %2627
    %v2630 = vadd.f32 %v2620, %v2628
    %v2631 = vtanh.pop %v2630
    %2633 = vrot.lane.b32.xlu0 %v2631, 16
    %v2634 = vpop.permute.xlu0 %2633
    %v2636 = vmul.f32 %v2618, %v2634
    %2637 = vmatpush.msra.mxu0 0.0
    %2638 = vmatpush.msra.mxu0 0.0
    %2639 = vmatpush.msra.mxu0 0.0
    %2640 = vmatpush.msra.mxu0 0.0
    %2641 = vmatpush.msra.mxu0 0.0
    %2642 = vmatpush.msra.mxu0 0.0
    %2643 = vmatpush.msra.mxu0 0.0
    %2644 = vmatpush.msra.mxu0 0.0
    %2645 = vmatpush.msra.mxu0 0.0
    %2646 = vmatpush.msra.mxu0 0.0
    %2647 = vmatpush.msra.mxu0 0.0
    %2648 = vmatpush.msra.mxu0 0.0
    %2649 = vmatpush.msra.mxu0 0.0
    %2650 = vmatpush.msra.mxu0 0.0
    %2651 = vmatpush.msra.mxu0 %v1580
    %2652 = vmatpush.msra.mxu0 %v1579
    %2653 = vmatmul.f32.gmra.mxu0 %v828
    %v2654 = vpop.f32.mrf.mxu0
    %v2655 = vadd.f32 0.0, %v2654
    %2656 = vdwg.mxu0
    %2657 = vmatpush.msra.mxu0 0.0
    %2658 = vmatpush.msra.mxu0 0.0
    %2659 = vmatpush.msra.mxu0 0.0
    %2660 = vmatpush.msra.mxu0 0.0
    %2661 = vmatpush.msra.mxu0 0.0
    %2662 = vmatpush.msra.mxu0 0.0
    %2663 = vmatpush.msra.mxu0 0.0
    %2664 = vmatpush.msra.mxu0 0.0
    %2665 = vmatpush.msra.mxu0 0.0
    %2666 = vmatpush.msra.mxu0 0.0
    %2667 = vmatpush.msra.mxu0 0.0
    %2668 = vmatpush.msra.mxu0 0.0
    %2669 = vmatpush.msra.mxu0 0.0
    %2670 = vmatpush.msra.mxu0 0.0
    %2671 = vmatpush.msra.mxu0 %v1578
    %2672 = vmatpush.msra.mxu0 %v1577
    %2673 = vmatmul.f32.gmra.mxu0 %v1246
    %v2674 = vpop.f32.mrf.mxu0
    %v2675 = vadd.f32 %v2655, %v2674
    %2676 = vdwg.mxu0
    %2677 = vmatpush.msra.mxu0 0.0
    %2678 = vmatpush.msra.mxu0 0.0
    %2679 = vmatpush.msra.mxu0 0.0
    %2680 = vmatpush.msra.mxu0 0.0
    %2681 = vmatpush.msra.mxu0 0.0
    %2682 = vmatpush.msra.mxu0 0.0
    %2683 = vmatpush.msra.mxu0 0.0
    %2684 = vmatpush.msra.mxu0 0.0
    %2685 = vmatpush.msra.mxu0 0.0
    %2686 = vmatpush.msra.mxu0 0.0
    %2687 = vmatpush.msra.mxu0 0.0
    %2688 = vmatpush.msra.mxu0 0.0
    %2689 = vmatpush.msra.mxu0 0.0
    %2690 = vmatpush.msra.mxu0 0.0
    %2691 = vmatpush.msra.mxu0 %v1584
    %2692 = vmatpush.msra.mxu0 %v1583
    %2693 = vmatmul.f32.gmra.mxu0 %v1329
    %v2694 = vpop.f32.mrf.mxu0
    %v2695 = vadd.f32 0.0, %v2694
    %2696 = vdwg.mxu0
    %2697 = vmatpush.msra.mxu0 0.0
    %2698 = vmatpush.msra.mxu0 0.0
    %2699 = vmatpush.msra.mxu0 0.0
    %2700 = vmatpush.msra.mxu0 0.0
    %2701 = vmatpush.msra.mxu0 0.0
    %2702 = vmatpush.msra.mxu0 0.0
    %2703 = vmatpush.msra.mxu0 0.0
    %2704 = vmatpush.msra.mxu0 0.0
    %2705 = vmatpush.msra.mxu0 0.0
    %2706 = vmatpush.msra.mxu0 0.0
    %2707 = vmatpush.msra.mxu0 0.0
    %2708 = vmatpush.msra.mxu0 0.0
    %2709 = vmatpush.msra.mxu0 0.0
    %2710 = vmatpush.msra.mxu0 0.0
    %2711 = vmatpush.msra.mxu0 %v1582
    %2712 = vmatpush.msra.mxu0 %v1581
    %2713 = vmatmul.f32.gmra.mxu0 %v742
    %v2714 = vpop.f32.mrf.mxu0
    %v2715 = vadd.f32 %v2695, %v2714
    %2716 = vdwg.mxu0
    %2718 = vrot.lane.b32.xlu0 %v2572, 96
    %v2719 = vpop.permute.xlu0 %2718
    %v2720 = vsel %vm222, %v2719, 0
    %2722 = vmatpush.msra.mxu0 0.0
    %2723 = vmatpush.msra.mxu0 0.0
    %2724 = vmatpush.msra.mxu0 0.0
    %2725 = vmatpush.msra.mxu0 0.0
    %2726 = vmatpush.msra.mxu0 0.0
    %2727 = vmatpush.msra.mxu0 0.0
    %2728 = vmatpush.msra.mxu0 0.0
    %2729 = vmatpush.msra.mxu0 0.0
    %2730 = vmatpush.msra.mxu0 0.0
    %2731 = vmatpush.msra.mxu0 0.0
    %2732 = vmatpush.msra.mxu0 0.0
    %2733 = vmatpush.msra.mxu0 0.0
    %2734 = vmatpush.msra.mxu0 0.0
    %2735 = vmatpush.msra.mxu0 0.0
    %2736 = vmatpush.msra.mxu0 %v1586
    %2737 = vmatpush.msra.mxu0 %v1585
    %2738 = vmatmul.f32.gmra.mxu0 %v2720
    %v2739 = vpop.f32.mrf.mxu0
    %v2740 = vadd.f32 0.0, %v2739
    %2741 = vdwg.mxu0
    %v2742 = vadd.f32 %v2675, %v2740
    %v2743 = vadd.f32 %v2742, %v1703
    %v2744 = vxor.u32 %v2743, 2147483648
    %v2745 = vmul.f32 %v2744, 1.442695
    %v2746 = vpow.pop %v2745
    %v2747 = vadd.f32 %v2746, 1.0
    %v2748 = vrcp.pop %v2747
    %v2749 = vmul.f32 %v2747, %v2748
    %v2750 = vsub.f32 1.0, %v2749
    %v2751 = vmul.f32 %v2748, %v2750
    %v2752 = vadd.f32 %v2748, %v2751
    %vm2753 = vweird.f32 %v2747
    %vm2754 = vweird.f32 %v2748
    %vm2755 = vmor %vm2753, %vm2754
    %v2756 = vsel %vm2755, %v2748, %v2752
    %v2757 = vand.u32 2147483647, %v2747
    %vm2758 = vcmp.eq.f32.partialorder %v2757, 8.507059e+37
    %v2759 = vand.u32 %v2747, 2147483648
    %v2760 = vor.u32 1.1754944e-38, %v2759
    %v2761 = vsel %vm2758, %v2760, %v2756
    %v2762 = vmul.f32 1.0, %v2761
    %v2763 = vtanh.pop %v2743
    %v2764 = vmul.f32 %v2762, %v2566
    %2766 = vrot.lane.b32.xlu0 %v2763, 80
    %v2767 = vpop.permute.xlu0 %2766
    %v2769 = vmul.f32 %v2762, %v2767
    %2771 = vrot.lane.b32.xlu0 %v2769, 16
    %v2772 = vpop.permute.xlu0 %2771
    %v2774 = vadd.f32 %v2764, %v2772
    %v2775 = vtanh.pop %v2774
    %2777 = vrot.lane.b32.xlu0 %v2775, 16
    %v2778 = vpop.permute.xlu0 %2777
    %v2780 = vmul.f32 %v2762, %v2778
    %2782 = vrot.lane.b32.xlu0 %v2636, 96
    %v2783 = vpop.permute.xlu0 %2782
    %v2784 = vsel %vm222, %v2783, 0
    %2786 = vmatpush.msra.mxu0 0.0
    %2787 = vmatpush.msra.mxu0 0.0
    %2788 = vmatpush.msra.mxu0 0.0
    %2789 = vmatpush.msra.mxu0 0.0
    %2790 = vmatpush.msra.mxu0 0.0
    %2791 = vmatpush.msra.mxu0 0.0
    %2792 = vmatpush.msra.mxu0 0.0
    %2793 = vmatpush.msra.mxu0 0.0
    %2794 = vmatpush.msra.mxu0 0.0
    %2795 = vmatpush.msra.mxu0 0.0
    %2796 = vmatpush.msra.mxu0 0.0
    %2797 = vmatpush.msra.mxu0 0.0
    %2798 = vmatpush.msra.mxu0 0.0
    %2799 = vmatpush.msra.mxu0 0.0
    %2800 = vmatpush.msra.mxu0 %v1588
    %2801 = vmatpush.msra.mxu0 %v1587
    %2802 = vmatmul.f32.gmra.mxu0 %v2784
    %v2803 = vpop.f32.mrf.mxu0
    %v2804 = vadd.f32 0.0, %v2803
    %2805 = vdwg.mxu0
    %v2806 = vadd.f32 %v2715, %v2804
    %v2807 = vadd.f32 %v2806, %v1765
    %v2808 = vxor.u32 %v2807, 2147483648
    %v2809 = vmul.f32 %v2808, 1.442695
    %v2810 = vpow.pop %v2809
    %v2811 = vadd.f32 %v2810, 1.0
    %v2812 = vrcp.pop %v2811
    %v2813 = vmul.f32 %v2811, %v2812
    %v2814 = vsub.f32 1.0, %v2813
    %v2815 = vmul.f32 %v2812, %v2814
    %v2816 = vadd.f32 %v2812, %v2815
    %vm2817 = vweird.f32 %v2811
    %vm2818 = vweird.f32 %v2812
    %vm2819 = vmor %vm2817, %vm2818
    %v2820 = vsel %vm2819, %v2812, %v2816
    %v2821 = vand.u32 2147483647, %v2811
    %vm2822 = vcmp.eq.f32.partialorder %v2821, 8.507059e+37
    %v2823 = vand.u32 %v2811, 2147483648
    %v2824 = vor.u32 1.1754944e-38, %v2823
    %v2825 = vsel %vm2822, %v2824, %v2820
    %v2826 = vmul.f32 1.0, %v2825
    %v2827 = vtanh.pop %v2807
    %v2828 = vmul.f32 %v2826, %v2630
    %2830 = vrot.lane.b32.xlu0 %v2827, 80
    %v2831 = vpop.permute.xlu0 %2830
    %v2833 = vmul.f32 %v2826, %v2831
    %2835 = vrot.lane.b32.xlu0 %v2833, 16
    %v2836 = vpop.permute.xlu0 %2835
    %v2838 = vadd.f32 %v2828, %v2836
    %v2839 = vtanh.pop %v2838
    %2841 = vrot.lane.b32.xlu0 %v2839, 16
    %v2842 = vpop.permute.xlu0 %2841
    %v2844 = vmul.f32 %v2826, %v2842
    %2845 = vmatpush.msra.mxu0 0.0
    %2846 = vmatpush.msra.mxu0 0.0
    %2847 = vmatpush.msra.mxu0 0.0
    %2848 = vmatpush.msra.mxu0 0.0
    %2849 = vmatpush.msra.mxu0 0.0
    %2850 = vmatpush.msra.mxu0 0.0
    %2851 = vmatpush.msra.mxu0 0.0
    %2852 = vmatpush.msra.mxu0 0.0
    %2853 = vmatpush.msra.mxu0 0.0
    %2854 = vmatpush.msra.mxu0 0.0
    %2855 = vmatpush.msra.mxu0 0.0
    %2856 = vmatpush.msra.mxu0 0.0
    %2857 = vmatpush.msra.mxu0 0.0
    %2858 = vmatpush.msra.mxu0 0.0
    %2859 = vmatpush.msra.mxu0 %v1580
    %2860 = vmatpush.msra.mxu0 %v1579
    %2861 = vmatmul.f32.gmra.mxu0 %v656
    %v2862 = vpop.f32.mrf.mxu0
    %v2863 = vadd.f32 0.0, %v2862
    %2864 = vdwg.mxu0
    %2865 = vmatpush.msra.mxu0 0.0
    %2866 = vmatpush.msra.mxu0 0.0
    %2867 = vmatpush.msra.mxu0 0.0
    %2868 = vmatpush.msra.mxu0 0.0
    %2869 = vmatpush.msra.mxu0 0.0
    %2870 = vmatpush.msra.mxu0 0.0
    %2871 = vmatpush.msra.mxu0 0.0
    %2872 = vmatpush.msra.mxu0 0.0
    %2873 = vmatpush.msra.mxu0 0.0
    %2874 = vmatpush.msra.mxu0 0.0
    %2875 = vmatpush.msra.mxu0 0.0
    %2876 = vmatpush.msra.mxu0 0.0
    %2877 = vmatpush.msra.mxu0 0.0
    %2878 = vmatpush.msra.mxu0 0.0
    %2879 = vmatpush.msra.mxu0 %v1578
    %2880 = vmatpush.msra.mxu0 %v1577
    %2881 = vmatmul.f32.gmra.mxu0 %v1412
    %v2882 = vpop.f32.mrf.mxu0
    %v2883 = vadd.f32 %v2863, %v2882
    %2884 = vdwg.mxu0
    %2885 = vmatpush.msra.mxu0 0.0
    %2886 = vmatpush.msra.mxu0 0.0
    %2887 = vmatpush.msra.mxu0 0.0
    %2888 = vmatpush.msra.mxu0 0.0
    %2889 = vmatpush.msra.mxu0 0.0
    %2890 = vmatpush.msra.mxu0 0.0
    %2891 = vmatpush.msra.mxu0 0.0
    %2892 = vmatpush.msra.mxu0 0.0
    %2893 = vmatpush.msra.mxu0 0.0
    %2894 = vmatpush.msra.mxu0 0.0
    %2895 = vmatpush.msra.mxu0 0.0
    %2896 = vmatpush.msra.mxu0 0.0
    %2897 = vmatpush.msra.mxu0 0.0
    %2898 = vmatpush.msra.mxu0 0.0
    %2899 = vmatpush.msra.mxu0 %v1584
    %2900 = vmatpush.msra.mxu0 %v1583
    %2901 = vmatmul.f32.gmra.mxu0 %v1495
    %v2902 = vpop.f32.mrf.mxu0
    %v2903 = vadd.f32 0.0, %v2902
    %2904 = vdwg.mxu0
    %2905 = vmatpush.msra.mxu0 0.0
    %2906 = vmatpush.msra.mxu0 0.0
    %2907 = vmatpush.msra.mxu0 0.0
    %2908 = vmatpush.msra.mxu0 0.0
    %2909 = vmatpush.msra.mxu0 0.0
    %2910 = vmatpush.msra.mxu0 0.0
    %2911 = vmatpush.msra.mxu0 0.0
    %2912 = vmatpush.msra.mxu0 0.0
    %2913 = vmatpush.msra.mxu0 0.0
    %2914 = vmatpush.msra.mxu0 0.0
    %2915 = vmatpush.msra.mxu0 0.0
    %2916 = vmatpush.msra.mxu0 0.0
    %2917 = vmatpush.msra.mxu0 0.0
    %2918 = vmatpush.msra.mxu0 0.0
    %2919 = vmatpush.msra.mxu0 %v1582
    %2920 = vmatpush.msra.mxu0 %v1581
    %2921 = vmatmul.f32.gmra.mxu0 %v570
    %v2922 = vpop.f32.mrf.mxu0
    %v2923 = vadd.f32 %v2903, %v2922
    %2924 = vdwg.mxu0
    %2926 = vrot.lane.b32.xlu0 %v2780, 96
    %v2927 = vpop.permute.xlu0 %2926
    %v2928 = vsel %vm222, %v2927, 0
    %2930 = vmatpush.msra.mxu0 0.0
    %2931 = vmatpush.msra.mxu0 0.0
    %2932 = vmatpush.msra.mxu0 0.0
    %2933 = vmatpush.msra.mxu0 0.0
    %2934 = vmatpush.msra.mxu0 0.0
    %2935 = vmatpush.msra.mxu0 0.0
    %2936 = vmatpush.msra.mxu0 0.0
    %2937 = vmatpush.msra.mxu0 0.0
    %2938 = vmatpush.msra.mxu0 0.0
    %2939 = vmatpush.msra.mxu0 0.0
    %2940 = vmatpush.msra.mxu0 0.0
    %2941 = vmatpush.msra.mxu0 0.0
    %2942 = vmatpush.msra.mxu0 0.0
    %2943 = vmatpush.msra.mxu0 0.0
    %2944 = vmatpush.msra.mxu0 %v1586
    %2945 = vmatpush.msra.mxu0 %v1585
    %2946 = vmatmul.f32.gmra.mxu0 %v2928
    %v2947 = vpop.f32.mrf.mxu0
    %v2948 = vadd.f32 0.0, %v2947
    %2949 = vdwg.mxu0
    %v2950 = vadd.f32 %v2883, %v2948
    %v2951 = vadd.f32 %v2950, %v1703
    %v2952 = vxor.u32 %v2951, 2147483648
    %v2953 = vmul.f32 %v2952, 1.442695
    %v2954 = vpow.pop %v2953
    %v2955 = vadd.f32 %v2954, 1.0
    %v2956 = vrcp.pop %v2955
    %v2957 = vmul.f32 %v2955, %v2956
    %v2958 = vsub.f32 1.0, %v2957
    %v2959 = vmul.f32 %v2956, %v2958
    %v2960 = vadd.f32 %v2956, %v2959
    %vm2961 = vweird.f32 %v2955
    %vm2962 = vweird.f32 %v2956
    %vm2963 = vmor %vm2961, %vm2962
    %v2964 = vsel %vm2963, %v2956, %v2960
    %v2965 = vand.u32 2147483647, %v2955
    %vm2966 = vcmp.eq.f32.partialorder %v2965, 8.507059e+37
    %v2967 = vand.u32 %v2955, 2147483648
    %v2968 = vor.u32 1.1754944e-38, %v2967
    %v2969 = vsel %vm2966, %v2968, %v2964
    %v2970 = vmul.f32 1.0, %v2969
    %v2971 = vtanh.pop %v2951
    %v2972 = vmul.f32 %v2970, %v2774
    %2974 = vrot.lane.b32.xlu0 %v2971, 80
    %v2975 = vpop.permute.xlu0 %2974
    %v2977 = vmul.f32 %v2970, %v2975
    %2979 = vrot.lane.b32.xlu0 %v2977, 16
    %v2980 = vpop.permute.xlu0 %2979
    %v2982 = vadd.f32 %v2972, %v2980
    %v2983 = vtanh.pop %v2982
    %2985 = vrot.lane.b32.xlu0 %v2983, 16
    %v2986 = vpop.permute.xlu0 %2985
    %v2988 = vmul.f32 %v2970, %v2986
    %2990 = vrot.lane.b32.xlu0 %v2844, 96
    %v2991 = vpop.permute.xlu0 %2990
    %v2992 = vsel %vm222, %v2991, 0
    %2994 = vmatpush.msra.mxu0 0.0
    %2995 = vmatpush.msra.mxu0 0.0
    %2996 = vmatpush.msra.mxu0 0.0
    %2997 = vmatpush.msra.mxu0 0.0
    %2998 = vmatpush.msra.mxu0 0.0
    %2999 = vmatpush.msra.mxu0 0.0
    %3000 = vmatpush.msra.mxu0 0.0
    %3001 = vmatpush.msra.mxu0 0.0
    %3002 = vmatpush.msra.mxu0 0.0
    %3003 = vmatpush.msra.mxu0 0.0
    %3004 = vmatpush.msra.mxu0 0.0
    %3005 = vmatpush.msra.mxu0 0.0
    %3006 = vmatpush.msra.mxu0 0.0
    %3007 = vmatpush.msra.mxu0 0.0
    %3008 = vmatpush.msra.mxu0 %v1588
    %3009 = vmatpush.msra.mxu0 %v1587
    %3010 = vmatmul.f32.gmra.mxu0 %v2992
    %v3011 = vpop.f32.mrf.mxu0
    %v3012 = vadd.f32 0.0, %v3011
    %3013 = vdwg.mxu0
    %v3014 = vadd.f32 %v2923, %v3012
    %v3015 = vadd.f32 %v3014, %v1765
    %v3016 = vxor.u32 %v3015, 2147483648
    %v3017 = vmul.f32 %v3016, 1.442695
    %v3018 = vpow.pop %v3017
    %v3019 = vadd.f32 %v3018, 1.0
    %v3020 = vrcp.pop %v3019
    %v3021 = vmul.f32 %v3019, %v3020
    %v3022 = vsub.f32 1.0, %v3021
    %v3023 = vmul.f32 %v3020, %v3022
    %v3024 = vadd.f32 %v3020, %v3023
    %vm3025 = vweird.f32 %v3019
    %vm3026 = vweird.f32 %v3020
    %vm3027 = vmor %vm3025, %vm3026
    %v3028 = vsel %vm3027, %v3020, %v3024
    %v3029 = vand.u32 2147483647, %v3019
    %vm3030 = vcmp.eq.f32.partialorder %v3029, 8.507059e+37
    %v3031 = vand.u32 %v3019, 2147483648
    %v3032 = vor.u32 1.1754944e-38, %v3031
    %v3033 = vsel %vm3030, %v3032, %v3028
    %v3034 = vmul.f32 1.0, %v3033
    %v3035 = vtanh.pop %v3015
    %v3036 = vmul.f32 %v3034, %v2838
    %3038 = vrot.lane.b32.xlu0 %v3035, 80
    %v3039 = vpop.permute.xlu0 %3038
    %v3041 = vmul.f32 %v3034, %v3039
    %3043 = vrot.lane.b32.xlu0 %v3041, 16
    %v3044 = vpop.permute.xlu0 %3043
    %v3046 = vadd.f32 %v3036, %v3044
    %v3047 = vtanh.pop %v3046
    %3049 = vrot.lane.b32.xlu0 %v3047, 16
    %v3050 = vpop.permute.xlu0 %3049
    %v3052 = vmul.f32 %v3034, %v3050
    %3053 = vmatpush.msra.mxu0 0.0
    %3054 = vmatpush.msra.mxu0 0.0
    %3055 = vmatpush.msra.mxu0 0.0
    %3056 = vmatpush.msra.mxu0 0.0
    %3057 = vmatpush.msra.mxu0 0.0
    %3058 = vmatpush.msra.mxu0 0.0
    %3059 = vmatpush.msra.mxu0 0.0
    %3060 = vmatpush.msra.mxu0 0.0
    %3061 = vmatpush.msra.mxu0 0.0
    %3062 = vmatpush.msra.mxu0 0.0
    %3063 = vmatpush.msra.mxu0 0.0
    %3064 = vmatpush.msra.mxu0 0.0
    %3065 = vmatpush.msra.mxu0 0.0
    %3066 = vmatpush.msra.mxu0 0.0
    %3067 = vmatpush.msra.mxu0 %v1580
    %3068 = vmatpush.msra.mxu0 %v1579
    %3069 = vmatmul.f32.gmra.mxu0 %v484
    %v3070 = vpop.f32.mrf.mxu0
    %v3071 = vadd.f32 0.0, %v3070
    %3072 = vdwg.mxu0
    %3073 = vmatpush.msra.mxu0 0.0
    %3074 = vmatpush.msra.mxu0 0.0
    %3075 = vmatpush.msra.mxu0 0.0
    %3076 = vmatpush.msra.mxu0 0.0
    %3077 = vmatpush.msra.mxu0 0.0
    %3078 = vmatpush.msra.mxu0 0.0
    %3079 = vmatpush.msra.mxu0 0.0
    %3080 = vmatpush.msra.mxu0 0.0
    %3081 = vmatpush.msra.mxu0 0.0
    %3082 = vmatpush.msra.mxu0 0.0
    %3083 = vmatpush.msra.mxu0 0.0
    %3084 = vmatpush.msra.mxu0 0.0
    %3085 = vmatpush.msra.mxu0 0.0
    %3086 = vmatpush.msra.mxu0 0.0
    %3087 = vmatpush.msra.mxu0 %v1578
    %3088 = vmatpush.msra.mxu0 %v1577
    %3089 = vmatmul.f32.gmra.mxu0 %v1659
    %v3090 = vpop.f32.mrf.mxu0
    %v3091 = vadd.f32 %v3071, %v3090
    %3092 = vdwg.mxu0
    %3093 = vmatpush.msra.mxu0 0.0
    %3094 = vmatpush.msra.mxu0 0.0
    %3095 = vmatpush.msra.mxu0 0.0
    %3096 = vmatpush.msra.mxu0 0.0
    %3097 = vmatpush.msra.mxu0 0.0
    %3098 = vmatpush.msra.mxu0 0.0
    %3099 = vmatpush.msra.mxu0 0.0
    %3100 = vmatpush.msra.mxu0 0.0
    %3101 = vmatpush.msra.mxu0 0.0
    %3102 = vmatpush.msra.mxu0 0.0
    %3103 = vmatpush.msra.mxu0 0.0
    %3104 = vmatpush.msra.mxu0 0.0
    %3105 = vmatpush.msra.mxu0 0.0
    %3106 = vmatpush.msra.mxu0 0.0
    %3107 = vmatpush.msra.mxu0 %v1584
    %3108 = vmatpush.msra.mxu0 %v1583
    %3109 = vmatmul.f32.gmra.mxu0 %v1594
    %v3110 = vpop.f32.mrf.mxu0
    %v3111 = vadd.f32 0.0, %v3110
    %3112 = vdwg.mxu0
    %3113 = vmatpush.msra.mxu0 0.0
    %3114 = vmatpush.msra.mxu0 0.0
    %3115 = vmatpush.msra.mxu0 0.0
    %3116 = vmatpush.msra.mxu0 0.0
    %3117 = vmatpush.msra.mxu0 0.0
    %3118 = vmatpush.msra.mxu0 0.0
    %3119 = vmatpush.msra.mxu0 0.0
    %3120 = vmatpush.msra.mxu0 0.0
    %3121 = vmatpush.msra.mxu0 0.0
    %3122 = vmatpush.msra.mxu0 0.0
    %3123 = vmatpush.msra.mxu0 0.0
    %3124 = vmatpush.msra.mxu0 0.0
    %3125 = vmatpush.msra.mxu0 0.0
    %3126 = vmatpush.msra.mxu0 0.0
    %3127 = vmatpush.msra.mxu0 %v1582
    %3128 = vmatpush.msra.mxu0 %v1581
    %3129 = vmatmul.f32.gmra.mxu0 %v398
    %v3130 = vpop.f32.mrf.mxu0
    %v3131 = vadd.f32 %v3111, %v3130
    %3132 = vdwg.mxu0
    %3134 = vrot.lane.b32.xlu0 %v2988, 96
    %v3135 = vpop.permute.xlu0 %3134
    %v3136 = vsel %vm222, %v3135, 0
    %3138 = vmatpush.msra.mxu0 0.0
    %3139 = vmatpush.msra.mxu0 0.0
    %3140 = vmatpush.msra.mxu0 0.0
    %3141 = vmatpush.msra.mxu0 0.0
    %3142 = vmatpush.msra.mxu0 0.0
    %3143 = vmatpush.msra.mxu0 0.0
    %3144 = vmatpush.msra.mxu0 0.0
    %3145 = vmatpush.msra.mxu0 0.0
    %3146 = vmatpush.msra.mxu0 0.0
    %3147 = vmatpush.msra.mxu0 0.0
    %3148 = vmatpush.msra.mxu0 0.0
    %3149 = vmatpush.msra.mxu0 0.0
    %3150 = vmatpush.msra.mxu0 0.0
    %3151 = vmatpush.msra.mxu0 0.0
    %3152 = vmatpush.msra.mxu0 %v1586
    %3153 = vmatpush.msra.mxu0 %v1585
    %3154 = vmatmul.f32.gmra.mxu0 %v3136
    %v3155 = vpop.f32.mrf.mxu0
    %v3156 = vadd.f32 0.0, %v3155
    %3157 = vdwg.mxu0
    %v3158 = vadd.f32 %v3091, %v3156
    %v3159 = vadd.f32 %v3158, %v1703
    %v3160 = vxor.u32 %v3159, 2147483648
    %v3161 = vmul.f32 %v3160, 1.442695
    %v3162 = vpow.pop %v3161
    %v3163 = vadd.f32 %v3162, 1.0
    %v3164 = vrcp.pop %v3163
    %v3165 = vmul.f32 %v3163, %v3164
    %v3166 = vsub.f32 1.0, %v3165
    %v3167 = vmul.f32 %v3164, %v3166
    %v3168 = vadd.f32 %v3164, %v3167
    %vm3169 = vweird.f32 %v3163
    %vm3170 = vweird.f32 %v3164
    %vm3171 = vmor %vm3169, %vm3170
    %v3172 = vsel %vm3171, %v3164, %v3168
    %v3173 = vand.u32 2147483647, %v3163
    %vm3174 = vcmp.eq.f32.partialorder %v3173, 8.507059e+37
    %v3175 = vand.u32 %v3163, 2147483648
    %v3176 = vor.u32 1.1754944e-38, %v3175
    %v3177 = vsel %vm3174, %v3176, %v3172
    %v3178 = vmul.f32 1.0, %v3177
    %v3179 = vtanh.pop %v3159
    %v3180 = vmul.f32 %v3178, %v2982
    %3182 = vrot.lane.b32.xlu0 %v3179, 80
    %v3183 = vpop.permute.xlu0 %3182
    %v3185 = vmul.f32 %v3178, %v3183
    %3187 = vrot.lane.b32.xlu0 %v3185, 16
    %v3188 = vpop.permute.xlu0 %3187
    %v3190 = vadd.f32 %v3180, %v3188
    %v3191 = vtanh.pop %v3190
    %3193 = vrot.lane.b32.xlu0 %v3191, 16
    %v3194 = vpop.permute.xlu0 %3193
    %v3196 = vmul.f32 %v3178, %v3194
    %3198 = vrot.lane.b32.xlu0 %v3052, 96
    %v3199 = vpop.permute.xlu0 %3198
    %v3200 = vsel %vm222, %v3199, 0
    %3202 = vmatpush.msra.mxu0 0.0
    %3203 = vmatpush.msra.mxu0 0.0
    %3204 = vmatpush.msra.mxu0 0.0
    %3205 = vmatpush.msra.mxu0 0.0
    %3206 = vmatpush.msra.mxu0 0.0
    %3207 = vmatpush.msra.mxu0 0.0
    %3208 = vmatpush.msra.mxu0 0.0
    %3209 = vmatpush.msra.mxu0 0.0
    %3210 = vmatpush.msra.mxu0 0.0
    %3211 = vmatpush.msra.mxu0 0.0
    %3212 = vmatpush.msra.mxu0 0.0
    %3213 = vmatpush.msra.mxu0 0.0
    %3214 = vmatpush.msra.mxu0 0.0
    %3215 = vmatpush.msra.mxu0 0.0
    %3216 = vmatpush.msra.mxu0 %v1588
    %3217 = vmatpush.msra.mxu0 %v1587
    %3218 = vmatmul.f32.gmra.mxu0 %v3200
    %v3219 = vpop.f32.mrf.mxu0
    %v3220 = vadd.f32 0.0, %v3219
    %3221 = vdwg.mxu0
    %v3222 = vadd.f32 %v3131, %v3220
    %v3223 = vadd.f32 %v3222, %v1765
    %v3224 = vxor.u32 %v3223, 2147483648
    %v3225 = vmul.f32 %v3224, 1.442695
    %v3226 = vpow.pop %v3225
    %v3227 = vadd.f32 %v3226, 1.0
    %v3228 = vrcp.pop %v3227
    %v3229 = vmul.f32 %v3227, %v3228
    %v3230 = vsub.f32 1.0, %v3229
    %v3231 = vmul.f32 %v3228, %v3230
    %v3232 = vadd.f32 %v3228, %v3231
    %vm3233 = vweird.f32 %v3227
    %vm3234 = vweird.f32 %v3228
    %vm3235 = vmor %vm3233, %vm3234
    %v3236 = vsel %vm3235, %v3228, %v3232
    %v3237 = vand.u32 2147483647, %v3227
    %vm3238 = vcmp.eq.f32.partialorder %v3237, 8.507059e+37
    %v3239 = vand.u32 %v3227, 2147483648
    %v3240 = vor.u32 1.1754944e-38, %v3239
    %v3241 = vsel %vm3238, %v3240, %v3236
    %v3242 = vmul.f32 1.0, %v3241
    %v3243 = vtanh.pop %v3223
    %v3244 = vmul.f32 %v3242, %v3046
    %3246 = vrot.lane.b32.xlu0 %v3243, 80
    %v3247 = vpop.permute.xlu0 %3246
    %v3249 = vmul.f32 %v3242, %v3247
    %3251 = vrot.lane.b32.xlu0 %v3249, 16
    %v3252 = vpop.permute.xlu0 %3251
    %v3254 = vadd.f32 %v3244, %v3252
    %v3255 = vtanh.pop %v3254
    %3257 = vrot.lane.b32.xlu0 %v3255, 16
    %v3258 = vpop.permute.xlu0 %3257
    %v3260 = vmul.f32 %v3242, %v3258
    %v3261 = vadd.f32 %v3196, %v3260
    %v3262 = vadd.f32 %v3190, %v3254
    %v3263 = vld [vmem:[#allocation17] sm:$0xff]
    %v3264 = vld [vmem:[#allocation17 + $0x8] sm:$0xff]
    %v3265 = vld [vmem:[%s16] sm:$0x1]
    %v3266 = vld [vmem:[%s17] sm:$0x1]
    %v3267 = vld [vmem:[#allocation2] sm:$0x1]
    %v3268 = vld [vmem:[#allocation8] sm:$0xff]
    %v3269 = vld [vmem:[#allocation9] sm:$0xff]
    %v3270 = vld [vmem:[#allocation9 + $0x8] sm:$0xff]
    %v3271 = vld [vmem:[#allocation11] sm:$0x1]
    %v3272 = vld [vmem:[#allocation12] sm:$0xff]
    %v3273 = vld [vmem:[#allocation12 + $0x8] sm:$0xff]
    %v3274 = vld [vmem:[#allocation14] sm:$0xff]
    %v3275 = vld [vmem:[#allocation14 + $0x8] sm:$0xff]
    %v3276 = vld [vmem:[#allocation15] sm:$0x1]
    %v3277 = vlaneseq
    %v3278 = vand.u32 %v3277, 127
    %vm3279 = vcmp.eq.s32.totalorder %v3278, 0
    %v3280 = vld [vmem:[%s1] sm:$0x3]
    %3282 = vrot.lane.b32.xlu0 %v1575, 96
    %v3283 = vpop.permute.xlu0 %3282
    %v3284 = vsel %vm222, %v3283, 0
    %3286 = vmatpush.msra.mxu0 0.0
    %3287 = vmatpush.msra.mxu0 0.0
    %3288 = vmatpush.msra.mxu0 0.0
    %3289 = vmatpush.msra.mxu0 0.0
    %3290 = vmatpush.msra.mxu0 0.0
    %3291 = vmatpush.msra.mxu0 0.0
    %3292 = vmatpush.msra.mxu0 0.0
    %3293 = vmatpush.msra.mxu0 0.0
    %3294 = vmatpush.msra.mxu0 0.0
    %3295 = vmatpush.msra.mxu0 0.0
    %3296 = vmatpush.msra.mxu0 0.0
    %3297 = vmatpush.msra.mxu0 0.0
    %3298 = vmatpush.msra.mxu0 0.0
    %3299 = vmatpush.msra.mxu0 0.0
    %3300 = vmatpush.msra.mxu0 %v3270
    %3301 = vmatpush.msra.mxu0 %v3269
    %3302 = vmatmul.f32.gmra.mxu0 %v3284
    %v3303 = vpop.f32.mrf.mxu0
    %v3304 = vadd.f32 0.0, %v3303
    %3305 = vdwg.mxu0
    %v3307 = vsel %vm246, %v3280, 0
    %3309 = vmatpush.msra.mxu0 0.0
    %3310 = vmatpush.msra.mxu0 0.0
    %3311 = vmatpush.msra.mxu0 0.0
    %3312 = vmatpush.msra.mxu0 0.0
    %3313 = vmatpush.msra.mxu0 0.0
    %3314 = vmatpush.msra.mxu0 0.0
    %3315 = vmatpush.msra.mxu0 0.0
    %3316 = vmatpush.msra.mxu0 0.0
    %3317 = vmatpush.msra.mxu0 0.0
    %3318 = vmatpush.msra.mxu0 0.0
    %3319 = vmatpush.msra.mxu0 0.0
    %3320 = vmatpush.msra.mxu0 0.0
    %3321 = vmatpush.msra.mxu0 0.0
    %3322 = vmatpush.msra.mxu0 0.0
    %3323 = vmatpush.msra.mxu0 0.0
    %3324 = vmatpush.msra.mxu0 %v3268
    %3325 = vmatmul.f32.gmra.mxu0 %v3307
    %v3326 = vpop.f32.mrf.mxu0
    %v3327 = vadd.f32 %v3304, %v3326
    %3328 = vdwg.mxu0
    %v3330 = vperm.slane %v3271, 0
    %v3332 = vadd.f32 %v3327, %v3330
    %v3333 = vxor.u32 %v3332, 2147483648
    %v3334 = vmul.f32 %v3333, 1.442695
    %v3335 = vpow.pop %v3334
    %v3336 = vadd.f32 %v3335, 1.0
    %v3337 = vrcp.pop %v3336
    %v3338 = vmul.f32 %v3336, %v3337
    %v3339 = vsub.f32 1.0, %v3338
    %v3340 = vmul.f32 %v3337, %v3339
    %v3341 = vadd.f32 %v3337, %v3340
    %vm3342 = vweird.f32 %v3336
    %vm3343 = vweird.f32 %v3337
    %vm3344 = vmor %vm3342, %vm3343
    %v3345 = vsel %vm3344, %v3337, %v3341
    %v3346 = vand.u32 2147483647, %v3336
    %vm3347 = vcmp.eq.f32.partialorder %v3346, 8.507059e+37
    %v3348 = vand.u32 %v3336, 2147483648
    %v3349 = vor.u32 1.1754944e-38, %v3348
    %v3350 = vsel %vm3347, %v3349, %v3345
    %v3351 = vmul.f32 1.0, %v3350
    %v3352 = vtanh.pop %v3332
    %v3353 = vmul.f32 %v3351, %v1576
    %3355 = vrot.lane.b32.xlu0 %v3352, 80
    %v3356 = vpop.permute.xlu0 %3355
    %v3358 = vmul.f32 %v3351, %v3356
    %3360 = vrot.lane.b32.xlu0 %v3358, 16
    %v3361 = vpop.permute.xlu0 %3360
    %v3363 = vadd.f32 %v3353, %v3361
    %v3364 = vtanh.pop %v3363
    %3366 = vrot.lane.b32.xlu0 %v3364, 16
    %v3367 = vpop.permute.xlu0 %3366
    %v3369 = vmul.f32 %v3351, %v3367
    %3371 = vrot.lane.b32.xlu0 %v3261, 96
    %v3372 = vpop.permute.xlu0 %3371
    %v3373 = vsel %vm222, %v3372, 0
    %3375 = vmatpush.msra.mxu0 0.0
    %3376 = vmatpush.msra.mxu0 0.0
    %3377 = vmatpush.msra.mxu0 0.0
    %3378 = vmatpush.msra.mxu0 0.0
    %3379 = vmatpush.msra.mxu0 0.0
    %3380 = vmatpush.msra.mxu0 0.0
    %3381 = vmatpush.msra.mxu0 0.0
    %3382 = vmatpush.msra.mxu0 0.0
    %3383 = vmatpush.msra.mxu0 0.0
    %3384 = vmatpush.msra.mxu0 0.0
    %3385 = vmatpush.msra.mxu0 0.0
    %3386 = vmatpush.msra.mxu0 0.0
    %3387 = vmatpush.msra.mxu0 0.0
    %3388 = vmatpush.msra.mxu0 0.0
    %3389 = vmatpush.msra.mxu0 %v3275
    %3390 = vmatpush.msra.mxu0 %v3274
    %3391 = vmatmul.f32.gmra.mxu0 %v3373
    %v3392 = vpop.f32.mrf.mxu0
    %v3393 = vadd.f32 0.0, %v3392
    %3394 = vdwg.mxu0
    %3396 = vrot.lane.b32.xlu0 %v3369, 96
    %v3397 = vpop.permute.xlu0 %3396
    %v3398 = vsel %vm222, %v3397, 0
    %3400 = vmatpush.msra.mxu0 0.0
    %3401 = vmatpush.msra.mxu0 0.0
    %3402 = vmatpush.msra.mxu0 0.0
    %3403 = vmatpush.msra.mxu0 0.0
    %3404 = vmatpush.msra.mxu0 0.0
    %3405 = vmatpush.msra.mxu0 0.0
    %3406 = vmatpush.msra.mxu0 0.0
    %3407 = vmatpush.msra.mxu0 0.0
    %3408 = vmatpush.msra.mxu0 0.0
    %3409 = vmatpush.msra.mxu0 0.0
    %3410 = vmatpush.msra.mxu0 0.0
    %3411 = vmatpush.msra.mxu0 0.0
    %3412 = vmatpush.msra.mxu0 0.0
    %3413 = vmatpush.msra.mxu0 0.0
    %3414 = vmatpush.msra.mxu0 %v3273
    %3415 = vmatpush.msra.mxu0 %v3272
    %3416 = vmatmul.f32.gmra.mxu0 %v3398
    %v3417 = vpop.f32.mrf.mxu0
    %v3418 = vadd.f32 %v3393, %v3417
    %3419 = vdwg.mxu0
    %v3421 = vperm.slane %v3276, 0
    %v3423 = vadd.f32 %v3418, %v3421
    %v3424 = vxor.u32 %v3423, 2147483648
    %v3425 = vmul.f32 %v3424, 1.442695
    %v3426 = vpow.pop %v3425
    %v3427 = vadd.f32 %v3426, 1.0
    %v3428 = vrcp.pop %v3427
    %v3429 = vmul.f32 %v3427, %v3428
    %v3430 = vsub.f32 1.0, %v3429
    %v3431 = vmul.f32 %v3428, %v3430
    %v3432 = vadd.f32 %v3428, %v3431
    %vm3433 = vweird.f32 %v3427
    %vm3434 = vweird.f32 %v3428
    %vm3435 = vmor %vm3433, %vm3434
    %v3436 = vsel %vm3435, %v3428, %v3432
    %v3437 = vand.u32 2147483647, %v3427
    %vm3438 = vcmp.eq.f32.partialorder %v3437, 8.507059e+37
    %v3439 = vand.u32 %v3427, 2147483648
    %v3440 = vor.u32 1.1754944e-38, %v3439
    %v3441 = vsel %vm3438, %v3440, %v3436
    %v3442 = vmul.f32 1.0, %v3441
    %v3443 = vtanh.pop %v3423
    %v3444 = vmul.f32 %v3442, %v3262
    %3446 = vrot.lane.b32.xlu0 %v3443, 80
    %v3447 = vpop.permute.xlu0 %3446
    %v3449 = vmul.f32 %v3442, %v3447
    %3451 = vrot.lane.b32.xlu0 %v3449, 16
    %v3452 = vpop.permute.xlu0 %3451
    %v3454 = vadd.f32 %v3444, %v3452
    %v3455 = vtanh.pop %v3454
    %3457 = vrot.lane.b32.xlu0 %v3455, 16
    %v3458 = vpop.permute.xlu0 %3457
    %v3460 = vmul.f32 %v3442, %v3458
    %v3462 = vperm.slane %v3265, 0
    %3465 = vrot.lane.b32.xlu0 %v3460, 96
    %v3466 = vpop.permute.xlu0 %3465
    %v3467 = vsel %vm222, %v3466, 0
    %3469 = vmatpush.msra.mxu0 0.0
    %3470 = vmatpush.msra.mxu0 0.0
    %3471 = vmatpush.msra.mxu0 0.0
    %3472 = vmatpush.msra.mxu0 0.0
    %3473 = vmatpush.msra.mxu0 0.0
    %3474 = vmatpush.msra.mxu0 0.0
    %3475 = vmatpush.msra.mxu0 0.0
    %3476 = vmatpush.msra.mxu0 0.0
    %3477 = vmatpush.msra.mxu0 0.0
    %3478 = vmatpush.msra.mxu0 0.0
    %3479 = vmatpush.msra.mxu0 0.0
    %3480 = vmatpush.msra.mxu0 0.0
    %3481 = vmatpush.msra.mxu0 0.0
    %3482 = vmatpush.msra.mxu0 0.0
    %3483 = vmatpush.msra.mxu0 %v3264
    %3484 = vmatpush.msra.mxu0 %v3263
    %3485 = vmatmul.f32.gmra.mxu0 %v3467
    %v3486 = vpop.f32.mrf.mxu0
    %v3487 = vadd.f32 %v3462, %v3486
    %3488 = vdwg.mxu0
    %v3489 = vmax.f32 %v3487, 0.0
    %v3491 = vperm.slane %v3266, 0
    %v3493 = vmul.f32 %v3489, %v3491
    %vm3494 = vcmask 254976
    %v3495 = vsel %vm3494, %v3493, 0.0
    %3496 = vadd.xlane.f32.xlu0 %v3495
    %v3497 = vpop.xlane.xlu0 %3496
    %v3499 = vperm.slane %v3267, 0
    %v3501 = vadd.f32 %v3497, %v3499
    %v3502 = vld [vmem:[%s2] sm:$0x3]
    %3504 = vset.pattern.permute.xlu0 0
    %3505 = vperm.xlu0 %3504, %v3501
    %v3506 = vpop.permute.xlu0 %3505
    %v3508 = vsel %vm3279, %v3506, %v3502
    %3509 = vmatpush.msra.mxu0 0.0
    %3510 = vmatpush.msra.mxu0 0.0
    %3511 = vmatpush.msra.mxu0 0.0
    %3512 = vmatpush.msra.mxu0 0.0
    %3513 = vmatpush.msra.mxu0 0.0
    %3514 = vmatpush.msra.mxu0 0.0
    %3515 = vmatpush.msra.mxu0 0.0
    %3516 = vmatpush.msra.mxu0 0.0
    %3517 = vmatpush.msra.mxu0 0.0
    %3518 = vmatpush.msra.mxu0 0.0
    %3519 = vmatpush.msra.mxu0 0.0
    %3520 = vmatpush.msra.mxu0 0.0
    %3521 = vmatpush.msra.mxu0 0.0
    %3522 = vmatpush.msra.mxu0 0.0
    %3523 = vmatpush.msra.mxu0 %v3270
    %3524 = vmatpush.msra.mxu0 %v3269
    %3525 = vmatmul.f32.gmra.mxu0 %v3398
    %v3526 = vpop.f32.mrf.mxu0
    %v3527 = vadd.f32 0.0, %v3526
    %3528 = vdwg.mxu0
    %v3530 = vsel %vm246, %v3508, 0
    %3532 = vmatpush.msra.mxu0 0.0
    %3533 = vmatpush.msra.mxu0 0.0
    %3534 = vmatpush.msra.mxu0 0.0
    %3535 = vmatpush.msra.mxu0 0.0
    %3536 = vmatpush.msra.mxu0 0.0
    %3537 = vmatpush.msra.mxu0 0.0
    %3538 = vmatpush.msra.mxu0 0.0
    %3539 = vmatpush.msra.mxu0 0.0
    %3540 = vmatpush.msra.mxu0 0.0
    %3541 = vmatpush.msra.mxu0 0.0
    %3542 = vmatpush.msra.mxu0 0.0
    %3543 = vmatpush.msra.mxu0 0.0
    %3544 = vmatpush.msra.mxu0 0.0
    %3545 = vmatpush.msra.mxu0 0.0
    %3546 = vmatpush.msra.mxu0 0.0
    %3547 = vmatpush.msra.mxu0 %v3268
    %3548 = vmatmul.f32.gmra.mxu0 %v3530
    %v3549 = vpop.f32.mrf.mxu0
    %v3550 = vadd.f32 %v3527, %v3549
    %3551 = vdwg.mxu0
    %v3552 = vadd.f32 %v3550, %v3330
    %v3553 = vxor.u32 %v3552, 2147483648
    %v3554 = vmul.f32 %v3553, 1.442695
    %v3555 = vpow.pop %v3554
    %v3556 = vadd.f32 %v3555, 1.0
    %v3557 = vrcp.pop %v3556
    %v3558 = vmul.f32 %v3556, %v3557
    %v3559 = vsub.f32 1.0, %v3558
    %v3560 = vmul.f32 %v3557, %v3559
    %v3561 = vadd.f32 %v3557, %v3560
    %vm3562 = vweird.f32 %v3556
    %vm3563 = vweird.f32 %v3557
    %vm3564 = vmor %vm3562, %vm3563
    %v3565 = vsel %vm3564, %v3557, %v3561
    %v3566 = vand.u32 2147483647, %v3556
    %vm3567 = vcmp.eq.f32.partialorder %v3566, 8.507059e+37
    %v3568 = vand.u32 %v3556, 2147483648
    %v3569 = vor.u32 1.1754944e-38, %v3568
    %v3570 = vsel %vm3567, %v3569, %v3565
    %v3571 = vmul.f32 1.0, %v3570
    %v3572 = vtanh.pop %v3552
    %v3573 = vmul.f32 %v3571, %v3363
    %3575 = vrot.lane.b32.xlu0 %v3572, 80
    %v3576 = vpop.permute.xlu0 %3575
    %v3578 = vmul.f32 %v3571, %v3576
    %3580 = vrot.lane.b32.xlu0 %v3578, 16
    %v3581 = vpop.permute.xlu0 %3580
    %v3583 = vadd.f32 %v3573, %v3581
    %v3584 = vtanh.pop %v3583
    %3586 = vrot.lane.b32.xlu0 %v3584, 16
    %v3587 = vpop.permute.xlu0 %3586
    %v3589 = vmul.f32 %v3571, %v3587
    %3590 = vmatpush.msra.mxu0 0.0
    %3591 = vmatpush.msra.mxu0 0.0
    %3592 = vmatpush.msra.mxu0 0.0
    %3593 = vmatpush.msra.mxu0 0.0
    %3594 = vmatpush.msra.mxu0 0.0
    %3595 = vmatpush.msra.mxu0 0.0
    %3596 = vmatpush.msra.mxu0 0.0
    %3597 = vmatpush.msra.mxu0 0.0
    %3598 = vmatpush.msra.mxu0 0.0
    %3599 = vmatpush.msra.mxu0 0.0
    %3600 = vmatpush.msra.mxu0 0.0
    %3601 = vmatpush.msra.mxu0 0.0
    %3602 = vmatpush.msra.mxu0 0.0
    %3603 = vmatpush.msra.mxu0 0.0
    %3604 = vmatpush.msra.mxu0 %v3275
    %3605 = vmatpush.msra.mxu0 %v3274
    %3606 = vmatmul.f32.gmra.mxu0 %v3467
    %v3607 = vpop.f32.mrf.mxu0
    %v3608 = vadd.f32 0.0, %v3607
    %3609 = vdwg.mxu0
    %3611 = vrot.lane.b32.xlu0 %v3589, 96
    %v3612 = vpop.permute.xlu0 %3611
    %v3613 = vsel %vm222, %v3612, 0
    %3615 = vmatpush.msra.mxu0 0.0
    %3616 = vmatpush.msra.mxu0 0.0
    %3617 = vmatpush.msra.mxu0 0.0
    %3618 = vmatpush.msra.mxu0 0.0
    %3619 = vmatpush.msra.mxu0 0.0
    %3620 = vmatpush.msra.mxu0 0.0
    %3621 = vmatpush.msra.mxu0 0.0
    %3622 = vmatpush.msra.mxu0 0.0
    %3623 = vmatpush.msra.mxu0 0.0
    %3624 = vmatpush.msra.mxu0 0.0
    %3625 = vmatpush.msra.mxu0 0.0
    %3626 = vmatpush.msra.mxu0 0.0
    %3627 = vmatpush.msra.mxu0 0.0
    %3628 = vmatpush.msra.mxu0 0.0
    %3629 = vmatpush.msra.mxu0 %v3273
    %3630 = vmatpush.msra.mxu0 %v3272
    %3631 = vmatmul.f32.gmra.mxu0 %v3613
    %v3632 = vpop.f32.mrf.mxu0
    %v3633 = vadd.f32 %v3608, %v3632
    %3634 = vdwg.mxu0
    %v3635 = vadd.f32 %v3633, %v3421
    %v3636 = vxor.u32 %v3635, 2147483648
    %v3637 = vmul.f32 %v3636, 1.442695
    %v3638 = vpow.pop %v3637
    %v3639 = vadd.f32 %v3638, 1.0
    %v3640 = vrcp.pop %v3639
    %v3641 = vmul.f32 %v3639, %v3640
    %v3642 = vsub.f32 1.0, %v3641
    %v3643 = vmul.f32 %v3640, %v3642
    %v3644 = vadd.f32 %v3640, %v3643
    %vm3645 = vweird.f32 %v3639
    %vm3646 = vweird.f32 %v3640
    %vm3647 = vmor %vm3645, %vm3646
    %v3648 = vsel %vm3647, %v3640, %v3644
    %v3649 = vand.u32 2147483647, %v3639
    %vm3650 = vcmp.eq.f32.partialorder %v3649, 8.507059e+37
    %v3651 = vand.u32 %v3639, 2147483648
    %v3652 = vor.u32 1.1754944e-38, %v3651
    %v3653 = vsel %vm3650, %v3652, %v3648
    %v3654 = vmul.f32 1.0, %v3653
    %v3655 = vtanh.pop %v3635
    %v3656 = vmul.f32 %v3654, %v3454
    %3658 = vrot.lane.b32.xlu0 %v3655, 80
    %v3659 = vpop.permute.xlu0 %3658
    %v3661 = vmul.f32 %v3654, %v3659
    %3663 = vrot.lane.b32.xlu0 %v3661, 16
    %v3664 = vpop.permute.xlu0 %3663
    %v3666 = vadd.f32 %v3656, %v3664
    %v3667 = vtanh.pop %v3666
    %3669 = vrot.lane.b32.xlu0 %v3667, 16
    %v3670 = vpop.permute.xlu0 %3669
    %v3672 = vmul.f32 %v3654, %v3670
    %3674 = vrot.lane.b32.xlu0 %v3672, 96
    %v3675 = vpop.permute.xlu0 %3674
    %v3676 = vsel %vm222, %v3675, 0
    %3678 = vmatpush.msra.mxu0 0.0
    %3679 = vmatpush.msra.mxu0 0.0
    %3680 = vmatpush.msra.mxu0 0.0
    %3681 = vmatpush.msra.mxu0 0.0
    %3682 = vmatpush.msra.mxu0 0.0
    %3683 = vmatpush.msra.mxu0 0.0
    %3684 = vmatpush.msra.mxu0 0.0
    %3685 = vmatpush.msra.mxu0 0.0
    %3686 = vmatpush.msra.mxu0 0.0
    %3687 = vmatpush.msra.mxu0 0.0
    %3688 = vmatpush.msra.mxu0 0.0
    %3689 = vmatpush.msra.mxu0 0.0
    %3690 = vmatpush.msra.mxu0 0.0
    %3691 = vmatpush.msra.mxu0 0.0
    %3692 = vmatpush.msra.mxu0 %v3264
    %3693 = vmatpush.msra.mxu0 %v3263
    %3694 = vmatmul.f32.gmra.mxu0 %v3676
    %v3695 = vpop.f32.mrf.mxu0
    %v3696 = vadd.f32 %v3462, %v3695
    %3697 = vdwg.mxu0
    %v3698 = vmax.f32 %v3696, 0.0
    %v3699 = vmul.f32 %v3698, %v3491
    %v3700 = vsel %vm3494, %v3699, 0.0
    %3701 = vadd.xlane.f32.xlu0 %v3700
    %v3702 = vpop.xlane.xlu0 %3701
    %v3703 = vadd.f32 %v3702, %v3499
    %s3704 = scalar_lea.vmem %s2, 2
    %v3705 = vld [vmem:[%s3704] sm:$0x3]
    %3707 = vset.pattern.permute.xlu0 0
    %3708 = vperm.xlu0 %3707, %v3703
    %v3709 = vpop.permute.xlu0 %3708
    %v3711 = vsel %vm3279, %v3709, %v3705
    %3712 = vmatpush.msra.mxu0 0.0
    %3713 = vmatpush.msra.mxu0 0.0
    %3714 = vmatpush.msra.mxu0 0.0
    %3715 = vmatpush.msra.mxu0 0.0
    %3716 = vmatpush.msra.mxu0 0.0
    %3717 = vmatpush.msra.mxu0 0.0
    %3718 = vmatpush.msra.mxu0 0.0
    %3719 = vmatpush.msra.mxu0 0.0
    %3720 = vmatpush.msra.mxu0 0.0
    %3721 = vmatpush.msra.mxu0 0.0
    %3722 = vmatpush.msra.mxu0 0.0
    %3723 = vmatpush.msra.mxu0 0.0
    %3724 = vmatpush.msra.mxu0 0.0
    %3725 = vmatpush.msra.mxu0 0.0
    %3726 = vmatpush.msra.mxu0 %v3270
    %3727 = vmatpush.msra.mxu0 %v3269
    %3728 = vmatmul.f32.gmra.mxu0 %v3613
    %v3729 = vpop.f32.mrf.mxu0
    %v3730 = vadd.f32 0.0, %v3729
    %3731 = vdwg.mxu0
    %v3733 = vsel %vm246, %v3711, 0
    %3735 = vmatpush.msra.mxu0 0.0
    %3736 = vmatpush.msra.mxu0 0.0
    %3737 = vmatpush.msra.mxu0 0.0
    %3738 = vmatpush.msra.mxu0 0.0
    %3739 = vmatpush.msra.mxu0 0.0
    %3740 = vmatpush.msra.mxu0 0.0
    %3741 = vmatpush.msra.mxu0 0.0
    %3742 = vmatpush.msra.mxu0 0.0
    %3743 = vmatpush.msra.mxu0 0.0
    %3744 = vmatpush.msra.mxu0 0.0
    %3745 = vmatpush.msra.mxu0 0.0
    %3746 = vmatpush.msra.mxu0 0.0
    %3747 = vmatpush.msra.mxu0 0.0
    %3748 = vmatpush.msra.mxu0 0.0
    %3749 = vmatpush.msra.mxu0 0.0
    %3750 = vmatpush.msra.mxu0 %v3268
    %3751 = vmatmul.f32.gmra.mxu0 %v3733
    %v3752 = vpop.f32.mrf.mxu0
    %v3753 = vadd.f32 %v3730, %v3752
    %3754 = vdwg.mxu0
    %v3755 = vadd.f32 %v3753, %v3330
    %v3756 = vxor.u32 %v3755, 2147483648
    %v3757 = vmul.f32 %v3756, 1.442695
    %v3758 = vpow.pop %v3757
    %v3759 = vadd.f32 %v3758, 1.0
    %v3760 = vrcp.pop %v3759
    %v3761 = vmul.f32 %v3759, %v3760
    %v3762 = vsub.f32 1.0, %v3761
    %v3763 = vmul.f32 %v3760, %v3762
    %v3764 = vadd.f32 %v3760, %v3763
    %vm3765 = vweird.f32 %v3759
    %vm3766 = vweird.f32 %v3760
    %vm3767 = vmor %vm3765, %vm3766
    %v3768 = vsel %vm3767, %v3760, %v3764
    %v3769 = vand.u32 2147483647, %v3759
    %vm3770 = vcmp.eq.f32.partialorder %v3769, 8.507059e+37
    %v3771 = vand.u32 %v3759, 2147483648
    %v3772 = vor.u32 1.1754944e-38, %v3771
    %v3773 = vsel %vm3770, %v3772, %v3768
    %v3774 = vmul.f32 1.0, %v3773
    %v3775 = vtanh.pop %v3755
    %v3776 = vmul.f32 %v3774, %v3583
    %3778 = vrot.lane.b32.xlu0 %v3775, 80
    %v3779 = vpop.permute.xlu0 %3778
    %v3781 = vmul.f32 %v3774, %v3779
    %3783 = vrot.lane.b32.xlu0 %v3781, 16
    %v3784 = vpop.permute.xlu0 %3783
    %v3786 = vadd.f32 %v3776, %v3784
    %v3787 = vtanh.pop %v3786
    %3789 = vrot.lane.b32.xlu0 %v3787, 16
    %v3790 = vpop.permute.xlu0 %3789
    %v3792 = vmul.f32 %v3774, %v3790
    %3793 = vmatpush.msra.mxu0 0.0
    %3794 = vmatpush.msra.mxu0 0.0
    %3795 = vmatpush.msra.mxu0 0.0
    %3796 = vmatpush.msra.mxu0 0.0
    %3797 = vmatpush.msra.mxu0 0.0
    %3798 = vmatpush.msra.mxu0 0.0
    %3799 = vmatpush.msra.mxu0 0.0
    %3800 = vmatpush.msra.mxu0 0.0
    %3801 = vmatpush.msra.mxu0 0.0
    %3802 = vmatpush.msra.mxu0 0.0
    %3803 = vmatpush.msra.mxu0 0.0
    %3804 = vmatpush.msra.mxu0 0.0
    %3805 = vmatpush.msra.mxu0 0.0
    %3806 = vmatpush.msra.mxu0 0.0
    %3807 = vmatpush.msra.mxu0 %v3275
    %3808 = vmatpush.msra.mxu0 %v3274
    %3809 = vmatmul.f32.gmra.mxu0 %v3676
    %v3810 = vpop.f32.mrf.mxu0
    %v3811 = vadd.f32 0.0, %v3810
    %3812 = vdwg.mxu0
    %3814 = vrot.lane.b32.xlu0 %v3792, 96
    %v3815 = vpop.permute.xlu0 %3814
    %v3816 = vsel %vm222, %v3815, 0
    %3818 = vmatpush.msra.mxu0 0.0
    %3819 = vmatpush.msra.mxu0 0.0
    %3820 = vmatpush.msra.mxu0 0.0
    %3821 = vmatpush.msra.mxu0 0.0
    %3822 = vmatpush.msra.mxu0 0.0
    %3823 = vmatpush.msra.mxu0 0.0
    %3824 = vmatpush.msra.mxu0 0.0
    %3825 = vmatpush.msra.mxu0 0.0
    %3826 = vmatpush.msra.mxu0 0.0
    %3827 = vmatpush.msra.mxu0 0.0
    %3828 = vmatpush.msra.mxu0 0.0
    %3829 = vmatpush.msra.mxu0 0.0
    %3830 = vmatpush.msra.mxu0 0.0
    %3831 = vmatpush.msra.mxu0 0.0
    %3832 = vmatpush.msra.mxu0 %v3273
    %3833 = vmatpush.msra.mxu0 %v3272
    %3834 = vmatmul.f32.gmra.mxu0 %v3816
    %v3835 = vpop.f32.mrf.mxu0
    %v3836 = vadd.f32 %v3811, %v3835
    %3837 = vdwg.mxu0
    %v3838 = vadd.f32 %v3836, %v3421
    %v3839 = vxor.u32 %v3838, 2147483648
    %v3840 = vmul.f32 %v3839, 1.442695
    %v3841 = vpow.pop %v3840
    %v3842 = vadd.f32 %v3841, 1.0
    %v3843 = vrcp.pop %v3842
    %v3844 = vmul.f32 %v3842, %v3843
    %v3845 = vsub.f32 1.0, %v3844
    %v3846 = vmul.f32 %v3843, %v3845
    %v3847 = vadd.f32 %v3843, %v3846
    %vm3848 = vweird.f32 %v3842
    %vm3849 = vweird.f32 %v3843
    %vm3850 = vmor %vm3848, %vm3849
    %v3851 = vsel %vm3850, %v3843, %v3847
    %v3852 = vand.u32 2147483647, %v3842
    %vm3853 = vcmp.eq.f32.partialorder %v3852, 8.507059e+37
    %v3854 = vand.u32 %v3842, 2147483648
    %v3855 = vor.u32 1.1754944e-38, %v3854
    %v3856 = vsel %vm3853, %v3855, %v3851
    %v3857 = vmul.f32 1.0, %v3856
    %v3858 = vtanh.pop %v3838
    %v3859 = vmul.f32 %v3857, %v3666
    %3861 = vrot.lane.b32.xlu0 %v3858, 80
    %v3862 = vpop.permute.xlu0 %3861
    %v3864 = vmul.f32 %v3857, %v3862
    %3866 = vrot.lane.b32.xlu0 %v3864, 16
    %v3867 = vpop.permute.xlu0 %3866
    %v3869 = vadd.f32 %v3859, %v3867
    %v3870 = vtanh.pop %v3869
    %3872 = vrot.lane.b32.xlu0 %v3870, 16
    %v3873 = vpop.permute.xlu0 %3872
    %v3875 = vmul.f32 %v3857, %v3873
    %3877 = vrot.lane.b32.xlu0 %v3875, 96
    %v3878 = vpop.permute.xlu0 %3877
    %v3879 = vsel %vm222, %v3878, 0
    %3881 = vmatpush.msra.mxu0 0.0
    %3882 = vmatpush.msra.mxu0 0.0
    %3883 = vmatpush.msra.mxu0 0.0
    %3884 = vmatpush.msra.mxu0 0.0
    %3885 = vmatpush.msra.mxu0 0.0
    %3886 = vmatpush.msra.mxu0 0.0
    %3887 = vmatpush.msra.mxu0 0.0
    %3888 = vmatpush.msra.mxu0 0.0
    %3889 = vmatpush.msra.mxu0 0.0
    %3890 = vmatpush.msra.mxu0 0.0
    %3891 = vmatpush.msra.mxu0 0.0
    %3892 = vmatpush.msra.mxu0 0.0
    %3893 = vmatpush.msra.mxu0 0.0
    %3894 = vmatpush.msra.mxu0 0.0
    %3895 = vmatpush.msra.mxu0 %v3264
    %3896 = vmatpush.msra.mxu0 %v3263
    %3897 = vmatmul.f32.gmra.mxu0 %v3879
    %v3898 = vpop.f32.mrf.mxu0
    %v3899 = vadd.f32 %v3462, %v3898
    %3900 = vdwg.mxu0
    %v3901 = vmax.f32 %v3899, 0.0
    %v3902 = vmul.f32 %v3901, %v3491
    %v3903 = vsel %vm3494, %v3902, 0.0
    %3904 = vadd.xlane.f32.xlu0 %v3903
    %v3905 = vpop.xlane.xlu0 %3904
    %v3906 = vadd.f32 %v3905, %v3499
    %s3907 = scalar_lea.vmem %s2, 4
    %v3908 = vld [vmem:[%s3907] sm:$0x3]
    %3910 = vset.pattern.permute.xlu0 0
    %3911 = vperm.xlu0 %3910, %v3906
    %v3912 = vpop.permute.xlu0 %3911
    %v3914 = vsel %vm3279, %v3912, %v3908
    %3915 = vmatpush.msra.mxu0 0.0
    %3916 = vmatpush.msra.mxu0 0.0
    %3917 = vmatpush.msra.mxu0 0.0
    %3918 = vmatpush.msra.mxu0 0.0
    %3919 = vmatpush.msra.mxu0 0.0
    %3920 = vmatpush.msra.mxu0 0.0
    %3921 = vmatpush.msra.mxu0 0.0
    %3922 = vmatpush.msra.mxu0 0.0
    %3923 = vmatpush.msra.mxu0 0.0
    %3924 = vmatpush.msra.mxu0 0.0
    %3925 = vmatpush.msra.mxu0 0.0
    %3926 = vmatpush.msra.mxu0 0.0
    %3927 = vmatpush.msra.mxu0 0.0
    %3928 = vmatpush.msra.mxu0 0.0
    %3929 = vmatpush.msra.mxu0 %v3270
    %3930 = vmatpush.msra.mxu0 %v3269
    %3931 = vmatmul.f32.gmra.mxu0 %v3816
    %v3932 = vpop.f32.mrf.mxu0
    %v3933 = vadd.f32 0.0, %v3932
    %3934 = vdwg.mxu0
    %v3936 = vsel %vm246, %v3914, 0
    %3938 = vmatpush.msra.mxu0 0.0
    %3939 = vmatpush.msra.mxu0 0.0
    %3940 = vmatpush.msra.mxu0 0.0
    %3941 = vmatpush.msra.mxu0 0.0
    %3942 = vmatpush.msra.mxu0 0.0
    %3943 = vmatpush.msra.mxu0 0.0
    %3944 = vmatpush.msra.mxu0 0.0
    %3945 = vmatpush.msra.mxu0 0.0
    %3946 = vmatpush.msra.mxu0 0.0
    %3947 = vmatpush.msra.mxu0 0.0
    %3948 = vmatpush.msra.mxu0 0.0
    %3949 = vmatpush.msra.mxu0 0.0
    %3950 = vmatpush.msra.mxu0 0.0
    %3951 = vmatpush.msra.mxu0 0.0
    %3952 = vmatpush.msra.mxu0 0.0
    %3953 = vmatpush.msra.mxu0 %v3268
    %3954 = vmatmul.f32.gmra.mxu0 %v3936
    %v3955 = vpop.f32.mrf.mxu0
    %v3956 = vadd.f32 %v3933, %v3955
    %3957 = vdwg.mxu0
    %v3958 = vadd.f32 %v3956, %v3330
    %v3959 = vxor.u32 %v3958, 2147483648
    %v3960 = vmul.f32 %v3959, 1.442695
    %v3961 = vpow.pop %v3960
    %v3962 = vadd.f32 %v3961, 1.0
    %v3963 = vrcp.pop %v3962
    %v3964 = vmul.f32 %v3962, %v3963
    %v3965 = vsub.f32 1.0, %v3964
    %v3966 = vmul.f32 %v3963, %v3965
    %v3967 = vadd.f32 %v3963, %v3966
    %vm3968 = vweird.f32 %v3962
    %vm3969 = vweird.f32 %v3963
    %vm3970 = vmor %vm3968, %vm3969
    %v3971 = vsel %vm3970, %v3963, %v3967
    %v3972 = vand.u32 2147483647, %v3962
    %vm3973 = vcmp.eq.f32.partialorder %v3972, 8.507059e+37
    %v3974 = vand.u32 %v3962, 2147483648
    %v3975 = vor.u32 1.1754944e-38, %v3974
    %v3976 = vsel %vm3973, %v3975, %v3971
    %v3977 = vmul.f32 1.0, %v3976
    %v3978 = vtanh.pop %v3958
    %v3979 = vmul.f32 %v3977, %v3786
    %3981 = vrot.lane.b32.xlu0 %v3978, 80
    %v3982 = vpop.permute.xlu0 %3981
    %v3984 = vmul.f32 %v3977, %v3982
    %3986 = vrot.lane.b32.xlu0 %v3984, 16
    %v3987 = vpop.permute.xlu0 %3986
    %v3989 = vadd.f32 %v3979, %v3987
    %v3990 = vtanh.pop %v3989
    %3992 = vrot.lane.b32.xlu0 %v3990, 16
    %v3993 = vpop.permute.xlu0 %3992
    %v3995 = vmul.f32 %v3977, %v3993
    %3996 = vmatpush.msra.mxu0 0.0
    %3997 = vmatpush.msra.mxu0 0.0
    %3998 = vmatpush.msra.mxu0 0.0
    %3999 = vmatpush.msra.mxu0 0.0
    %4000 = vmatpush.msra.mxu0 0.0
    %4001 = vmatpush.msra.mxu0 0.0
    %4002 = vmatpush.msra.mxu0 0.0
    %4003 = vmatpush.msra.mxu0 0.0
    %4004 = vmatpush.msra.mxu0 0.0
    %4005 = vmatpush.msra.mxu0 0.0
    %4006 = vmatpush.msra.mxu0 0.0
    %4007 = vmatpush.msra.mxu0 0.0
    %4008 = vmatpush.msra.mxu0 0.0
    %4009 = vmatpush.msra.mxu0 0.0
    %4010 = vmatpush.msra.mxu0 %v3275
    %4011 = vmatpush.msra.mxu0 %v3274
    %4012 = vmatmul.f32.gmra.mxu0 %v3879
    %v4013 = vpop.f32.mrf.mxu0
    %v4014 = vadd.f32 0.0, %v4013
    %4015 = vdwg.mxu0
    %4017 = vrot.lane.b32.xlu0 %v3995, 96
    %v4018 = vpop.permute.xlu0 %4017
    %v4019 = vsel %vm222, %v4018, 0
    %4021 = vmatpush.msra.mxu0 0.0
    %4022 = vmatpush.msra.mxu0 0.0
    %4023 = vmatpush.msra.mxu0 0.0
    %4024 = vmatpush.msra.mxu0 0.0
    %4025 = vmatpush.msra.mxu0 0.0
    %4026 = vmatpush.msra.mxu0 0.0
    %4027 = vmatpush.msra.mxu0 0.0
    %4028 = vmatpush.msra.mxu0 0.0
    %4029 = vmatpush.msra.mxu0 0.0
    %4030 = vmatpush.msra.mxu0 0.0
    %4031 = vmatpush.msra.mxu0 0.0
    %4032 = vmatpush.msra.mxu0 0.0
    %4033 = vmatpush.msra.mxu0 0.0
    %4034 = vmatpush.msra.mxu0 0.0
    %4035 = vmatpush.msra.mxu0 %v3273
    %4036 = vmatpush.msra.mxu0 %v3272
    %4037 = vmatmul.f32.gmra.mxu0 %v4019
    %v4038 = vpop.f32.mrf.mxu0
    %v4039 = vadd.f32 %v4014, %v4038
    %4040 = vdwg.mxu0
    %v4041 = vadd.f32 %v4039, %v3421
    %v4042 = vxor.u32 %v4041, 2147483648
    %v4043 = vmul.f32 %v4042, 1.442695
    %v4044 = vpow.pop %v4043
    %v4045 = vadd.f32 %v4044, 1.0
    %v4046 = vrcp.pop %v4045
    %v4047 = vmul.f32 %v4045, %v4046
    %v4048 = vsub.f32 1.0, %v4047
    %v4049 = vmul.f32 %v4046, %v4048
    %v4050 = vadd.f32 %v4046, %v4049
    %vm4051 = vweird.f32 %v4045
    %vm4052 = vweird.f32 %v4046
    %vm4053 = vmor %vm4051, %vm4052
    %v4054 = vsel %vm4053, %v4046, %v4050
    %v4055 = vand.u32 2147483647, %v4045
    %vm4056 = vcmp.eq.f32.partialorder %v4055, 8.507059e+37
    %v4057 = vand.u32 %v4045, 2147483648
    %v4058 = vor.u32 1.1754944e-38, %v4057
    %v4059 = vsel %vm4056, %v4058, %v4054
    %v4060 = vmul.f32 1.0, %v4059
    %v4061 = vtanh.pop %v4041
    %v4062 = vmul.f32 %v4060, %v3869
    %4064 = vrot.lane.b32.xlu0 %v4061, 80
    %v4065 = vpop.permute.xlu0 %4064
    %v4067 = vmul.f32 %v4060, %v4065
    %4069 = vrot.lane.b32.xlu0 %v4067, 16
    %v4070 = vpop.permute.xlu0 %4069
    %v4072 = vadd.f32 %v4062, %v4070
    %v4073 = vtanh.pop %v4072
    %4075 = vrot.lane.b32.xlu0 %v4073, 16
    %v4076 = vpop.permute.xlu0 %4075
    %v4078 = vmul.f32 %v4060, %v4076
    %4080 = vrot.lane.b32.xlu0 %v4078, 96
    %v4081 = vpop.permute.xlu0 %4080
    %v4082 = vsel %vm222, %v4081, 0
    %4084 = vmatpush.msra.mxu0 0.0
    %4085 = vmatpush.msra.mxu0 0.0
    %4086 = vmatpush.msra.mxu0 0.0
    %4087 = vmatpush.msra.mxu0 0.0
    %4088 = vmatpush.msra.mxu0 0.0
    %4089 = vmatpush.msra.mxu0 0.0
    %4090 = vmatpush.msra.mxu0 0.0
    %4091 = vmatpush.msra.mxu0 0.0
    %4092 = vmatpush.msra.mxu0 0.0
    %4093 = vmatpush.msra.mxu0 0.0
    %4094 = vmatpush.msra.mxu0 0.0
    %4095 = vmatpush.msra.mxu0 0.0
    %4096 = vmatpush.msra.mxu0 0.0
    %4097 = vmatpush.msra.mxu0 0.0
    %4098 = vmatpush.msra.mxu0 %v3264
    %4099 = vmatpush.msra.mxu0 %v3263
    %4100 = vmatmul.f32.gmra.mxu0 %v4082
    %v4101 = vpop.f32.mrf.mxu0
    %v4102 = vadd.f32 %v3462, %v4101
    %4103 = vdwg.mxu0
    %v4104 = vmax.f32 %v4102, 0.0
    %v4105 = vmul.f32 %v4104, %v3491
    %v4106 = vsel %vm3494, %v4105, 0.0
    %4107 = vadd.xlane.f32.xlu0 %v4106
    %v4108 = vpop.xlane.xlu0 %4107
    %v4109 = vadd.f32 %v4108, %v3499
    %4110 = vrot.lane.b32.xlu0 %v3703, 1
    %v4111 = vpop.permute.xlu0 %4110
    %4113 = vrot.lane.b32.xlu0 %v3906, 2
    %v4114 = vpop.permute.xlu0 %4113
    %4117 = vrot.lane.b32.xlu0 %v4109, 3
    %v4118 = vpop.permute.xlu0 %4117
    %vm4120 = vcmask 7168
    %v4121 = vsel %vm4120, %v3501, %v4111
    %vm4122 = vcmask 15360
    %v4123 = vsel %vm4122, %v4121, %v4114
    %vm4124 = vcmask 23552
    %v4125 = vsel %vm4124, %v4123, %v4118
    %vm4126 = vcmask 25600
    %4127 = vst.msk [vmem:[#allocation18] sm:$0x3] %vm4126, %v4125
    // Predicated region
    $region114: #{model_forward.1} parent=1 // pred_check
      _
    $region115: #{model_forward.1} parent=1 // pred_check_branch
      %4129 = sbr.rel (0) target = $region117
    $region116: #{model_forward.1} parent=1 // pred_region
      %4131 = vsyncadd [#allocation5], 0
      %s4133 = sshll.u32 [#allocation18], 4
      %s4134 = int_to_ptr.vmem [resolvable:$true] %s4133
      %s4135 = sshll.u32 %s19, 4
      %s4136 = int_to_ptr.hbm [resolvable:$true] %s4135
      %4138 = dma.vmem_to_hbm [thread:$0]  %s4134, 32, %s4136, [#allocation5]
    $region117: #{model_forward.1} parent=1 // pred_fallthru
      _
    // Predicated region
    $region118: #{model_forward.1} parent=1 // pred_check
      _
    $region119: #{model_forward.1} parent=1 // pred_check_branch
      %4140 = sbr.rel (0) target = $region121
    $region120: #{model_forward.1} parent=1 // pred_region
      %4142 = dma.done [#allocation5], 32
    $region121: #{model_forward.1} parent=1 // pred_fallthru
      _
    %4143 = vsyncpa [#allocation4], 1
    %4144 = vsyncpa [#allocation7], 1
    %4145 = vsyncpa [#allocation10], 1
    %4146 = vsyncpa [#allocation13], 1
    %4147 = vsyncpa [#allocation16], 1
    %4148 = vsyncpa [#allocation5], 1

</llo_original>
